<compile_context>
chip_gen: v6e
topology: v6e:2x2x1
jax: 0.10.0
libtpu: 0.0.40
codegen_flags: <defaults>
</compile_context>

<pallas_src>
import jax
import jax.numpy as jnp
from jax import lax
from jax.experimental import pallas as pl
from jax.experimental.pallas import tpu as pltpu

NUM_CHANNELS = 4
NUM_FILTERS = 8
NUM_SCALES = 3          # 16 -> 8 -> 4  (reflect pad=2 requires spatial dim > 2)
FILTER_SIZE = 5
MXU_DTYPE = jnp.float32  # jnp.bfloat16 on v6e/v7x if ~2e-3 extra error is acceptable


def _round_up(n, m):
    return (n + m - 1) // m * m


def _pick_block_batch(batch, num_filters, target_rows=128):
    """Largest divisor of `batch` with Bb*F <= target_rows, keeping >= 2 grid steps
    when possible (v7x megacore needs >= 2 steps to occupy both TensorCores)."""
    target = max(1, target_rows // num_filters)
    divisors = [d for d in range(1, batch + 1) if batch % d == 0 and d <= target]
    two_steps = [d for d in divisors if batch // d >= 2]
    return max(two_steps) if two_steps else max(divisors)


# ----------------------------- Pallas kernel ------------------------------- #
def _make_kernel(num_scales, num_filters, num_channels, filter_size,
                 padded_sizes, lane_sizes, block_batch):
    taps = filter_size * filter_size

    def kernel(*refs):
        x_refs = refs[:num_scales]                          # (Bb, C, Lb_s) input blocks
        w_ref = refs[num_scales]                            # (S, F, 25*C) lane-dense
        b_ref = refs[num_scales + 1]                        # (S, Bb*F, 1) bias - 1
        k_refs = refs[num_scales + 2:2 * num_scales + 2]    # (Lp_s, H*W)  upsample mats
        o_ref = refs[2 * num_scales + 2]                    # (Bb*F, H*W)  output tile
        imcol_ref = refs[2 * num_scales + 3]                # (Bb, 25*C, Lp_max) scratch
        feat_ref = refs[2 * num_scales + 4]                 # (Bb*F, Lp_max)     scratch

        for s in range(num_scales):
            hp = padded_sizes[s]
            lp = lane_sizes[s]
            x_ref = x_refs[s]

            # im2col for all Bb images at once: 25 strided-slice copies per scale.
            for kh in range(filter_size):
                for kw in range(filter_size):
                    t = kh * filter_size + kw
                    off = kh * hp + kw
                    imcol_ref[:, t * num_channels:(t + 1) * num_channels, :lp] = \
                        x_ref[:, :, off:off + lp]

            # Convolution: one fused K = 25*C dot per image (not 25 K=C dots).
            w_s = w_ref[s].astype(MXU_DTYPE)                # (F, 25*C)
            for b in range(block_batch):
                feat_ref[b * num_filters:(b + 1) * num_filters, :lp] = jnp.dot(
                    w_s, imcol_ref[b, :, :lp].astype(MXU_DTYPE),
                    preferred_element_type=jnp.float32)

            # Shifted softplus over all Bb*F rows at once (bias already holds the -1);
            # numerically stable, garbage lanes stay finite.
            z = feat_ref[:, :lp] + b_ref[s]
            act = jnp.maximum(z, 0.0) + jnp.log(1.0 + jnp.exp(-jnp.abs(z)))

            # Fused bilinear upsample + valid-pixel extraction + 1/num_scales:
            # one (Bb*F, Lp) @ (Lp, H*W) MXU dot per scale, accumulated in the output.
            up = jnp.dot(act.astype(MXU_DTYPE), k_refs[s][...].astype(MXU_DTYPE),
                         preferred_element_type=jnp.float32)
            if s == 0:
                o_ref[...] = up
            else:
                o_ref[...] = o_ref[...] + up

    return kernel


# --------------------------- Parameter prep -------------------------------- #
def _bilinear_matrix(in_size, out_size):
    """(out_size, in_size) matrix matching F.interpolate(bilinear, align_corners=False)."""
    scale = in_size / out_size
    o = jnp.arange(out_size, dtype=jnp.float32)
    src = jnp.maximum((o + 0.5) * scale - 0.5, 0.0)        # torch clamps negatives to 0
    i0 = jnp.minimum(jnp.floor(src).astype(jnp.int32), in_size - 1)
    i1 = jnp.minimum(i0 + 1, in_size - 1)
    w1 = src - i0.astype(jnp.float32)
    w0 = 1.0 - w1
    rows = jnp.arange(out_size)
    U = jnp.zeros((out_size, in_size), jnp.float32)
    U = U.at[rows, i0].add(w0).at[rows, i1].add(w1)
    return U


def prepare_params(weights, biases, img_size):
    """One-time host-side prep: lane-dense weights, shifted biases, padded upsample mats."""
    pad = FILTER_SIZE // 2
    taps = FILTER_SIZE * FILTER_SIZE
    # (S, F, 25*C): w_flat[s, f, (kh*5+kw)*C + c] = weight[s][f, c, kh, kw]
    w_flat = jnp.stack([
        w.transpose(0, 2, 3, 1).reshape(NUM_FILTERS, taps * NUM_CHANNELS)
        for w in weights])
    # (S, F, 1): the softplus(x - 1) shift is folded into the bias.
    b_shift = jnp.stack([b.reshape(NUM_FILTERS, 1) - 1.0 for b in biases])

    k_mats = []
    for s in range(NUM_SCALES):
        hs = img_size >> s
        hp = hs + 2 * pad
        lp = _round_up(hp * hp, 128)
        U = _bilinear_matrix(hs, img_size)                 # identity at s = 0
        V = jnp.pad(U, ((0, 0), (0, hp - hs)))             # zero cols mask pad columns
        K = jnp.kron(V, V).T                               # (hp*hp, img*img)
        K = jnp.pad(K, ((0, lp - hp * hp), (0, 0)))        # zero rows mask lane tail
        k_mats.append(K * (1.0 / NUM_SCALES))              # fold the final averaging in
    return w_flat, b_shift, tuple(k_mats)


# ----------------------------- Forward pass --------------------------------- #
def multiscale_convolution_forward(x, w_flat, b_shift, k_mats):
    """x: (B, C, H, W) f32 -> (B, NUM_FILTERS, H, W) f32."""
    B, C, H, W = x.shape
    pad = FILTER_SIZE // 2
    assert H == W, "square inputs expected"
    assert (H * W) % 128 == 0, "H*W must be a multiple of 128"
    assert H % (2 ** (NUM_SCALES - 1)) == 0
    assert (H >> (NUM_SCALES - 1)) > pad, "reflect padding needs spatial dim > pad"

    sizes = [H >> s for s in range(NUM_SCALES)]
    padded = [hs + 2 * pad for hs in sizes]
    lps = [_round_up(hp * hp, 128) for hp in padded]                 # lane-dense feat dim
    lbs = [_round_up(lps[s] + (FILTER_SIZE - 1) * (padded[s] + 1), 128)
           for s in range(NUM_SCALES)]                               # slack for tap offsets

    bb = _pick_block_batch(B, NUM_FILTERS)
    n_steps = B // bb

    # Cheap plain-JAX prep: avg-pool downsample, reflect pad, free flatten, zero tail-pad.
    xflats = []
    for s in range(NUM_SCALES):
        k = 2 ** s
        y = x if s == 0 else x.reshape(B, C, H // k, k, W // k, k).mean(axis=(3, 5))
        yp = jnp.pad(y, ((0, 0), (0, 0), (pad, pad), (pad, pad)), mode="reflect")
        hp = padded[s]
        flat = yp.reshape(B, C, hp * hp)                             # free reshape
        flat = jnp.pad(flat, ((0, 0), (0, 0), (0, lbs[s] - hp * hp)))
        xflats.append(flat)

    b_tiled = jnp.tile(b_shift, (1, bb, 1))                          # (S, Bb*F, 1)

    kernel = _make_kernel(NUM_SCALES, NUM_FILTERS, C, FILTER_SIZE,
                          tuple(padded), tuple(lps), bb)

    in_specs = (
        [pl.BlockSpec((bb, C, lbs[s]), lambda i: (i, 0, 0)) for s in range(NUM_SCALES)]
        + [pl.BlockSpec(w_flat.shape, lambda i: (0, 0, 0)),
           pl.BlockSpec(b_tiled.shape, lambda i: (0, 0, 0))]
        + [pl.BlockSpec(k_mats[s].shape, lambda i: (0, 0)) for s in range(NUM_SCALES)]
    )
    out_spec = pl.BlockSpec((bb * NUM_FILTERS, H * W), lambda i: (i, 0))

    out_flat = pl.pallas_call(
        kernel,
        out_shape=jax.ShapeDtypeStruct((B * NUM_FILTERS, H * W), jnp.float32),
        grid=(n_steps,),
        in_specs=in_specs,
        out_specs=out_spec,
        scratch_shapes=[
            pltpu.VMEM((bb, FILTER_SIZE * FILTER_SIZE * C, max(lps)), jnp.float32),
            pltpu.VMEM((bb * NUM_FILTERS, max(lps)), jnp.float32),
        ],
        compiler_params=pltpu.CompilerParams(
            dimension_semantics=("parallel",)),              # megacore sharding on v7x
    )(*xflats, w_flat, b_tiled, *k_mats)

    return out_flat.reshape(B, NUM_FILTERS, H, W)


# --------------------------- Pure-JAX reference ----------------------------- #
def _reference_forward(x, weights, biases):
    B, C, H, W = x.shape
    pad = FILTER_SIZE // 2
    out = jnp.zeros((B, NUM_FILTERS, H, W), jnp.float32)
    for s in range(NUM_SCALES):
        k = 2 ** s
        y = x if s == 0 else x.reshape(B, C, H // k, k, W // k, k).mean(axis=(3, 5))
        yp = jnp.pad(y, ((0, 0), (0, 0), (pad, pad), (pad, pad)), mode="reflect")
        f = lax.conv_general_dilated(
            yp, weights[s], window_strides=(1, 1), padding="VALID",
            dimension_numbers=("NCHW", "OIHW", "NCHW"),
            precision=lax.Precision.HIGHEST)
        z = f + biases[s][None, :, None, None] - 1.0
        f = jnp.maximum(z, 0.0) + jnp.log1p(jnp.exp(-jnp.abs(z)))
        U = _bilinear_matrix(H // k, H)
        f = jnp.einsum("oh,bchw,pw->bcop", U, f, U, precision=lax.Precision.HIGHEST)
        out = out + f
    return out / NUM_SCALES


# ------------------------------- Main --------------------------------------- #
if __name__ == "__main__":
    key = jax.random.PRNGKey(0)
    kx, *kparams = jax.random.split(key, 1 + 2 * NUM_SCALES)

    # Deterministic synthetic parameters (PyTorch Conv2d shapes: (F, C, k, k) and (F,)).
    weights, biases = [], []
    for s in range(NUM_SCALES):
        kw_, kb_ = kparams[2 * s], kparams[2 * s + 1]
        weights.append(0.05 * jax.random.normal(
            kw_, (NUM_FILTERS, NUM_CHANNELS, FILTER_SIZE, FILTER_SIZE), jnp.float32))
        biases.append(0.05 * jax.random.normal(kb_, (NUM_FILTERS,), jnp.float32))

    x = jax.random.normal(kx, (2, NUM_CHANNELS, 16, 16), jnp.float32)

    w_flat, b_shift, k_mats = prepare_params(weights, biases, 16)
    fwd = jax.jit(multiscale_convolution_forward)
    out = jax.block_until_ready(fwd(x, w_flat, b_shift, k_mats))

    assert out.shape == (2, NUM_FILTERS, 16, 16), out.shape
    assert bool(jnp.all(jnp.isfinite(out)))

    # Correctness check against a plain-JAX reference of the PyTorch module.
    ref = _reference_forward(x, weights, biases)
    max_err = float(jnp.max(jnp.abs(out - ref)))
    assert max_err < 2e-3, f"mismatch vs reference: max|err|={max_err}"

    print("KERNEL_OK")
</pallas_src>

<mosaic_0001>
module attributes {stable_mosaic.version = 11 : i64} {
  func.func @kernel(%arg0: i32, %arg1: memref<1x4x640xf32, #tpu.memory_space<vmem>>, %arg2: memref<1x4x384xf32, #tpu.memory_space<vmem>>, %arg3: memref<1x4x256xf32, #tpu.memory_space<vmem>>, %arg4: memref<3x8x100xf32, #tpu.memory_space<vmem>>, %arg5: memref<3x8x1xf32, #tpu.memory_space<vmem>>, %arg6: memref<512x256xf32, #tpu.memory_space<vmem>>, %arg7: memref<256x256xf32, #tpu.memory_space<vmem>>, %arg8: memref<128x256xf32, #tpu.memory_space<vmem>>, %arg9: memref<8x256xf32, #tpu.memory_space<vmem>>, %arg10: memref<1x100x512xf32, #tpu.memory_space<vmem>>, %arg11: memref<8x512xf32, #tpu.memory_space<vmem>>) attributes {dimension_semantics = [#tpu.dimension_semantics<parallel>], iteration_bounds = array<i64: 2>, scalar_prefetch = 0 : i64, scratch_operands = 2 : i64, tpu.core_type = #tpu.core_type<tc>, window_params = [{transform_indices = @transform_0, window_bounds = array<i64: 1, 4, 640>}, {transform_indices = @transform_1, window_bounds = array<i64: 1, 4, 384>}, {transform_indices = @transform_2, window_bounds = array<i64: 1, 4, 256>}, {pipeline_mode = #tpu.pipeline_mode<synchronous>, transform_indices = @transform_3, window_bounds = array<i64: 3, 8, 100>}, {pipeline_mode = #tpu.pipeline_mode<synchronous>, transform_indices = @transform_4, window_bounds = array<i64: 3, 8, 1>}, {pipeline_mode = #tpu.pipeline_mode<synchronous>, transform_indices = @transform_5, window_bounds = array<i64: 512, 256>}, {pipeline_mode = #tpu.pipeline_mode<synchronous>, transform_indices = @transform_6, window_bounds = array<i64: 256, 256>}, {pipeline_mode = #tpu.pipeline_mode<synchronous>, transform_indices = @transform_7, window_bounds = array<i64: 128, 256>}, {transform_indices = @transform_8, window_bounds = array<i64: 8, 256>}]} {
    %c0 = arith.constant 0 : index
    %c0_0 = arith.constant 0 : index
    %c0_1 = arith.constant 0 : index
    %0 = vector.load %arg1[%c0, %c0_0, %c0_1] : memref<1x4x640xf32, #tpu.memory_space<vmem>>, vector<1x4x512xf32>
    %c0_2 = arith.constant 0 : index
    %c0_3 = arith.constant 0 : index
    %c0_4 = arith.constant 0 : index
    %1 = vector.load %arg10[%c0_2, %c0_3, %c0_4] : memref<1x100x512xf32, #tpu.memory_space<vmem>>, vector<1x4x512xf32>
    tpu.vector_store %arg10[%c0_2, %c0_3, %c0_4], %0 {strides = array<i32>} : memref<1x100x512xf32, #tpu.memory_space<vmem>>, vector<1x4x512xf32>,
    %c0_5 = arith.constant 0 : index
    %c0_6 = arith.constant 0 : index
    %c1 = arith.constant 1 : index
    %2 = vector.load %arg1[%c0_5, %c0_6, %c1] : memref<1x4x640xf32, #tpu.memory_space<vmem>>, vector<1x4x512xf32>
    %c0_7 = arith.constant 0 : index
    %c4 = arith.constant 4 : index
    %c0_8 = arith.constant 0 : index
    %3 = vector.load %arg10[%c0_7, %c4, %c0_8] : memref<1x100x512xf32, #tpu.memory_space<vmem>>, vector<1x4x512xf32>
    tpu.vector_store %arg10[%c0_7, %c4, %c0_8], %2 {strides = array<i32>} : memref<1x100x512xf32, #tpu.memory_space<vmem>>, vector<1x4x512xf32>,
    %c0_9 = arith.constant 0 : index
    %c0_10 = arith.constant 0 : index
    %c2 = arith.constant 2 : index
    %4 = vector.load %arg1[%c0_9, %c0_10, %c2] : memref<1x4x640xf32, #tpu.memory_space<vmem>>, vector<1x4x512xf32>
    %c0_11 = arith.constant 0 : index
    %c8 = arith.constant 8 : index
    %c0_12 = arith.constant 0 : index
    %5 = vector.load %arg10[%c0_11, %c8, %c0_12] : memref<1x100x512xf32, #tpu.memory_space<vmem>>, vector<1x4x512xf32>
    tpu.vector_store %arg10[%c0_11, %c8, %c0_12], %4 {strides = array<i32>} : memref<1x100x512xf32, #tpu.memory_space<vmem>>, vector<1x4x512xf32>,
    %c0_13 = arith.constant 0 : index
    %c0_14 = arith.constant 0 : index
    %c3 = arith.constant 3 : index
    %6 = vector.load %arg1[%c0_13, %c0_14, %c3] : memref<1x4x640xf32, #tpu.memory_space<vmem>>, vector<1x4x512xf32>
    %c0_15 = arith.constant 0 : index
    %c12 = arith.constant 12 : index
    %c0_16 = arith.constant 0 : index
    %7 = vector.load %arg10[%c0_15, %c12, %c0_16] : memref<1x100x512xf32, #tpu.memory_space<vmem>>, vector<1x4x512xf32>
    tpu.vector_store %arg10[%c0_15, %c12, %c0_16], %6 {strides = array<i32>} : memref<1x100x512xf32, #tpu.memory_space<vmem>>, vector<1x4x512xf32>,
    %c0_17 = arith.constant 0 : index
    %c0_18 = arith.constant 0 : index
    %c4_19 = arith.constant 4 : index
    %8 = vector.load %arg1[%c0_17, %c0_18, %c4_19] : memref<1x4x640xf32, #tpu.memory_space<vmem>>, vector<1x4x512xf32>
    %c0_20 = arith.constant 0 : index
    %c16 = arith.constant 16 : index
    %c0_21 = arith.constant 0 : index
    %9 = vector.load %arg10[%c0_20, %c16, %c0_21] : memref<1x100x512xf32, #tpu.memory_space<vmem>>, vector<1x4x512xf32>
    tpu.vector_store %arg10[%c0_20, %c16, %c0_21], %8 {strides = array<i32>} : memref<1x100x512xf32, #tpu.memory_space<vmem>>, vector<1x4x512xf32>,
    %c0_22 = arith.constant 0 : index
    %c0_23 = arith.constant 0 : index
    %c20 = arith.constant 20 : index
    %10 = vector.load %arg1[%c0_22, %c0_23, %c20] : memref<1x4x640xf32, #tpu.memory_space<vmem>>, vector<1x4x512xf32>
    %c0_24 = arith.constant 0 : index
    %c20_25 = arith.constant 20 : index
    %c0_26 = arith.constant 0 : index
    %11 = vector.load %arg10[%c0_24, %c20_25, %c0_26] : memref<1x100x512xf32, #tpu.memory_space<vmem>>, vector<1x4x512xf32>
    tpu.vector_store %arg10[%c0_24, %c20_25, %c0_26], %10 {strides = array<i32>} : memref<1x100x512xf32, #tpu.memory_space<vmem>>, vector<1x4x512xf32>,
    %c0_27 = arith.constant 0 : index
    %c0_28 = arith.constant 0 : index
    %c21 = arith.constant 21 : index
    %12 = vector.load %arg1[%c0_27, %c0_28, %c21] : memref<1x4x640xf32, #tpu.memory_space<vmem>>, vector<1x4x512xf32>
    %c0_29 = arith.constant 0 : index
    %c24 = arith.constant 24 : index
    %c0_30 = arith.constant 0 : index
    %13 = vector.load %arg10[%c0_29, %c24, %c0_30] : memref<1x100x512xf32, #tpu.memory_space<vmem>>, vector<1x4x512xf32>
    tpu.vector_store %arg10[%c0_29, %c24, %c0_30], %12 {strides = array<i32>} : memref<1x100x512xf32, #tpu.memory_space<vmem>>, vector<1x4x512xf32>,
    %c0_31 = arith.constant 0 : index
    %c0_32 = arith.constant 0 : index
    %c22 = arith.constant 22 : index
    %14 = vector.load %arg1[%c0_31, %c0_32, %c22] : memref<1x4x640xf32, #tpu.memory_space<vmem>>, vector<1x4x512xf32>
    %c0_33 = arith.constant 0 : index
    %c28 = arith.constant 28 : index
    %c0_34 = arith.constant 0 : index
    %15 = vector.load %arg10[%c0_33, %c28, %c0_34] : memref<1x100x512xf32, #tpu.memory_space<vmem>>, vector<1x4x512xf32>
    tpu.vector_store %arg10[%c0_33, %c28, %c0_34], %14 {strides = array<i32>} : memref<1x100x512xf32, #tpu.memory_space<vmem>>, vector<1x4x512xf32>,
    %c0_35 = arith.constant 0 : index
    %c0_36 = arith.constant 0 : index
    %c23 = arith.constant 23 : index
    %16 = vector.load %arg1[%c0_35, %c0_36, %c23] : memref<1x4x640xf32, #tpu.memory_space<vmem>>, vector<1x4x512xf32>
    %c0_37 = arith.constant 0 : index
    %c32 = arith.constant 32 : index
    %c0_38 = arith.constant 0 : index
    %17 = vector.load %arg10[%c0_37, %c32, %c0_38] : memref<1x100x512xf32, #tpu.memory_space<vmem>>, vector<1x4x512xf32>
    tpu.vector_store %arg10[%c0_37, %c32, %c0_38], %16 {strides = array<i32>} : memref<1x100x512xf32, #tpu.memory_space<vmem>>, vector<1x4x512xf32>,
    %c0_39 = arith.constant 0 : index
    %c0_40 = arith.constant 0 : index
    %c24_41 = arith.constant 24 : index
    %18 = vector.load %arg1[%c0_39, %c0_40, %c24_41] : memref<1x4x640xf32, #tpu.memory_space<vmem>>, vector<1x4x512xf32>
    %c0_42 = arith.constant 0 : index
    %c36 = arith.constant 36 : index
    %c0_43 = arith.constant 0 : index
    %19 = vector.load %arg10[%c0_42, %c36, %c0_43] : memref<1x100x512xf32, #tpu.memory_space<vmem>>, vector<1x4x512xf32>
    tpu.vector_store %arg10[%c0_42, %c36, %c0_43], %18 {strides = array<i32>} : memref<1x100x512xf32, #tpu.memory_space<vmem>>, vector<1x4x512xf32>,
    %c0_44 = arith.constant 0 : index
    %c0_45 = arith.constant 0 : index
    %c40 = arith.constant 40 : index
    %20 = vector.load %arg1[%c0_44, %c0_45, %c40] : memref<1x4x640xf32, #tpu.memory_space<vmem>>, vector<1x4x512xf32>
    %c0_46 = arith.constant 0 : index
    %c40_47 = arith.constant 40 : index
    %c0_48 = arith.constant 0 : index
    %21 = vector.load %arg10[%c0_46, %c40_47, %c0_48] : memref<1x100x512xf32, #tpu.memory_space<vmem>>, vector<1x4x512xf32>
    tpu.vector_store %arg10[%c0_46, %c40_47, %c0_48], %20 {strides = array<i32>} : memref<1x100x512xf32, #tpu.memory_space<vmem>>, vector<1x4x512xf32>,
    %c0_49 = arith.constant 0 : index
    %c0_50 = arith.constant 0 : index
    %c41 = arith.constant 41 : index
    %22 = vector.load %arg1[%c0_49, %c0_50, %c41] : memref<1x4x640xf32, #tpu.memory_space<vmem>>, vector<1x4x512xf32>
    %c0_51 = arith.constant 0 : index
    %c44 = arith.constant 44 : index
    %c0_52 = arith.constant 0 : index
    %23 = vector.load %arg10[%c0_51, %c44, %c0_52] : memref<1x100x512xf32, #tpu.memory_space<vmem>>, vector<1x4x512xf32>
    tpu.vector_store %arg10[%c0_51, %c44, %c0_52], %22 {strides = array<i32>} : memref<1x100x512xf32, #tpu.memory_space<vmem>>, vector<1x4x512xf32>,
    %c0_53 = arith.constant 0 : index
    %c0_54 = arith.constant 0 : index
    %c42 = arith.constant 42 : index
    %24 = vector.load %arg1[%c0_53, %c0_54, %c42] : memref<1x4x640xf32, #tpu.memory_space<vmem>>, vector<1x4x512xf32>
    %c0_55 = arith.constant 0 : index
    %c48 = arith.constant 48 : index
    %c0_56 = arith.constant 0 : index
    %25 = vector.load %arg10[%c0_55, %c48, %c0_56] : memref<1x100x512xf32, #tpu.memory_space<vmem>>, vector<1x4x512xf32>
    tpu.vector_store %arg10[%c0_55, %c48, %c0_56], %24 {strides = array<i32>} : memref<1x100x512xf32, #tpu.memory_space<vmem>>, vector<1x4x512xf32>,
    %c0_57 = arith.constant 0 : index
    %c0_58 = arith.constant 0 : index
    %c43 = arith.constant 43 : index
    %26 = vector.load %arg1[%c0_57, %c0_58, %c43] : memref<1x4x640xf32, #tpu.memory_space<vmem>>, vector<1x4x512xf32>
    %c0_59 = arith.constant 0 : index
    %c52 = arith.constant 52 : index
    %c0_60 = arith.constant 0 : index
    %27 = vector.load %arg10[%c0_59, %c52, %c0_60] : memref<1x100x512xf32, #tpu.memory_space<vmem>>, vector<1x4x512xf32>
    tpu.vector_store %arg10[%c0_59, %c52, %c0_60], %26 {strides = array<i32>} : memref<1x100x512xf32, #tpu.memory_space<vmem>>, vector<1x4x512xf32>,
    %c0_61 = arith.constant 0 : index
    %c0_62 = arith.constant 0 : index
    %c44_63 = arith.constant 44 : index
    %28 = vector.load %arg1[%c0_61, %c0_62, %c44_63] : memref<1x4x640xf32, #tpu.memory_space<vmem>>, vector<1x4x512xf32>
    %c0_64 = arith.constant 0 : index
    %c56 = arith.constant 56 : index
    %c0_65 = arith.constant 0 : index
    %29 = vector.load %arg10[%c0_64, %c56, %c0_65] : memref<1x100x512xf32, #tpu.memory_space<vmem>>, vector<1x4x512xf32>
    tpu.vector_store %arg10[%c0_64, %c56, %c0_65], %28 {strides = array<i32>} : memref<1x100x512xf32, #tpu.memory_space<vmem>>, vector<1x4x512xf32>,
    %c0_66 = arith.constant 0 : index
    %c0_67 = arith.constant 0 : index
    %c60 = arith.constant 60 : index
    %30 = vector.load %arg1[%c0_66, %c0_67, %c60] : memref<1x4x640xf32, #tpu.memory_space<vmem>>, vector<1x4x512xf32>
    %c0_68 = arith.constant 0 : index
    %c60_69 = arith.constant 60 : index
    %c0_70 = arith.constant 0 : index
    %31 = vector.load %arg10[%c0_68, %c60_69, %c0_70] : memref<1x100x512xf32, #tpu.memory_space<vmem>>, vector<1x4x512xf32>
    tpu.vector_store %arg10[%c0_68, %c60_69, %c0_70], %30 {strides = array<i32>} : memref<1x100x512xf32, #tpu.memory_space<vmem>>, vector<1x4x512xf32>,
    %c0_71 = arith.constant 0 : index
    %c0_72 = arith.constant 0 : index
    %c61 = arith.constant 61 : index
    %32 = vector.load %arg1[%c0_71, %c0_72, %c61] : memref<1x4x640xf32, #tpu.memory_space<vmem>>, vector<1x4x512xf32>
    %c0_73 = arith.constant 0 : index
    %c64 = arith.constant 64 : index
    %c0_74 = arith.constant 0 : index
    %33 = vector.load %arg10[%c0_73, %c64, %c0_74] : memref<1x100x512xf32, #tpu.memory_space<vmem>>, vector<1x4x512xf32>
    tpu.vector_store %arg10[%c0_73, %c64, %c0_74], %32 {strides = array<i32>} : memref<1x100x512xf32, #tpu.memory_space<vmem>>, vector<1x4x512xf32>,
    %c0_75 = arith.constant 0 : index
    %c0_76 = arith.constant 0 : index
    %c62 = arith.constant 62 : index
    %34 = vector.load %arg1[%c0_75, %c0_76, %c62] : memref<1x4x640xf32, #tpu.memory_space<vmem>>, vector<1x4x512xf32>
    %c0_77 = arith.constant 0 : index
    %c68 = arith.constant 68 : index
    %c0_78 = arith.constant 0 : index
    %35 = vector.load %arg10[%c0_77, %c68, %c0_78] : memref<1x100x512xf32, #tpu.memory_space<vmem>>, vector<1x4x512xf32>
    tpu.vector_store %arg10[%c0_77, %c68, %c0_78], %34 {strides = array<i32>} : memref<1x100x512xf32, #tpu.memory_space<vmem>>, vector<1x4x512xf32>,
    %c0_79 = arith.constant 0 : index
    %c0_80 = arith.constant 0 : index
    %c63 = arith.constant 63 : index
    %36 = vector.load %arg1[%c0_79, %c0_80, %c63] : memref<1x4x640xf32, #tpu.memory_space<vmem>>, vector<1x4x512xf32>
    %c0_81 = arith.constant 0 : index
    %c72 = arith.constant 72 : index
    %c0_82 = arith.constant 0 : index
    %37 = vector.load %arg10[%c0_81, %c72, %c0_82] : memref<1x100x512xf32, #tpu.memory_space<vmem>>, vector<1x4x512xf32>
    tpu.vector_store %arg10[%c0_81, %c72, %c0_82], %36 {strides = array<i32>} : memref<1x100x512xf32, #tpu.memory_space<vmem>>, vector<1x4x512xf32>,
    %c0_83 = arith.constant 0 : index
    %c0_84 = arith.constant 0 : index
    %c64_85 = arith.constant 64 : index
    %38 = vector.load %arg1[%c0_83, %c0_84, %c64_85] : memref<1x4x640xf32, #tpu.memory_space<vmem>>, vector<1x4x512xf32>
    %c0_86 = arith.constant 0 : index
    %c76 = arith.constant 76 : index
    %c0_87 = arith.constant 0 : index
    %39 = vector.load %arg10[%c0_86, %c76, %c0_87] : memref<1x100x512xf32, #tpu.memory_space<vmem>>, vector<1x4x512xf32>
    tpu.vector_store %arg10[%c0_86, %c76, %c0_87], %38 {strides = array<i32>} : memref<1x100x512xf32, #tpu.memory_space<vmem>>, vector<1x4x512xf32>,
    %c0_88 = arith.constant 0 : index
    %c0_89 = arith.constant 0 : index
    %c80 = arith.constant 80 : index
    %40 = vector.load %arg1[%c0_88, %c0_89, %c80] : memref<1x4x640xf32, #tpu.memory_space<vmem>>, vector<1x4x512xf32>
    %c0_90 = arith.constant 0 : index
    %c80_91 = arith.constant 80 : index
    %c0_92 = arith.constant 0 : index
    %41 = vector.load %arg10[%c0_90, %c80_91, %c0_92] : memref<1x100x512xf32, #tpu.memory_space<vmem>>, vector<1x4x512xf32>
    tpu.vector_store %arg10[%c0_90, %c80_91, %c0_92], %40 {strides = array<i32>} : memref<1x100x512xf32, #tpu.memory_space<vmem>>, vector<1x4x512xf32>,
    %c0_93 = arith.constant 0 : index
    %c0_94 = arith.constant 0 : index
    %c81 = arith.constant 81 : index
    %42 = vector.load %arg1[%c0_93, %c0_94, %c81] : memref<1x4x640xf32, #tpu.memory_space<vmem>>, vector<1x4x512xf32>
    %c0_95 = arith.constant 0 : index
    %c84 = arith.constant 84 : index
    %c0_96 = arith.constant 0 : index
    %43 = vector.load %arg10[%c0_95, %c84, %c0_96] : memref<1x100x512xf32, #tpu.memory_space<vmem>>, vector<1x4x512xf32>
    tpu.vector_store %arg10[%c0_95, %c84, %c0_96], %42 {strides = array<i32>} : memref<1x100x512xf32, #tpu.memory_space<vmem>>, vector<1x4x512xf32>,
    %c0_97 = arith.constant 0 : index
    %c0_98 = arith.constant 0 : index
    %c82 = arith.constant 82 : index
    %44 = vector.load %arg1[%c0_97, %c0_98, %c82] : memref<1x4x640xf32, #tpu.memory_space<vmem>>, vector<1x4x512xf32>
    %c0_99 = arith.constant 0 : index
    %c88 = arith.constant 88 : index
    %c0_100 = arith.constant 0 : index
    %45 = vector.load %arg10[%c0_99, %c88, %c0_100] : memref<1x100x512xf32, #tpu.memory_space<vmem>>, vector<1x4x512xf32>
    tpu.vector_store %arg10[%c0_99, %c88, %c0_100], %44 {strides = array<i32>} : memref<1x100x512xf32, #tpu.memory_space<vmem>>, vector<1x4x512xf32>,
    %c0_101 = arith.constant 0 : index
    %c0_102 = arith.constant 0 : index
    %c83 = arith.constant 83 : index
    %46 = vector.load %arg1[%c0_101, %c0_102, %c83] : memref<1x4x640xf32, #tpu.memory_space<vmem>>, vector<1x4x512xf32>
    %c0_103 = arith.constant 0 : index
    %c92 = arith.constant 92 : index
    %c0_104 = arith.constant 0 : index
    %47 = vector.load %arg10[%c0_103, %c92, %c0_104] : memref<1x100x512xf32, #tpu.memory_space<vmem>>, vector<1x4x512xf32>
    tpu.vector_store %arg10[%c0_103, %c92, %c0_104], %46 {strides = array<i32>} : memref<1x100x512xf32, #tpu.memory_space<vmem>>, vector<1x4x512xf32>,
    %c0_105 = arith.constant 0 : index
    %c0_106 = arith.constant 0 : index
    %c84_107 = arith.constant 84 : index
    %48 = vector.load %arg1[%c0_105, %c0_106, %c84_107] : memref<1x4x640xf32, #tpu.memory_space<vmem>>, vector<1x4x512xf32>
    %c0_108 = arith.constant 0 : index
    %c96 = arith.constant 96 : index
    %c0_109 = arith.constant 0 : index
    %49 = vector.load %arg10[%c0_108, %c96, %c0_109] : memref<1x100x512xf32, #tpu.memory_space<vmem>>, vector<1x4x512xf32>
    tpu.vector_store %arg10[%c0_108, %c96, %c0_109], %48 {strides = array<i32>} : memref<1x100x512xf32, #tpu.memory_space<vmem>>, vector<1x4x512xf32>,
    %c0_110 = arith.constant 0 : index
    %c0_111 = arith.constant 0 : index
    %c0_112 = arith.constant 0 : index
    %50 = vector.load %arg4[%c0_110, %c0_111, %c0_112] : memref<3x8x100xf32, #tpu.memory_space<vmem>>, vector<1x8x100xf32>
    %51 = vector.shape_cast %50 : vector<1x8x100xf32> to vector<8x100xf32>
    %c0_113 = arith.constant 0 : index
    %c0_114 = arith.constant 0 : index
    %c0_115 = arith.constant 0 : index
    %52 = vector.load %arg10[%c0_113, %c0_114, %c0_115] : memref<1x100x512xf32, #tpu.memory_space<vmem>>, vector<1x100x512xf32>
    %53 = vector.shape_cast %52 : vector<1x100x512xf32> to vector<100x512xf32>
    %cst = arith.constant dense<0.000000e+00> : vector<8x512xf32>
    %54 = tpu.matmul %51, %53, %cst {dimension_numbers = #tpu.dot_dimension_numbers<[1], [0], [0], [1], [0, 0, 1, 1], [], []>} : vector<8x100xf32>, vector<100x512xf32>, vector<8x512xf32> -> vector<8x512xf32>
    %c0_116 = arith.constant 0 : index
    %c0_117 = arith.constant 0 : index
    %55 = vector.load %arg11[%c0_116, %c0_117] : memref<8x512xf32, #tpu.memory_space<vmem>>, vector<8x512xf32>
    tpu.vector_store %arg11[%c0_116, %c0_117], %54 {strides = array<i32>} : memref<8x512xf32, #tpu.memory_space<vmem>>, vector<8x512xf32>,
    %c0_118 = arith.constant 0 : index
    %c0_119 = arith.constant 0 : index
    %56 = vector.load %arg11[%c0_118, %c0_119] : memref<8x512xf32, #tpu.memory_space<vmem>>, vector<8x512xf32>
    %c0_120 = arith.constant 0 : index
    %c0_121 = arith.constant 0 : index
    %c0_122 = arith.constant 0 : index
    %57 = vector.load %arg5[%c0_120, %c0_121, %c0_122] : memref<3x8x1xf32, #tpu.memory_space<vmem>>, vector<1x8x1xf32>
    %58 = vector.shape_cast %57 : vector<1x8x1xf32> to vector<8x1xf32>
    %59 = vector.broadcast %58 : vector<8x1xf32> to vector<8x512xf32>
    %60 = arith.addf %56, %59 : vector<8x512xf32>
    %cst_123 = arith.constant 0.000000e+00 : f32
    %61 = vector.broadcast %cst_123 : f32 to vector<8x512xf32>
    %62 = arith.maximumf %60, %61 : vector<8x512xf32>
    %63 = math.absf %60 : vector<8x512xf32>
    %cst_124 = arith.constant 0.000000e+00 : f32
    %64 = vector.broadcast %cst_124 : f32 to vector<8x512xf32>
    %65 = arith.subf %64, %63 : vector<8x512xf32>
    %66 = math.exp %65 : vector<8x512xf32>
    %cst_125 = arith.constant 1.000000e+00 : f32
    %67 = vector.broadcast %cst_125 : f32 to vector<8x512xf32>
    %68 = arith.addf %67, %66 : vector<8x512xf32>
    %69 = math.log %68 : vector<8x512xf32>
    %70 = arith.addf %62, %69 : vector<8x512xf32>
    %c0_126 = arith.constant 0 : index
    %c0_127 = arith.constant 0 : index
    %71 = vector.load %arg6[%c0_126, %c0_127] : memref<512x256xf32, #tpu.memory_space<vmem>>, vector<512x256xf32>
    %cst_128 = arith.constant dense<0.000000e+00> : vector<8x256xf32>
    %72 = tpu.matmul %70, %71, %cst_128 {dimension_numbers = #tpu.dot_dimension_numbers<[1], [0], [0], [1], [0, 0, 1, 1], [], []>} : vector<8x512xf32>, vector<512x256xf32>, vector<8x256xf32> -> vector<8x256xf32>
    %c0_129 = arith.constant 0 : index
    %c0_130 = arith.constant 0 : index
    %73 = vector.load %arg9[%c0_129, %c0_130] : memref<8x256xf32, #tpu.memory_space<vmem>>, vector<8x256xf32>
    tpu.vector_store %arg9[%c0_129, %c0_130], %72 {strides = array<i32>} : memref<8x256xf32, #tpu.memory_space<vmem>>, vector<8x256xf32>,
    %c0_131 = arith.constant 0 : index
    %c0_132 = arith.constant 0 : index
    %c0_133 = arith.constant 0 : index
    %74 = vector.load %arg2[%c0_131, %c0_132, %c0_133] : memref<1x4x384xf32, #tpu.memory_space<vmem>>, vector<1x4x256xf32>
    %c0_134 = arith.constant 0 : index
    %c0_135 = arith.constant 0 : index
    %c0_136 = arith.constant 0 : index
    %75 = vector.load %arg10[%c0_134, %c0_135, %c0_136] : memref<1x100x512xf32, #tpu.memory_space<vmem>>, vector<1x4x256xf32>
    tpu.vector_store %arg10[%c0_134, %c0_135, %c0_136], %74 {strides = array<i32>} : memref<1x100x512xf32, #tpu.memory_space<vmem>>, vector<1x4x256xf32>,
    %c0_137 = arith.constant 0 : index
    %c0_138 = arith.constant 0 : index
    %c1_139 = arith.constant 1 : index
    %76 = vector.load %arg2[%c0_137, %c0_138, %c1_139] : memref<1x4x384xf32, #tpu.memory_space<vmem>>, vector<1x4x256xf32>
    %c0_140 = arith.constant 0 : index
    %c4_141 = arith.constant 4 : index
    %c0_142 = arith.constant 0 : index
    %77 = vector.load %arg10[%c0_140, %c4_141, %c0_142] : memref<1x100x512xf32, #tpu.memory_space<vmem>>, vector<1x4x256xf32>
    tpu.vector_store %arg10[%c0_140, %c4_141, %c0_142], %76 {strides = array<i32>} : memref<1x100x512xf32, #tpu.memory_space<vmem>>, vector<1x4x256xf32>,
    %c0_143 = arith.constant 0 : index
    %c0_144 = arith.constant 0 : index
    %c2_145 = arith.constant 2 : index
    %78 = vector.load %arg2[%c0_143, %c0_144, %c2_145] : memref<1x4x384xf32, #tpu.memory_space<vmem>>, vector<1x4x256xf32>
    %c0_146 = arith.constant 0 : index
    %c8_147 = arith.constant 8 : index
    %c0_148 = arith.constant 0 : index
    %79 = vector.load %arg10[%c0_146, %c8_147, %c0_148] : memref<1x100x512xf32, #tpu.memory_space<vmem>>, vector<1x4x256xf32>
    tpu.vector_store %arg10[%c0_146, %c8_147, %c0_148], %78 {strides = array<i32>} : memref<1x100x512xf32, #tpu.memory_space<vmem>>, vector<1x4x256xf32>,
    %c0_149 = arith.constant 0 : index
    %c0_150 = arith.constant 0 : index
    %c3_151 = arith.constant 3 : index
    %80 = vector.load %arg2[%c0_149, %c0_150, %c3_151] : memref<1x4x384xf32, #tpu.memory_space<vmem>>, vector<1x4x256xf32>
    %c0_152 = arith.constant 0 : index
    %c12_153 = arith.constant 12 : index
    %c0_154 = arith.constant 0 : index
    %81 = vector.load %arg10[%c0_152, %c12_153, %c0_154] : memref<1x100x512xf32, #tpu.memory_space<vmem>>, vector<1x4x256xf32>
    tpu.vector_store %arg10[%c0_152, %c12_153, %c0_154], %80 {strides = array<i32>} : memref<1x100x512xf32, #tpu.memory_space<vmem>>, vector<1x4x256xf32>,
    %c0_155 = arith.constant 0 : index
    %c0_156 = arith.constant 0 : index
    %c4_157 = arith.constant 4 : index
    %82 = vector.load %arg2[%c0_155, %c0_156, %c4_157] : memref<1x4x384xf32, #tpu.memory_space<vmem>>, vector<1x4x256xf32>
    %c0_158 = arith.constant 0 : index
    %c16_159 = arith.constant 16 : index
    %c0_160 = arith.constant 0 : index
    %83 = vector.load %arg10[%c0_158, %c16_159, %c0_160] : memref<1x100x512xf32, #tpu.memory_space<vmem>>, vector<1x4x256xf32>
    tpu.vector_store %arg10[%c0_158, %c16_159, %c0_160], %82 {strides = array<i32>} : memref<1x100x512xf32, #tpu.memory_space<vmem>>, vector<1x4x256xf32>,
    %c0_161 = arith.constant 0 : index
    %c0_162 = arith.constant 0 : index
    %c12_163 = arith.constant 12 : index
    %84 = vector.load %arg2[%c0_161, %c0_162, %c12_163] : memref<1x4x384xf32, #tpu.memory_space<vmem>>, vector<1x4x256xf32>
    %c0_164 = arith.constant 0 : index
    %c20_165 = arith.constant 20 : index
    %c0_166 = arith.constant 0 : index
    %85 = vector.load %arg10[%c0_164, %c20_165, %c0_166] : memref<1x100x512xf32, #tpu.memory_space<vmem>>, vector<1x4x256xf32>
    tpu.vector_store %arg10[%c0_164, %c20_165, %c0_166], %84 {strides = array<i32>} : memref<1x100x512xf32, #tpu.memory_space<vmem>>, vector<1x4x256xf32>,
    %c0_167 = arith.constant 0 : index
    %c0_168 = arith.constant 0 : index
    %c13 = arith.constant 13 : index
    %86 = vector.load %arg2[%c0_167, %c0_168, %c13] : memref<1x4x384xf32, #tpu.memory_space<vmem>>, vector<1x4x256xf32>
    %c0_169 = arith.constant 0 : index
    %c24_170 = arith.constant 24 : index
    %c0_171 = arith.constant 0 : index
    %87 = vector.load %arg10[%c0_169, %c24_170, %c0_171] : memref<1x100x512xf32, #tpu.memory_space<vmem>>, vector<1x4x256xf32>
    tpu.vector_store %arg10[%c0_169, %c24_170, %c0_171], %86 {strides = array<i32>} : memref<1x100x512xf32, #tpu.memory_space<vmem>>, vector<1x4x256xf32>,
    %c0_172 = arith.constant 0 : index
    %c0_173 = arith.constant 0 : index
    %c14 = arith.constant 14 : index
    %88 = vector.load %arg2[%c0_172, %c0_173, %c14] : memref<1x4x384xf32, #tpu.memory_space<vmem>>, vector<1x4x256xf32>
    %c0_174 = arith.constant 0 : index
    %c28_175 = arith.constant 28 : index
    %c0_176 = arith.constant 0 : index
    %89 = vector.load %arg10[%c0_174, %c28_175, %c0_176] : memref<1x100x512xf32, #tpu.memory_space<vmem>>, vector<1x4x256xf32>
    tpu.vector_store %arg10[%c0_174, %c28_175, %c0_176], %88 {strides = array<i32>} : memref<1x100x512xf32, #tpu.memory_space<vmem>>, vector<1x4x256xf32>,
    %c0_177 = arith.constant 0 : index
    %c0_178 = arith.constant 0 : index
    %c15 = arith.constant 15 : index
    %90 = vector.load %arg2[%c0_177, %c0_178, %c15] : memref<1x4x384xf32, #tpu.memory_space<vmem>>, vector<1x4x256xf32>
    %c0_179 = arith.constant 0 : index
    %c32_180 = arith.constant 32 : index
    %c0_181 = arith.constant 0 : index
    %91 = vector.load %arg10[%c0_179, %c32_180, %c0_181] : memref<1x100x512xf32, #tpu.memory_space<vmem>>, vector<1x4x256xf32>
    tpu.vector_store %arg10[%c0_179, %c32_180, %c0_181], %90 {strides = array<i32>} : memref<1x100x512xf32, #tpu.memory_space<vmem>>, vector<1x4x256xf32>,
    %c0_182 = arith.constant 0 : index
    %c0_183 = arith.constant 0 : index
    %c16_184 = arith.constant 16 : index
    %92 = vector.load %arg2[%c0_182, %c0_183, %c16_184] : memref<1x4x384xf32, #tpu.memory_space<vmem>>, vector<1x4x256xf32>
    %c0_185 = arith.constant 0 : index
    %c36_186 = arith.constant 36 : index
    %c0_187 = arith.constant 0 : index
    %93 = vector.load %arg10[%c0_185, %c36_186, %c0_187] : memref<1x100x512xf32, #tpu.memory_space<vmem>>, vector<1x4x256xf32>
    tpu.vector_store %arg10[%c0_185, %c36_186, %c0_187], %92 {strides = array<i32>} : memref<1x100x512xf32, #tpu.memory_space<vmem>>, vector<1x4x256xf32>,
    %c0_188 = arith.constant 0 : index
    %c0_189 = arith.constant 0 : index
    %c24_190 = arith.constant 24 : index
    %94 = vector.load %arg2[%c0_188, %c0_189, %c24_190] : memref<1x4x384xf32, #tpu.memory_space<vmem>>, vector<1x4x256xf32>
    %c0_191 = arith.constant 0 : index
    %c40_192 = arith.constant 40 : index
    %c0_193 = arith.constant 0 : index
    %95 = vector.load %arg10[%c0_191, %c40_192, %c0_193] : memref<1x100x512xf32, #tpu.memory_space<vmem>>, vector<1x4x256xf32>
    tpu.vector_store %arg10[%c0_191, %c40_192, %c0_193], %94 {strides = array<i32>} : memref<1x100x512xf32, #tpu.memory_space<vmem>>, vector<1x4x256xf32>,
    %c0_194 = arith.constant 0 : index
    %c0_195 = arith.constant 0 : index
    %c25 = arith.constant 25 : index
    %96 = vector.load %arg2[%c0_194, %c0_195, %c25] : memref<1x4x384xf32, #tpu.memory_space<vmem>>, vector<1x4x256xf32>
    %c0_196 = arith.constant 0 : index
    %c44_197 = arith.constant 44 : index
    %c0_198 = arith.constant 0 : index
    %97 = vector.load %arg10[%c0_196, %c44_197, %c0_198] : memref<1x100x512xf32, #tpu.memory_space<vmem>>, vector<1x4x256xf32>
    tpu.vector_store %arg10[%c0_196, %c44_197, %c0_198], %96 {strides = array<i32>} : memref<1x100x512xf32, #tpu.memory_space<vmem>>, vector<1x4x256xf32>,
    %c0_199 = arith.constant 0 : index
    %c0_200 = arith.constant 0 : index
    %c26 = arith.constant 26 : index
    %98 = vector.load %arg2[%c0_199, %c0_200, %c26] : memref<1x4x384xf32, #tpu.memory_space<vmem>>, vector<1x4x256xf32>
    %c0_201 = arith.constant 0 : index
    %c48_202 = arith.constant 48 : index
    %c0_203 = arith.constant 0 : index
    %99 = vector.load %arg10[%c0_201, %c48_202, %c0_203] : memref<1x100x512xf32, #tpu.memory_space<vmem>>, vector<1x4x256xf32>
    tpu.vector_store %arg10[%c0_201, %c48_202, %c0_203], %98 {strides = array<i32>} : memref<1x100x512xf32, #tpu.memory_space<vmem>>, vector<1x4x256xf32>,
    %c0_204 = arith.constant 0 : index
    %c0_205 = arith.constant 0 : index
    %c27 = arith.constant 27 : index
    %100 = vector.load %arg2[%c0_204, %c0_205, %c27] : memref<1x4x384xf32, #tpu.memory_space<vmem>>, vector<1x4x256xf32>
    %c0_206 = arith.constant 0 : index
    %c52_207 = arith.constant 52 : index
    %c0_208 = arith.constant 0 : index
    %101 = vector.load %arg10[%c0_206, %c52_207, %c0_208] : memref<1x100x512xf32, #tpu.memory_space<vmem>>, vector<1x4x256xf32>
    tpu.vector_store %arg10[%c0_206, %c52_207, %c0_208], %100 {strides = array<i32>} : memref<1x100x512xf32, #tpu.memory_space<vmem>>, vector<1x4x256xf32>,
    %c0_209 = arith.constant 0 : index
    %c0_210 = arith.constant 0 : index
    %c28_211 = arith.constant 28 : index
    %102 = vector.load %arg2[%c0_209, %c0_210, %c28_211] : memref<1x4x384xf32, #tpu.memory_space<vmem>>, vector<1x4x256xf32>
    %c0_212 = arith.constant 0 : index
    %c56_213 = arith.constant 56 : index
    %c0_214 = arith.constant 0 : index
    %103 = vector.load %arg10[%c0_212, %c56_213, %c0_214] : memref<1x100x512xf32, #tpu.memory_space<vmem>>, vector<1x4x256xf32>
    tpu.vector_store %arg10[%c0_212, %c56_213, %c0_214], %102 {strides = array<i32>} : memref<1x100x512xf32, #tpu.memory_space<vmem>>, vector<1x4x256xf32>,
    %c0_215 = arith.constant 0 : index
    %c0_216 = arith.constant 0 : index
    %c36_217 = arith.constant 36 : index
    %104 = vector.load %arg2[%c0_215, %c0_216, %c36_217] : memref<1x4x384xf32, #tpu.memory_space<vmem>>, vector<1x4x256xf32>
    %c0_218 = arith.constant 0 : index
    %c60_219 = arith.constant 60 : index
    %c0_220 = arith.constant 0 : index
    %105 = vector.load %arg10[%c0_218, %c60_219, %c0_220] : memref<1x100x512xf32, #tpu.memory_space<vmem>>, vector<1x4x256xf32>
    tpu.vector_store %arg10[%c0_218, %c60_219, %c0_220], %104 {strides = array<i32>} : memref<1x100x512xf32, #tpu.memory_space<vmem>>, vector<1x4x256xf32>,
    %c0_221 = arith.constant 0 : index
    %c0_222 = arith.constant 0 : index
    %c37 = arith.constant 37 : index
    %106 = vector.load %arg2[%c0_221, %c0_222, %c37] : memref<1x4x384xf32, #tpu.memory_space<vmem>>, vector<1x4x256xf32>
    %c0_223 = arith.constant 0 : index
    %c64_224 = arith.constant 64 : index
    %c0_225 = arith.constant 0 : index
    %107 = vector.load %arg10[%c0_223, %c64_224, %c0_225] : memref<1x100x512xf32, #tpu.memory_space<vmem>>, vector<1x4x256xf32>
    tpu.vector_store %arg10[%c0_223, %c64_224, %c0_225], %106 {strides = array<i32>} : memref<1x100x512xf32, #tpu.memory_space<vmem>>, vector<1x4x256xf32>,
    %c0_226 = arith.constant 0 : index
    %c0_227 = arith.constant 0 : index
    %c38 = arith.constant 38 : index
    %108 = vector.load %arg2[%c0_226, %c0_227, %c38] : memref<1x4x384xf32, #tpu.memory_space<vmem>>, vector<1x4x256xf32>
    %c0_228 = arith.constant 0 : index
    %c68_229 = arith.constant 68 : index
    %c0_230 = arith.constant 0 : index
    %109 = vector.load %arg10[%c0_228, %c68_229, %c0_230] : memref<1x100x512xf32, #tpu.memory_space<vmem>>, vector<1x4x256xf32>
    tpu.vector_store %arg10[%c0_228, %c68_229, %c0_230], %108 {strides = array<i32>} : memref<1x100x512xf32, #tpu.memory_space<vmem>>, vector<1x4x256xf32>,
    %c0_231 = arith.constant 0 : index
    %c0_232 = arith.constant 0 : index
    %c39 = arith.constant 39 : index
    %110 = vector.load %arg2[%c0_231, %c0_232, %c39] : memref<1x4x384xf32, #tpu.memory_space<vmem>>, vector<1x4x256xf32>
    %c0_233 = arith.constant 0 : index
    %c72_234 = arith.constant 72 : index
    %c0_235 = arith.constant 0 : index
    %111 = vector.load %arg10[%c0_233, %c72_234, %c0_235] : memref<1x100x512xf32, #tpu.memory_space<vmem>>, vector<1x4x256xf32>
    tpu.vector_store %arg10[%c0_233, %c72_234, %c0_235], %110 {strides = array<i32>} : memref<1x100x512xf32, #tpu.memory_space<vmem>>, vector<1x4x256xf32>,
    %c0_236 = arith.constant 0 : index
    %c0_237 = arith.constant 0 : index
    %c40_238 = arith.constant 40 : index
    %112 = vector.load %arg2[%c0_236, %c0_237, %c40_238] : memref<1x4x384xf32, #tpu.memory_space<vmem>>, vector<1x4x256xf32>
    %c0_239 = arith.constant 0 : index
    %c76_240 = arith.constant 76 : index
    %c0_241 = arith.constant 0 : index
    %113 = vector.load %arg10[%c0_239, %c76_240, %c0_241] : memref<1x100x512xf32, #tpu.memory_space<vmem>>, vector<1x4x256xf32>
    tpu.vector_store %arg10[%c0_239, %c76_240, %c0_241], %112 {strides = array<i32>} : memref<1x100x512xf32, #tpu.memory_space<vmem>>, vector<1x4x256xf32>,
    %c0_242 = arith.constant 0 : index
    %c0_243 = arith.constant 0 : index
    %c48_244 = arith.constant 48 : index
    %114 = vector.load %arg2[%c0_242, %c0_243, %c48_244] : memref<1x4x384xf32, #tpu.memory_space<vmem>>, vector<1x4x256xf32>
    %c0_245 = arith.constant 0 : index
    %c80_246 = arith.constant 80 : index
    %c0_247 = arith.constant 0 : index
    %115 = vector.load %arg10[%c0_245, %c80_246, %c0_247] : memref<1x100x512xf32, #tpu.memory_space<vmem>>, vector<1x4x256xf32>
    tpu.vector_store %arg10[%c0_245, %c80_246, %c0_247], %114 {strides = array<i32>} : memref<1x100x512xf32, #tpu.memory_space<vmem>>, vector<1x4x256xf32>,
    %c0_248 = arith.constant 0 : index
    %c0_249 = arith.constant 0 : index
    %c49 = arith.constant 49 : index
    %116 = vector.load %arg2[%c0_248, %c0_249, %c49] : memref<1x4x384xf32, #tpu.memory_space<vmem>>, vector<1x4x256xf32>
    %c0_250 = arith.constant 0 : index
    %c84_251 = arith.constant 84 : index
    %c0_252 = arith.constant 0 : index
    %117 = vector.load %arg10[%c0_250, %c84_251, %c0_252] : memref<1x100x512xf32, #tpu.memory_space<vmem>>, vector<1x4x256xf32>
    tpu.vector_store %arg10[%c0_250, %c84_251, %c0_252], %116 {strides = array<i32>} : memref<1x100x512xf32, #tpu.memory_space<vmem>>, vector<1x4x256xf32>,
    %c0_253 = arith.constant 0 : index
    %c0_254 = arith.constant 0 : index
    %c50 = arith.constant 50 : index
    %118 = vector.load %arg2[%c0_253, %c0_254, %c50] : memref<1x4x384xf32, #tpu.memory_space<vmem>>, vector<1x4x256xf32>
    %c0_255 = arith.constant 0 : index
    %c88_256 = arith.constant 88 : index
    %c0_257 = arith.constant 0 : index
    %119 = vector.load %arg10[%c0_255, %c88_256, %c0_257] : memref<1x100x512xf32, #tpu.memory_space<vmem>>, vector<1x4x256xf32>
    tpu.vector_store %arg10[%c0_255, %c88_256, %c0_257], %118 {strides = array<i32>} : memref<1x100x512xf32, #tpu.memory_space<vmem>>, vector<1x4x256xf32>,
    %c0_258 = arith.constant 0 : index
    %c0_259 = arith.constant 0 : index
    %c51 = arith.constant 51 : index
    %120 = vector.load %arg2[%c0_258, %c0_259, %c51] : memref<1x4x384xf32, #tpu.memory_space<vmem>>, vector<1x4x256xf32>
    %c0_260 = arith.constant 0 : index
    %c92_261 = arith.constant 92 : index
    %c0_262 = arith.constant 0 : index
    %121 = vector.load %arg10[%c0_260, %c92_261, %c0_262] : memref<1x100x512xf32, #tpu.memory_space<vmem>>, vector<1x4x256xf32>
    tpu.vector_store %arg10[%c0_260, %c92_261, %c0_262], %120 {strides = array<i32>} : memref<1x100x512xf32, #tpu.memory_space<vmem>>, vector<1x4x256xf32>,
    %c0_263 = arith.constant 0 : index
    %c0_264 = arith.constant 0 : index
    %c52_265 = arith.constant 52 : index
    %122 = vector.load %arg2[%c0_263, %c0_264, %c52_265] : memref<1x4x384xf32, #tpu.memory_space<vmem>>, vector<1x4x256xf32>
    %c0_266 = arith.constant 0 : index
    %c96_267 = arith.constant 96 : index
    %c0_268 = arith.constant 0 : index
    %123 = vector.load %arg10[%c0_266, %c96_267, %c0_268] : memref<1x100x512xf32, #tpu.memory_space<vmem>>, vector<1x4x256xf32>
    tpu.vector_store %arg10[%c0_266, %c96_267, %c0_268], %122 {strides = array<i32>} : memref<1x100x512xf32, #tpu.memory_space<vmem>>, vector<1x4x256xf32>,
    %c1_269 = arith.constant 1 : index
    %c0_270 = arith.constant 0 : index
    %c0_271 = arith.constant 0 : index
    %124 = vector.load %arg4[%c1_269, %c0_270, %c0_271] : memref<3x8x100xf32, #tpu.memory_space<vmem>>, vector<1x8x100xf32>
    %125 = vector.shape_cast %124 : vector<1x8x100xf32> to vector<8x100xf32>
    %c0_272 = arith.constant 0 : index
    %c0_273 = arith.constant 0 : index
    %c0_274 = arith.constant 0 : index
    %126 = vector.load %arg10[%c0_272, %c0_273, %c0_274] : memref<1x100x512xf32, #tpu.memory_space<vmem>>, vector<1x100x256xf32>
    %127 = vector.shape_cast %126 : vector<1x100x256xf32> to vector<100x256xf32>
    %cst_275 = arith.constant dense<0.000000e+00> : vector<8x256xf32>
    %128 = tpu.matmul %125, %127, %cst_275 {dimension_numbers = #tpu.dot_dimension_numbers<[1], [0], [0], [1], [0, 0, 1, 1], [], []>} : vector<8x100xf32>, vector<100x256xf32>, vector<8x256xf32> -> vector<8x256xf32>
    %c0_276 = arith.constant 0 : index
    %c0_277 = arith.constant 0 : index
    %129 = vector.load %arg11[%c0_276, %c0_277] : memref<8x512xf32, #tpu.memory_space<vmem>>, vector<8x256xf32>
    tpu.vector_store %arg11[%c0_276, %c0_277], %128 {strides = array<i32>} : memref<8x512xf32, #tpu.memory_space<vmem>>, vector<8x256xf32>,
    %c0_278 = arith.constant 0 : index
    %c0_279 = arith.constant 0 : index
    %130 = vector.load %arg11[%c0_278, %c0_279] : memref<8x512xf32, #tpu.memory_space<vmem>>, vector<8x256xf32>
    %c1_280 = arith.constant 1 : index
    %c0_281 = arith.constant 0 : index
    %c0_282 = arith.constant 0 : index
    %131 = vector.load %arg5[%c1_280, %c0_281, %c0_282] : memref<3x8x1xf32, #tpu.memory_space<vmem>>, vector<1x8x1xf32>
    %132 = vector.shape_cast %131 : vector<1x8x1xf32> to vector<8x1xf32>
    %133 = vector.broadcast %132 : vector<8x1xf32> to vector<8x256xf32>
    %134 = arith.addf %130, %133 : vector<8x256xf32>
    %cst_283 = arith.constant 0.000000e+00 : f32
    %135 = vector.broadcast %cst_283 : f32 to vector<8x256xf32>
    %136 = arith.maximumf %134, %135 : vector<8x256xf32>
    %137 = math.absf %134 : vector<8x256xf32>
    %cst_284 = arith.constant 0.000000e+00 : f32
    %138 = vector.broadcast %cst_284 : f32 to vector<8x256xf32>
    %139 = arith.subf %138, %137 : vector<8x256xf32>
    %140 = math.exp %139 : vector<8x256xf32>
    %cst_285 = arith.constant 1.000000e+00 : f32
    %141 = vector.broadcast %cst_285 : f32 to vector<8x256xf32>
    %142 = arith.addf %141, %140 : vector<8x256xf32>
    %143 = math.log %142 : vector<8x256xf32>
    %144 = arith.addf %136, %143 : vector<8x256xf32>
    %c0_286 = arith.constant 0 : index
    %c0_287 = arith.constant 0 : index
    %145 = vector.load %arg7[%c0_286, %c0_287] : memref<256x256xf32, #tpu.memory_space<vmem>>, vector<256x256xf32>
    %cst_288 = arith.constant dense<0.000000e+00> : vector<8x256xf32>
    %146 = tpu.matmul %144, %145, %cst_288 {dimension_numbers = #tpu.dot_dimension_numbers<[1], [0], [0], [1], [0, 0, 1, 1], [], []>} : vector<8x256xf32>, vector<256x256xf32>, vector<8x256xf32> -> vector<8x256xf32>
    %c0_289 = arith.constant 0 : index
    %c0_290 = arith.constant 0 : index
    %147 = vector.load %arg9[%c0_289, %c0_290] : memref<8x256xf32, #tpu.memory_space<vmem>>, vector<8x256xf32>
    %148 = arith.addf %147, %146 : vector<8x256xf32>
    %c0_291 = arith.constant 0 : index
    %c0_292 = arith.constant 0 : index
    %149 = vector.load %arg9[%c0_291, %c0_292] : memref<8x256xf32, #tpu.memory_space<vmem>>, vector<8x256xf32>
    tpu.vector_store %arg9[%c0_291, %c0_292], %148 {strides = array<i32>} : memref<8x256xf32, #tpu.memory_space<vmem>>, vector<8x256xf32>,
    %c0_293 = arith.constant 0 : index
    %c0_294 = arith.constant 0 : index
    %c0_295 = arith.constant 0 : index
    %150 = vector.load %arg3[%c0_293, %c0_294, %c0_295] : memref<1x4x256xf32, #tpu.memory_space<vmem>>, vector<1x4x128xf32>
    %c0_296 = arith.constant 0 : index
    %c0_297 = arith.constant 0 : index
    %c0_298 = arith.constant 0 : index
    %151 = vector.load %arg10[%c0_296, %c0_297, %c0_298] : memref<1x100x512xf32, #tpu.memory_space<vmem>>, vector<1x4x128xf32>
    tpu.vector_store %arg10[%c0_296, %c0_297, %c0_298], %150 {strides = array<i32>} : memref<1x100x512xf32, #tpu.memory_space<vmem>>, vector<1x4x128xf32>,
    %c0_299 = arith.constant 0 : index
    %c0_300 = arith.constant 0 : index
    %c1_301 = arith.constant 1 : index
    %152 = vector.load %arg3[%c0_299, %c0_300, %c1_301] : memref<1x4x256xf32, #tpu.memory_space<vmem>>, vector<1x4x128xf32>
    %c0_302 = arith.constant 0 : index
    %c4_303 = arith.constant 4 : index
    %c0_304 = arith.constant 0 : index
    %153 = vector.load %arg10[%c0_302, %c4_303, %c0_304] : memref<1x100x512xf32, #tpu.memory_space<vmem>>, vector<1x4x128xf32>
    tpu.vector_store %arg10[%c0_302, %c4_303, %c0_304], %152 {strides = array<i32>} : memref<1x100x512xf32, #tpu.memory_space<vmem>>, vector<1x4x128xf32>,
    %c0_305 = arith.constant 0 : index
    %c0_306 = arith.constant 0 : index
    %c2_307 = arith.constant 2 : index
    %154 = vector.load %arg3[%c0_305, %c0_306, %c2_307] : memref<1x4x256xf32, #tpu.memory_space<vmem>>, vector<1x4x128xf32>
    %c0_308 = arith.constant 0 : index
    %c8_309 = arith.constant 8 : index
    %c0_310 = arith.constant 0 : index
    %155 = vector.load %arg10[%c0_308, %c8_309, %c0_310] : memref<1x100x512xf32, #tpu.memory_space<vmem>>, vector<1x4x128xf32>
    tpu.vector_store %arg10[%c0_308, %c8_309, %c0_310], %154 {strides = array<i32>} : memref<1x100x512xf32, #tpu.memory_space<vmem>>, vector<1x4x128xf32>,
    %c0_311 = arith.constant 0 : index
    %c0_312 = arith.constant 0 : index
    %c3_313 = arith.constant 3 : index
    %156 = vector.load %arg3[%c0_311, %c0_312, %c3_313] : memref<1x4x256xf32, #tpu.memory_space<vmem>>, vector<1x4x128xf32>
    %c0_314 = arith.constant 0 : index
    %c12_315 = arith.constant 12 : index
    %c0_316 = arith.constant 0 : index
    %157 = vector.load %arg10[%c0_314, %c12_315, %c0_316] : memref<1x100x512xf32, #tpu.memory_space<vmem>>, vector<1x4x128xf32>
    tpu.vector_store %arg10[%c0_314, %c12_315, %c0_316], %156 {strides = array<i32>} : memref<1x100x512xf32, #tpu.memory_space<vmem>>, vector<1x4x128xf32>,
    %c0_317 = arith.constant 0 : index
    %c0_318 = arith.constant 0 : index
    %c4_319 = arith.constant 4 : index
    %158 = vector.load %arg3[%c0_317, %c0_318, %c4_319] : memref<1x4x256xf32, #tpu.memory_space<vmem>>, vector<1x4x128xf32>
    %c0_320 = arith.constant 0 : index
    %c16_321 = arith.constant 16 : index
    %c0_322 = arith.constant 0 : index
    %159 = vector.load %arg10[%c0_320, %c16_321, %c0_322] : memref<1x100x512xf32, #tpu.memory_space<vmem>>, vector<1x4x128xf32>
    tpu.vector_store %arg10[%c0_320, %c16_321, %c0_322], %158 {strides = array<i32>} : memref<1x100x512xf32, #tpu.memory_space<vmem>>, vector<1x4x128xf32>,
    %c0_323 = arith.constant 0 : index
    %c0_324 = arith.constant 0 : index
    %c8_325 = arith.constant 8 : index
    %160 = vector.load %arg3[%c0_323, %c0_324, %c8_325] : memref<1x4x256xf32, #tpu.memory_space<vmem>>, vector<1x4x128xf32>
    %c0_326 = arith.constant 0 : index
    %c20_327 = arith.constant 20 : index
    %c0_328 = arith.constant 0 : index
    %161 = vector.load %arg10[%c0_326, %c20_327, %c0_328] : memref<1x100x512xf32, #tpu.memory_space<vmem>>, vector<1x4x128xf32>
    tpu.vector_store %arg10[%c0_326, %c20_327, %c0_328], %160 {strides = array<i32>} : memref<1x100x512xf32, #tpu.memory_space<vmem>>, vector<1x4x128xf32>,
    %c0_329 = arith.constant 0 : index
    %c0_330 = arith.constant 0 : index
    %c9 = arith.constant 9 : index
    %162 = vector.load %arg3[%c0_329, %c0_330, %c9] : memref<1x4x256xf32, #tpu.memory_space<vmem>>, vector<1x4x128xf32>
    %c0_331 = arith.constant 0 : index
    %c24_332 = arith.constant 24 : index
    %c0_333 = arith.constant 0 : index
    %163 = vector.load %arg10[%c0_331, %c24_332, %c0_333] : memref<1x100x512xf32, #tpu.memory_space<vmem>>, vector<1x4x128xf32>
    tpu.vector_store %arg10[%c0_331, %c24_332, %c0_333], %162 {strides = array<i32>} : memref<1x100x512xf32, #tpu.memory_space<vmem>>, vector<1x4x128xf32>,
    %c0_334 = arith.constant 0 : index
    %c0_335 = arith.constant 0 : index
    %c10 = arith.constant 10 : index
    %164 = vector.load %arg3[%c0_334, %c0_335, %c10] : memref<1x4x256xf32, #tpu.memory_space<vmem>>, vector<1x4x128xf32>
    %c0_336 = arith.constant 0 : index
    %c28_337 = arith.constant 28 : index
    %c0_338 = arith.constant 0 : index
    %165 = vector.load %arg10[%c0_336, %c28_337, %c0_338] : memref<1x100x512xf32, #tpu.memory_space<vmem>>, vector<1x4x128xf32>
    tpu.vector_store %arg10[%c0_336, %c28_337, %c0_338], %164 {strides = array<i32>} : memref<1x100x512xf32, #tpu.memory_space<vmem>>, vector<1x4x128xf32>,
    %c0_339 = arith.constant 0 : index
    %c0_340 = arith.constant 0 : index
    %c11 = arith.constant 11 : index
    %166 = vector.load %arg3[%c0_339, %c0_340, %c11] : memref<1x4x256xf32, #tpu.memory_space<vmem>>, vector<1x4x128xf32>
    %c0_341 = arith.constant 0 : index
    %c32_342 = arith.constant 32 : index
    %c0_343 = arith.constant 0 : index
    %167 = vector.load %arg10[%c0_341, %c32_342, %c0_343] : memref<1x100x512xf32, #tpu.memory_space<vmem>>, vector<1x4x128xf32>
    tpu.vector_store %arg10[%c0_341, %c32_342, %c0_343], %166 {strides = array<i32>} : memref<1x100x512xf32, #tpu.memory_space<vmem>>, vector<1x4x128xf32>,
    %c0_344 = arith.constant 0 : index
    %c0_345 = arith.constant 0 : index
    %c12_346 = arith.constant 12 : index
    %168 = vector.load %arg3[%c0_344, %c0_345, %c12_346] : memref<1x4x256xf32, #tpu.memory_space<vmem>>, vector<1x4x128xf32>
    %c0_347 = arith.constant 0 : index
    %c36_348 = arith.constant 36 : index
    %c0_349 = arith.constant 0 : index
    %169 = vector.load %arg10[%c0_347, %c36_348, %c0_349] : memref<1x100x512xf32, #tpu.memory_space<vmem>>, vector<1x4x128xf32>
    tpu.vector_store %arg10[%c0_347, %c36_348, %c0_349], %168 {strides = array<i32>} : memref<1x100x512xf32, #tpu.memory_space<vmem>>, vector<1x4x128xf32>,
    %c0_350 = arith.constant 0 : index
    %c0_351 = arith.constant 0 : index
    %c16_352 = arith.constant 16 : index
    %170 = vector.load %arg3[%c0_350, %c0_351, %c16_352] : memref<1x4x256xf32, #tpu.memory_space<vmem>>, vector<1x4x128xf32>
    %c0_353 = arith.constant 0 : index
    %c40_354 = arith.constant 40 : index
    %c0_355 = arith.constant 0 : index
    %171 = vector.load %arg10[%c0_353, %c40_354, %c0_355] : memref<1x100x512xf32, #tpu.memory_space<vmem>>, vector<1x4x128xf32>
    tpu.vector_store %arg10[%c0_353, %c40_354, %c0_355], %170 {strides = array<i32>} : memref<1x100x512xf32, #tpu.memory_space<vmem>>, vector<1x4x128xf32>,
    %c0_356 = arith.constant 0 : index
    %c0_357 = arith.constant 0 : index
    %c17 = arith.constant 17 : index
    %172 = vector.load %arg3[%c0_356, %c0_357, %c17] : memref<1x4x256xf32, #tpu.memory_space<vmem>>, vector<1x4x128xf32>
    %c0_358 = arith.constant 0 : index
    %c44_359 = arith.constant 44 : index
    %c0_360 = arith.constant 0 : index
    %173 = vector.load %arg10[%c0_358, %c44_359, %c0_360] : memref<1x100x512xf32, #tpu.memory_space<vmem>>, vector<1x4x128xf32>
    tpu.vector_store %arg10[%c0_358, %c44_359, %c0_360], %172 {strides = array<i32>} : memref<1x100x512xf32, #tpu.memory_space<vmem>>, vector<1x4x128xf32>,
    %c0_361 = arith.constant 0 : index
    %c0_362 = arith.constant 0 : index
    %c18 = arith.constant 18 : index
    %174 = vector.load %arg3[%c0_361, %c0_362, %c18] : memref<1x4x256xf32, #tpu.memory_space<vmem>>, vector<1x4x128xf32>
    %c0_363 = arith.constant 0 : index
    %c48_364 = arith.constant 48 : index
    %c0_365 = arith.constant 0 : index
    %175 = vector.load %arg10[%c0_363, %c48_364, %c0_365] : memref<1x100x512xf32, #tpu.memory_space<vmem>>, vector<1x4x128xf32>
    tpu.vector_store %arg10[%c0_363, %c48_364, %c0_365], %174 {strides = array<i32>} : memref<1x100x512xf32, #tpu.memory_space<vmem>>, vector<1x4x128xf32>,
    %c0_366 = arith.constant 0 : index
    %c0_367 = arith.constant 0 : index
    %c19 = arith.constant 19 : index
    %176 = vector.load %arg3[%c0_366, %c0_367, %c19] : memref<1x4x256xf32, #tpu.memory_space<vmem>>, vector<1x4x128xf32>
    %c0_368 = arith.constant 0 : index
    %c52_369 = arith.constant 52 : index
    %c0_370 = arith.constant 0 : index
    %177 = vector.load %arg10[%c0_368, %c52_369, %c0_370] : memref<1x100x512xf32, #tpu.memory_space<vmem>>, vector<1x4x128xf32>
    tpu.vector_store %arg10[%c0_368, %c52_369, %c0_370], %176 {strides = array<i32>} : memref<1x100x512xf32, #tpu.memory_space<vmem>>, vector<1x4x128xf32>,
    %c0_371 = arith.constant 0 : index
    %c0_372 = arith.constant 0 : index
    %c20_373 = arith.constant 20 : index
    %178 = vector.load %arg3[%c0_371, %c0_372, %c20_373] : memref<1x4x256xf32, #tpu.memory_space<vmem>>, vector<1x4x128xf32>
    %c0_374 = arith.constant 0 : index
    %c56_375 = arith.constant 56 : index
    %c0_376 = arith.constant 0 : index
    %179 = vector.load %arg10[%c0_374, %c56_375, %c0_376] : memref<1x100x512xf32, #tpu.memory_space<vmem>>, vector<1x4x128xf32>
    tpu.vector_store %arg10[%c0_374, %c56_375, %c0_376], %178 {strides = array<i32>} : memref<1x100x512xf32, #tpu.memory_space<vmem>>, vector<1x4x128xf32>,
    %c0_377 = arith.constant 0 : index
    %c0_378 = arith.constant 0 : index
    %c24_379 = arith.constant 24 : index
    %180 = vector.load %arg3[%c0_377, %c0_378, %c24_379] : memref<1x4x256xf32, #tpu.memory_space<vmem>>, vector<1x4x128xf32>
    %c0_380 = arith.constant 0 : index
    %c60_381 = arith.constant 60 : index
    %c0_382 = arith.constant 0 : index
    %181 = vector.load %arg10[%c0_380, %c60_381, %c0_382] : memref<1x100x512xf32, #tpu.memory_space<vmem>>, vector<1x4x128xf32>
    tpu.vector_store %arg10[%c0_380, %c60_381, %c0_382], %180 {strides = array<i32>} : memref<1x100x512xf32, #tpu.memory_space<vmem>>, vector<1x4x128xf32>,
    %c0_383 = arith.constant 0 : index
    %c0_384 = arith.constant 0 : index
    %c25_385 = arith.constant 25 : index
    %182 = vector.load %arg3[%c0_383, %c0_384, %c25_385] : memref<1x4x256xf32, #tpu.memory_space<vmem>>, vector<1x4x128xf32>
    %c0_386 = arith.constant 0 : index
    %c64_387 = arith.constant 64 : index
    %c0_388 = arith.constant 0 : index
    %183 = vector.load %arg10[%c0_386, %c64_387, %c0_388] : memref<1x100x512xf32, #tpu.memory_space<vmem>>, vector<1x4x128xf32>
    tpu.vector_store %arg10[%c0_386, %c64_387, %c0_388], %182 {strides = array<i32>} : memref<1x100x512xf32, #tpu.memory_space<vmem>>, vector<1x4x128xf32>,
    %c0_389 = arith.constant 0 : index
    %c0_390 = arith.constant 0 : index
    %c26_391 = arith.constant 26 : index
    %184 = vector.load %arg3[%c0_389, %c0_390, %c26_391] : memref<1x4x256xf32, #tpu.memory_space<vmem>>, vector<1x4x128xf32>
    %c0_392 = arith.constant 0 : index
    %c68_393 = arith.constant 68 : index
    %c0_394 = arith.constant 0 : index
    %185 = vector.load %arg10[%c0_392, %c68_393, %c0_394] : memref<1x100x512xf32, #tpu.memory_space<vmem>>, vector<1x4x128xf32>
    tpu.vector_store %arg10[%c0_392, %c68_393, %c0_394], %184 {strides = array<i32>} : memref<1x100x512xf32, #tpu.memory_space<vmem>>, vector<1x4x128xf32>,
    %c0_395 = arith.constant 0 : index
    %c0_396 = arith.constant 0 : index
    %c27_397 = arith.constant 27 : index
    %186 = vector.load %arg3[%c0_395, %c0_396, %c27_397] : memref<1x4x256xf32, #tpu.memory_space<vmem>>, vector<1x4x128xf32>
    %c0_398 = arith.constant 0 : index
    %c72_399 = arith.constant 72 : index
    %c0_400 = arith.constant 0 : index
    %187 = vector.load %arg10[%c0_398, %c72_399, %c0_400] : memref<1x100x512xf32, #tpu.memory_space<vmem>>, vector<1x4x128xf32>
    tpu.vector_store %arg10[%c0_398, %c72_399, %c0_400], %186 {strides = array<i32>} : memref<1x100x512xf32, #tpu.memory_space<vmem>>, vector<1x4x128xf32>,
    %c0_401 = arith.constant 0 : index
    %c0_402 = arith.constant 0 : index
    %c28_403 = arith.constant 28 : index
    %188 = vector.load %arg3[%c0_401, %c0_402, %c28_403] : memref<1x4x256xf32, #tpu.memory_space<vmem>>, vector<1x4x128xf32>
    %c0_404 = arith.constant 0 : index
    %c76_405 = arith.constant 76 : index
    %c0_406 = arith.constant 0 : index
    %189 = vector.load %arg10[%c0_404, %c76_405, %c0_406] : memref<1x100x512xf32, #tpu.memory_space<vmem>>, vector<1x4x128xf32>
    tpu.vector_store %arg10[%c0_404, %c76_405, %c0_406], %188 {strides = array<i32>} : memref<1x100x512xf32, #tpu.memory_space<vmem>>, vector<1x4x128xf32>,
    %c0_407 = arith.constant 0 : index
    %c0_408 = arith.constant 0 : index
    %c32_409 = arith.constant 32 : index
    %190 = vector.load %arg3[%c0_407, %c0_408, %c32_409] : memref<1x4x256xf32, #tpu.memory_space<vmem>>, vector<1x4x128xf32>
    %c0_410 = arith.constant 0 : index
    %c80_411 = arith.constant 80 : index
    %c0_412 = arith.constant 0 : index
    %191 = vector.load %arg10[%c0_410, %c80_411, %c0_412] : memref<1x100x512xf32, #tpu.memory_space<vmem>>, vector<1x4x128xf32>
    tpu.vector_store %arg10[%c0_410, %c80_411, %c0_412], %190 {strides = array<i32>} : memref<1x100x512xf32, #tpu.memory_space<vmem>>, vector<1x4x128xf32>,
    %c0_413 = arith.constant 0 : index
    %c0_414 = arith.constant 0 : index
    %c33 = arith.constant 33 : index
    %192 = vector.load %arg3[%c0_413, %c0_414, %c33] : memref<1x4x256xf32, #tpu.memory_space<vmem>>, vector<1x4x128xf32>
    %c0_415 = arith.constant 0 : index
    %c84_416 = arith.constant 84 : index
    %c0_417 = arith.constant 0 : index
    %193 = vector.load %arg10[%c0_415, %c84_416, %c0_417] : memref<1x100x512xf32, #tpu.memory_space<vmem>>, vector<1x4x128xf32>
    tpu.vector_store %arg10[%c0_415, %c84_416, %c0_417], %192 {strides = array<i32>} : memref<1x100x512xf32, #tpu.memory_space<vmem>>, vector<1x4x128xf32>,
    %c0_418 = arith.constant 0 : index
    %c0_419 = arith.constant 0 : index
    %c34 = arith.constant 34 : index
    %194 = vector.load %arg3[%c0_418, %c0_419, %c34] : memref<1x4x256xf32, #tpu.memory_space<vmem>>, vector<1x4x128xf32>
    %c0_420 = arith.constant 0 : index
    %c88_421 = arith.constant 88 : index
    %c0_422 = arith.constant 0 : index
    %195 = vector.load %arg10[%c0_420, %c88_421, %c0_422] : memref<1x100x512xf32, #tpu.memory_space<vmem>>, vector<1x4x128xf32>
    tpu.vector_store %arg10[%c0_420, %c88_421, %c0_422], %194 {strides = array<i32>} : memref<1x100x512xf32, #tpu.memory_space<vmem>>, vector<1x4x128xf32>,
    %c0_423 = arith.constant 0 : index
    %c0_424 = arith.constant 0 : index
    %c35 = arith.constant 35 : index
    %196 = vector.load %arg3[%c0_423, %c0_424, %c35] : memref<1x4x256xf32, #tpu.memory_space<vmem>>, vector<1x4x128xf32>
    %c0_425 = arith.constant 0 : index
    %c92_426 = arith.constant 92 : index
    %c0_427 = arith.constant 0 : index
    %197 = vector.load %arg10[%c0_425, %c92_426, %c0_427] : memref<1x100x512xf32, #tpu.memory_space<vmem>>, vector<1x4x128xf32>
    tpu.vector_store %arg10[%c0_425, %c92_426, %c0_427], %196 {strides = array<i32>} : memref<1x100x512xf32, #tpu.memory_space<vmem>>, vector<1x4x128xf32>,
    %c0_428 = arith.constant 0 : index
    %c0_429 = arith.constant 0 : index
    %c36_430 = arith.constant 36 : index
    %198 = vector.load %arg3[%c0_428, %c0_429, %c36_430] : memref<1x4x256xf32, #tpu.memory_space<vmem>>, vector<1x4x128xf32>
    %c0_431 = arith.constant 0 : index
    %c96_432 = arith.constant 96 : index
    %c0_433 = arith.constant 0 : index
    %199 = vector.load %arg10[%c0_431, %c96_432, %c0_433] : memref<1x100x512xf32, #tpu.memory_space<vmem>>, vector<1x4x128xf32>
    tpu.vector_store %arg10[%c0_431, %c96_432, %c0_433], %198 {strides = array<i32>} : memref<1x100x512xf32, #tpu.memory_space<vmem>>, vector<1x4x128xf32>,
    %c2_434 = arith.constant 2 : index
    %c0_435 = arith.constant 0 : index
    %c0_436 = arith.constant 0 : index
    %200 = vector.load %arg4[%c2_434, %c0_435, %c0_436] : memref<3x8x100xf32, #tpu.memory_space<vmem>>, vector<1x8x100xf32>
    %201 = vector.shape_cast %200 : vector<1x8x100xf32> to vector<8x100xf32>
    %c0_437 = arith.constant 0 : index
    %c0_438 = arith.constant 0 : index
    %c0_439 = arith.constant 0 : index
    %202 = vector.load %arg10[%c0_437, %c0_438, %c0_439] : memref<1x100x512xf32, #tpu.memory_space<vmem>>, vector<1x100x128xf32>
    %203 = vector.shape_cast %202 : vector<1x100x128xf32> to vector<100x128xf32>
    %cst_440 = arith.constant dense<0.000000e+00> : vector<8x128xf32>
    %204 = tpu.matmul %201, %203, %cst_440 {dimension_numbers = #tpu.dot_dimension_numbers<[1], [0], [0], [1], [0, 0, 1, 1], [], []>} : vector<8x100xf32>, vector<100x128xf32>, vector<8x128xf32> -> vector<8x128xf32>
    %c0_441 = arith.constant 0 : index
    %c0_442 = arith.constant 0 : index
    %205 = vector.load %arg11[%c0_441, %c0_442] : memref<8x512xf32, #tpu.memory_space<vmem>>, vector<8x128xf32>
    tpu.vector_store %arg11[%c0_441, %c0_442], %204 {strides = array<i32>} : memref<8x512xf32, #tpu.memory_space<vmem>>, vector<8x128xf32>,
    %c0_443 = arith.constant 0 : index
    %c0_444 = arith.constant 0 : index
    %206 = vector.load %arg11[%c0_443, %c0_444] : memref<8x512xf32, #tpu.memory_space<vmem>>, vector<8x128xf32>
    %c2_445 = arith.constant 2 : index
    %c0_446 = arith.constant 0 : index
    %c0_447 = arith.constant 0 : index
    %207 = vector.load %arg5[%c2_445, %c0_446, %c0_447] : memref<3x8x1xf32, #tpu.memory_space<vmem>>, vector<1x8x1xf32>
    %208 = vector.shape_cast %207 : vector<1x8x1xf32> to vector<8x1xf32>
    %209 = vector.broadcast %208 : vector<8x1xf32> to vector<8x128xf32>
    %210 = arith.addf %206, %209 : vector<8x128xf32>
    %cst_448 = arith.constant 0.000000e+00 : f32
    %211 = vector.broadcast %cst_448 : f32 to vector<8x128xf32>
    %212 = arith.maximumf %210, %211 : vector<8x128xf32>
    %213 = math.absf %210 : vector<8x128xf32>
    %cst_449 = arith.constant 0.000000e+00 : f32
    %214 = vector.broadcast %cst_449 : f32 to vector<8x128xf32>
    %215 = arith.subf %214, %213 : vector<8x128xf32>
    %216 = math.exp %215 : vector<8x128xf32>
    %cst_450 = arith.constant 1.000000e+00 : f32
    %217 = vector.broadcast %cst_450 : f32 to vector<8x128xf32>
    %218 = arith.addf %217, %216 : vector<8x128xf32>
    %219 = math.log %218 : vector<8x128xf32>
    %220 = arith.addf %212, %219 : vector<8x128xf32>
    %c0_451 = arith.constant 0 : index
    %c0_452 = arith.constant 0 : index
    %221 = vector.load %arg8[%c0_451, %c0_452] : memref<128x256xf32, #tpu.memory_space<vmem>>, vector<128x256xf32>
    %cst_453 = arith.constant dense<0.000000e+00> : vector<8x256xf32>
    %222 = tpu.matmul %220, %221, %cst_453 {dimension_numbers = #tpu.dot_dimension_numbers<[1], [0], [0], [1], [0, 0, 1, 1], [], []>} : vector<8x128xf32>, vector<128x256xf32>, vector<8x256xf32> -> vector<8x256xf32>
    %c0_454 = arith.constant 0 : index
    %c0_455 = arith.constant 0 : index
    %223 = vector.load %arg9[%c0_454, %c0_455] : memref<8x256xf32, #tpu.memory_space<vmem>>, vector<8x256xf32>
    %224 = arith.addf %223, %222 : vector<8x256xf32>
    %c0_456 = arith.constant 0 : index
    %c0_457 = arith.constant 0 : index
    %225 = vector.load %arg9[%c0_456, %c0_457] : memref<8x256xf32, #tpu.memory_space<vmem>>, vector<8x256xf32>
    tpu.vector_store %arg9[%c0_456, %c0_457], %224 {strides = array<i32>} : memref<8x256xf32, #tpu.memory_space<vmem>>, vector<8x256xf32>,
    return
  }
  func.func @transform_0(%arg0: i32) -> (i32, i32, i32) {
    %c0_i32 = arith.constant 0 : i32
    %c0_i32_0 = arith.constant 0 : i32
    %c0_i32_1 = arith.constant 0 : i32
    return %arg0, %c0_i32, %c0_i32_0 : i32, i32, i32
  }
  func.func @transform_1(%arg0: i32) -> (i32, i32, i32) {
    %c0_i32 = arith.constant 0 : i32
    %c0_i32_0 = arith.constant 0 : i32
    %c0_i32_1 = arith.constant 0 : i32
    return %arg0, %c0_i32, %c0_i32_0 : i32, i32, i32
  }
  func.func @transform_2(%arg0: i32) -> (i32, i32, i32) {
    %c0_i32 = arith.constant 0 : i32
    %c0_i32_0 = arith.constant 0 : i32
    %c0_i32_1 = arith.constant 0 : i32
    return %arg0, %c0_i32, %c0_i32_0 : i32, i32, i32
  }
  func.func @transform_3(%arg0: i32) -> (i32, i32, i32) {
    %c0_i32 = arith.constant 0 : i32
    %c0_i32_0 = arith.constant 0 : i32
    %c0_i32_1 = arith.constant 0 : i32
    %c0_i32_2 = arith.constant 0 : i32
    return %c0_i32, %c0_i32_0, %c0_i32_1 : i32, i32, i32
  }
  func.func @transform_4(%arg0: i32) -> (i32, i32, i32) {
    %c0_i32 = arith.constant 0 : i32
    %c0_i32_0 = arith.constant 0 : i32
    %c0_i32_1 = arith.constant 0 : i32
    %c0_i32_2 = arith.constant 0 : i32
    return %c0_i32, %c0_i32_0, %c0_i32_1 : i32, i32, i32
  }
  func.func @transform_5(%arg0: i32) -> (i32, i32) {
    %c0_i32 = arith.constant 0 : i32
    %c0_i32_0 = arith.constant 0 : i32
    %c0_i32_1 = arith.constant 0 : i32
    return %c0_i32, %c0_i32_0 : i32, i32
  }
  func.func @transform_6(%arg0: i32) -> (i32, i32) {
    %c0_i32 = arith.constant 0 : i32
    %c0_i32_0 = arith.constant 0 : i32
    %c0_i32_1 = arith.constant 0 : i32
    return %c0_i32, %c0_i32_0 : i32, i32
  }
  func.func @transform_7(%arg0: i32) -> (i32, i32) {
    %c0_i32 = arith.constant 0 : i32
    %c0_i32_0 = arith.constant 0 : i32
    %c0_i32_1 = arith.constant 0 : i32
    return %c0_i32, %c0_i32_0 : i32, i32
  }
  func.func @transform_8(%arg0: i32) -> (i32, i32) {
    %c0_i32 = arith.constant 0 : i32
    %c0_i32_0 = arith.constant 0 : i32
    return %arg0, %c0_i32 : i32, i32
  }
}

</mosaic_0001>

<llo_original>
// kernel: multiscale_convolution_forward.1
$region0: #{multiscale_convolution_forward.1}
  #allocation0 [shape = 'u32[]', space=smem, size = 0x4, offset = 0x4, fixed_abs, tag = 'smem constant byte address 0x4 - core index']
  #allocation1 [shape = 'u32[144,128]{1,0:T(1,128)}', space=vmem, size = 0x12000, scoped, tag = 'internal scratch']
  #allocation2 [shape = 'f32[1,100,512]{2,1,0:T(8,128)}', space=vmem, size = 0x34000, scoped, tag = 'scratch operand']
  #allocation3 [shape = 'f32[8,512]{1,0:T(8,128)}', space=vmem, size = 0x4000, scoped, tag = 'scratch operand']
  %s0 = inlined_call_operand.vmem [shape: f32[2,4,640], index: 0, kind: input, shape index: {}]
  %s1 = inlined_call_operand.vmem [shape: f32[2,4,384], index: 1, kind: input, shape index: {}]
  %s2 = inlined_call_operand.vmem [shape: f32[2,4,256], index: 2, kind: input, shape index: {}]
  %s3 = inlined_call_operand.vmem [shape: f32[3,8,100], index: 3, kind: input, shape index: {}]
  %s4 = inlined_call_operand.vmem [shape: f32[3,8,1], index: 4, kind: input, shape index: {}]
  %s5 = inlined_call_operand.vmem [shape: f32[512,256], index: 5, kind: input, shape index: {}]
  %s6 = inlined_call_operand.vmem [shape: f32[256,256], index: 6, kind: input, shape index: {}]
  %s7 = inlined_call_operand.vmem [shape: f32[128,256], index: 7, kind: input, shape index: {}]
  %s8 = inlined_call_operand.vmem [shape: f32[16,256], index: 8, kind: output, shape index: {}]
  %s9 = sld [smem:[#allocation0]]
  $region65: #{multiscale_convolution_forward.1} parent=0
    _
  %s11 = ssub.s32 1, %s9
  %s12 = scalar_select 0, %s11, %s9
  loop: start=0, step=1, limit=4
  $region2: #{multiscale_convolution_forward.1} parent=0 // loop_pre_header
    _
  $region3: #{multiscale_convolution_forward.1} parent=0 // loop_header
    %s14 = sphi 0, %s18
    %p15 = scmp.ge.s32.totalorder %s14, 4
    %s24 = sphi 0, %s26
    %s27 = sphi 0, %s24
    %s28 = sphi 0, %s27
    %s44 = sphi 0, %s28
    %s50 = sphi 0, %s52
    %s53 = sphi 0, %s50
    %s54 = sphi 0, %s53
    %s70 = sphi 0, %s54
    %s76 = sphi 0, %s78
    %s79 = sphi 0, %s76
    %s80 = sphi 0, %s79
    %s96 = sphi 0, %s80
    %s100 = sphi 0, %s100
    %s102 = sphi 0, %s100
    %s103 = sphi 0, %s102
    %s117 = sphi 0, %s103
    %s121 = sphi 0, %s121
    %s123 = sphi 0, %s121
    %s124 = sphi 0, %s123
    %s138 = sphi 0, %s124
    %s142 = sphi 0, %s142
    %s144 = sphi 0, %s142
    %s145 = sphi 0, %s144
    %s159 = sphi 0, %s145
    %s163 = sphi 0, %s163
    %s165 = sphi 0, %s163
    %s166 = sphi 0, %s165
    %s180 = sphi 0, %s166
    %s184 = sphi 0, %s184
    %s186 = sphi 0, %s184
    %s187 = sphi 0, %s186
    %s201 = sphi 0, %s187
    %s207 = sphi 0, %s209
    %s210 = sphi 0, %s207
    %s211 = sphi 0, %s210
    %s227 = sphi 0, %s211
  $region4: #{multiscale_convolution_forward.1} parent=0 // loop_header_branch
    %17 = sbr.rel (%p15) target = $region8
  $region5: #{multiscale_convolution_forward.1} parent=0 // loop_body
    %s19 = ssub.s32 %s14, 1
    %s20 = ssub.s32 %s14, 2
    %s21 = sadd.s32 %s14, 1
    %s22 = ssub.s32 %s14, %s21
    %p23 = scmp.eq.s32.totalorder %s22, 0
    %s25 = sadd.s32 %s24, 1
    %s26 = scalar_select %p23, %s24, %s25
    %p29 = pneg %p23
    %p30 = scmp.eq.s32.totalorder %s14, 1
    %p31 = por %p29, %p30
    %p32 = scmp.ne.s32.totalorder %s24, %s27
    %p33 = scmp.eq.s32.totalorder %s14, 0
    %p34 = por %p32, %p33
    %p35 = scmp.ne.s32.totalorder %s24, %s27
    %p36 = scmp.eq.s32.totalorder %s19, 1
    %p37 = por %p35, %p36
    %p38 = scmp.ne.s32.totalorder %s27, %s28
    %p39 = scmp.eq.s32.totalorder %s19, 0
    %p40 = por %p38, %p39
    %p41 = scmp.ne.s32.totalorder %s27, %s28
    %p42 = scmp.eq.s32.totalorder %s20, 1
    %p43 = por %p41, %p42
    %p45 = scmp.ne.s32.totalorder %s28, %s44
    %p46 = scmp.eq.s32.totalorder %s20, 0
    %p47 = por %p45, %p46
    %s48 = ssub.s32 %s14, %s21
    %p49 = scmp.eq.s32.totalorder %s48, 0
    %s51 = sadd.s32 %s50, 1
    %s52 = scalar_select %p49, %s50, %s51
    %p55 = pneg %p49
    %p56 = scmp.eq.s32.totalorder %s14, 1
    %p57 = por %p55, %p56
    %p58 = scmp.ne.s32.totalorder %s50, %s53
    %p59 = scmp.eq.s32.totalorder %s14, 0
    %p60 = por %p58, %p59
    %p61 = scmp.ne.s32.totalorder %s50, %s53
    %p62 = scmp.eq.s32.totalorder %s19, 1
    %p63 = por %p61, %p62
    %p64 = scmp.ne.s32.totalorder %s53, %s54
    %p65 = scmp.eq.s32.totalorder %s19, 0
    %p66 = por %p64, %p65
    %p67 = scmp.ne.s32.totalorder %s53, %s54
    %p68 = scmp.eq.s32.totalorder %s20, 1
    %p69 = por %p67, %p68
    %p71 = scmp.ne.s32.totalorder %s54, %s70
    %p72 = scmp.eq.s32.totalorder %s20, 0
    %p73 = por %p71, %p72
    %s74 = ssub.s32 %s14, %s21
    %p75 = scmp.eq.s32.totalorder %s74, 0
    %s77 = sadd.s32 %s76, 1
    %s78 = scalar_select %p75, %s76, %s77
    %p81 = pneg %p75
    %p82 = scmp.eq.s32.totalorder %s14, 1
    %p83 = por %p81, %p82
    %p84 = scmp.ne.s32.totalorder %s76, %s79
    %p85 = scmp.eq.s32.totalorder %s14, 0
    %p86 = por %p84, %p85
    %p87 = scmp.ne.s32.totalorder %s76, %s79
    %p88 = scmp.eq.s32.totalorder %s19, 1
    %p89 = por %p87, %p88
    %p90 = scmp.ne.s32.totalorder %s79, %s80
    %p91 = scmp.eq.s32.totalorder %s19, 0
    %p92 = por %p90, %p91
    %p93 = scmp.ne.s32.totalorder %s79, %s80
    %p94 = scmp.eq.s32.totalorder %s20, 1
    %p95 = por %p93, %p94
    %p97 = scmp.ne.s32.totalorder %s80, %s96
    %p98 = scmp.eq.s32.totalorder %s20, 0
    %p99 = por %p97, %p98
    %s101 = sadd.s32 %s100, 1
    %p104 = scmp.eq.s32.totalorder %s14, 1
    %p105 = scmp.ne.s32.totalorder %s100, %s102
    %p106 = scmp.eq.s32.totalorder %s14, 0
    %p107 = por %p105, %p106
    %p108 = scmp.ne.s32.totalorder %s100, %s102
    %p109 = scmp.eq.s32.totalorder %s19, 1
    %p110 = por %p108, %p109
    %p111 = scmp.ne.s32.totalorder %s102, %s103
    %p112 = scmp.eq.s32.totalorder %s19, 0
    %p113 = por %p111, %p112
    %p114 = scmp.ne.s32.totalorder %s102, %s103
    %p115 = scmp.eq.s32.totalorder %s20, 1
    %p116 = por %p114, %p115
    %p118 = scmp.ne.s32.totalorder %s103, %s117
    %p119 = scmp.eq.s32.totalorder %s20, 0
    %p120 = por %p118, %p119
    %s122 = sadd.s32 %s121, 1
    %p125 = scmp.eq.s32.totalorder %s14, 1
    %p126 = scmp.ne.s32.totalorder %s121, %s123
    %p127 = scmp.eq.s32.totalorder %s14, 0
    %p128 = por %p126, %p127
    %p129 = scmp.ne.s32.totalorder %s121, %s123
    %p130 = scmp.eq.s32.totalorder %s19, 1
    %p131 = por %p129, %p130
    %p132 = scmp.ne.s32.totalorder %s123, %s124
    %p133 = scmp.eq.s32.totalorder %s19, 0
    %p134 = por %p132, %p133
    %p135 = scmp.ne.s32.totalorder %s123, %s124
    %p136 = scmp.eq.s32.totalorder %s20, 1
    %p137 = por %p135, %p136
    %p139 = scmp.ne.s32.totalorder %s124, %s138
    %p140 = scmp.eq.s32.totalorder %s20, 0
    %p141 = por %p139, %p140
    %s143 = sadd.s32 %s142, 1
    %p146 = scmp.eq.s32.totalorder %s14, 1
    %p147 = scmp.ne.s32.totalorder %s142, %s144
    %p148 = scmp.eq.s32.totalorder %s14, 0
    %p149 = por %p147, %p148
    %p150 = scmp.ne.s32.totalorder %s142, %s144
    %p151 = scmp.eq.s32.totalorder %s19, 1
    %p152 = por %p150, %p151
    %p153 = scmp.ne.s32.totalorder %s144, %s145
    %p154 = scmp.eq.s32.totalorder %s19, 0
    %p155 = por %p153, %p154
    %p156 = scmp.ne.s32.totalorder %s144, %s145
    %p157 = scmp.eq.s32.totalorder %s20, 1
    %p158 = por %p156, %p157
    %p160 = scmp.ne.s32.totalorder %s145, %s159
    %p161 = scmp.eq.s32.totalorder %s20, 0
    %p162 = por %p160, %p161
    %s164 = sadd.s32 %s163, 1
    %p167 = scmp.eq.s32.totalorder %s14, 1
    %p168 = scmp.ne.s32.totalorder %s163, %s165
    %p169 = scmp.eq.s32.totalorder %s14, 0
    %p170 = por %p168, %p169
    %p171 = scmp.ne.s32.totalorder %s163, %s165
    %p172 = scmp.eq.s32.totalorder %s19, 1
    %p173 = por %p171, %p172
    %p174 = scmp.ne.s32.totalorder %s165, %s166
    %p175 = scmp.eq.s32.totalorder %s19, 0
    %p176 = por %p174, %p175
    %p177 = scmp.ne.s32.totalorder %s165, %s166
    %p178 = scmp.eq.s32.totalorder %s20, 1
    %p179 = por %p177, %p178
    %p181 = scmp.ne.s32.totalorder %s166, %s180
    %p182 = scmp.eq.s32.totalorder %s20, 0
    %p183 = por %p181, %p182
    %s185 = sadd.s32 %s184, 1
    %p188 = scmp.eq.s32.totalorder %s14, 1
    %p189 = scmp.ne.s32.totalorder %s184, %s186
    %p190 = scmp.eq.s32.totalorder %s14, 0
    %p191 = por %p189, %p190
    %p192 = scmp.ne.s32.totalorder %s184, %s186
    %p193 = scmp.eq.s32.totalorder %s19, 1
    %p194 = por %p192, %p193
    %p195 = scmp.ne.s32.totalorder %s186, %s187
    %p196 = scmp.eq.s32.totalorder %s19, 0
    %p197 = por %p195, %p196
    %p198 = scmp.ne.s32.totalorder %s186, %s187
    %p199 = scmp.eq.s32.totalorder %s20, 1
    %p200 = por %p198, %p199
    %p202 = scmp.ne.s32.totalorder %s187, %s201
    %p203 = scmp.eq.s32.totalorder %s20, 0
    %p204 = por %p202, %p203
    %s205 = ssub.s32 %s14, %s21
    %p206 = scmp.eq.s32.totalorder %s205, 0
    %s208 = sadd.s32 %s207, 1
    %s209 = scalar_select %p206, %s207, %s208
    %p212 = pneg %p206
    %p213 = scmp.eq.s32.totalorder %s14, 1
    %p214 = por %p212, %p213
    %p215 = scmp.ne.s32.totalorder %s207, %s210
    %p216 = scmp.eq.s32.totalorder %s14, 0
    %p217 = por %p215, %p216
    %p218 = scmp.ne.s32.totalorder %s207, %s210
    %p219 = scmp.eq.s32.totalorder %s19, 1
    %p220 = por %p218, %p219
    %p221 = scmp.ne.s32.totalorder %s210, %s211
    %p222 = scmp.eq.s32.totalorder %s19, 0
    %p223 = por %p221, %p222
    %p224 = scmp.ne.s32.totalorder %s210, %s211
    %p225 = scmp.eq.s32.totalorder %s20, 1
    %p226 = por %p224, %p225
    %p228 = scmp.ne.s32.totalorder %s211, %s227
    %p229 = scmp.eq.s32.totalorder %s20, 0
    %p230 = por %p228, %p229
    %p231 = scmp.le.s32.totalorder 1, %s14
    %p232 = scmp.lt.s32.totalorder %s14, 3
    %p233 = pnand %p231, %p232
    %p234 = pneg %p233
    // Predicated region
    $region9: #{multiscale_convolution_forward.1} parent=5 // pred_check
      _
    $region10: #{multiscale_convolution_forward.1} parent=5 // pred_check_branch
      %236 = sbr.rel (%p233) target = $region12
    $region11: #{multiscale_convolution_forward.1} parent=5 // pred_region
      %s237 = ssub.s32 %s14, 1
      // Predicated region
      $region13: #{multiscale_convolution_forward.1} parent=11 // pred_check
        %p238 = pneg %p113
      $region14: #{multiscale_convolution_forward.1} parent=11 // pred_check_branch
        %240 = sbr.rel (%p238) target = $region16
      $region15: #{multiscale_convolution_forward.1} parent=11 // pred_region
        _
      $region16: #{multiscale_convolution_forward.1} parent=11 // pred_fallthru
        _
      // Predicated region
      $region17: #{multiscale_convolution_forward.1} parent=11 // pred_check
        %p241 = pneg %p134
      $region18: #{multiscale_convolution_forward.1} parent=11 // pred_check_branch
        %243 = sbr.rel (%p241) target = $region20
      $region19: #{multiscale_convolution_forward.1} parent=11 // pred_region
        _
      $region20: #{multiscale_convolution_forward.1} parent=11 // pred_fallthru
        _
      // Predicated region
      $region21: #{multiscale_convolution_forward.1} parent=11 // pred_check
        %p244 = pneg %p155
      $region22: #{multiscale_convolution_forward.1} parent=11 // pred_check_branch
        %246 = sbr.rel (%p244) target = $region24
      $region23: #{multiscale_convolution_forward.1} parent=11 // pred_region
        _
      $region24: #{multiscale_convolution_forward.1} parent=11 // pred_fallthru
        _
      // Predicated region
      $region25: #{multiscale_convolution_forward.1} parent=11 // pred_check
        %p247 = pneg %p176
      $region26: #{multiscale_convolution_forward.1} parent=11 // pred_check_branch
        %249 = sbr.rel (%p247) target = $region28
      $region27: #{multiscale_convolution_forward.1} parent=11 // pred_region
        _
      $region28: #{multiscale_convolution_forward.1} parent=11 // pred_fallthru
        _
      // Predicated region
      $region29: #{multiscale_convolution_forward.1} parent=11 // pred_check
        %p250 = pneg %p197
      $region30: #{multiscale_convolution_forward.1} parent=11 // pred_check_branch
        %252 = sbr.rel (%p250) target = $region32
      $region31: #{multiscale_convolution_forward.1} parent=11 // pred_region
        _
      $region32: #{multiscale_convolution_forward.1} parent=11 // pred_fallthru
        _
    $region12: #{multiscale_convolution_forward.1} parent=5 // pred_fallthru
      _
    %p253 = scmp.lt.s32.totalorder %s14, 2
    // Predicated region
    $region33: #{multiscale_convolution_forward.1} parent=5 // pred_check
      %p254 = pneg %p253
    $region34: #{multiscale_convolution_forward.1} parent=5 // pred_check_branch
      %256 = sbr.rel (%p254) target = $region36
    $region35: #{multiscale_convolution_forward.1} parent=5 // pred_region
      // Predicated region
      $region37: #{multiscale_convolution_forward.1} parent=35 // pred_check
        %p257 = pneg %p34
      $region38: #{multiscale_convolution_forward.1} parent=35 // pred_check_branch
        %259 = sbr.rel (%p257) target = $region40
      $region39: #{multiscale_convolution_forward.1} parent=35 // pred_region
        %p260 = scmp.lt.s32.totalorder %s14, 1
        %s261 = scalar_select %p260, %s14, 1
        %s262 = smul.addr %s261, 5
        %s263 = smul.addr %s262, 4
        %s264 = scalar_lea.vmem %s0, %s263
      $region40: #{multiscale_convolution_forward.1} parent=35 // pred_fallthru
        _
      // Predicated region
      $region41: #{multiscale_convolution_forward.1} parent=35 // pred_check
        %p265 = pneg %p60
      $region42: #{multiscale_convolution_forward.1} parent=35 // pred_check_branch
        %267 = sbr.rel (%p265) target = $region44
      $region43: #{multiscale_convolution_forward.1} parent=35 // pred_region
        %p268 = scmp.lt.s32.totalorder %s14, 1
        %s269 = scalar_select %p268, %s14, 1
        %s270 = smul.addr %s269, 3
        %s271 = smul.addr %s270, 4
        %s272 = scalar_lea.vmem %s1, %s271
      $region44: #{multiscale_convolution_forward.1} parent=35 // pred_fallthru
        _
      // Predicated region
      $region45: #{multiscale_convolution_forward.1} parent=35 // pred_check
        %p273 = pneg %p86
      $region46: #{multiscale_convolution_forward.1} parent=35 // pred_check_branch
        %275 = sbr.rel (%p273) target = $region48
      $region47: #{multiscale_convolution_forward.1} parent=35 // pred_region
        %p276 = scmp.lt.s32.totalorder %s14, 1
        %s277 = scalar_select %p276, %s14, 1
        %s278 = smul.addr %s277, 2
        %s279 = smul.addr %s278, 4
        %s280 = scalar_lea.vmem %s2, %s279
      $region48: #{multiscale_convolution_forward.1} parent=35 // pred_fallthru
        _
    $region36: #{multiscale_convolution_forward.1} parent=5 // pred_fallthru
      _
    %p281 = scmp.le.s32.totalorder 1, %s14
    %p282 = scmp.lt.s32.totalorder %s14, 3
    %p283 = pnand %p281, %p282
    %p284 = pneg %p283
    // Predicated region
    $region49: #{multiscale_convolution_forward.1} parent=5 // pred_check
      _
    $region50: #{multiscale_convolution_forward.1} parent=5 // pred_check_branch
      %286 = sbr.rel (%p283) target = $region52
    $region51: #{multiscale_convolution_forward.1} parent=5 // pred_region
      %s287 = ssub.s32 %s14, 1
      %p288 = scmp.lt.s32.totalorder %s19, 1
      %s289 = scalar_select %p288, %s19, 1
      %s290 = smul.addr %s289, 5
      %s291 = smul.addr %s290, 4
      %s292 = scalar_lea.vmem %s0, %s291
      %p293 = pneg %p40
      %p294 = pneg %p37
      %p295 = scmp.lt.s32.totalorder %s19, 1
      %s296 = scalar_select %p295, %s19, 1
      %s297 = smul.addr %s296, 3
      %s298 = smul.addr %s297, 4
      %s299 = scalar_lea.vmem %s1, %s298
      %p300 = pneg %p66
      %p301 = pneg %p63
      %p302 = scmp.lt.s32.totalorder %s19, 1
      %s303 = scalar_select %p302, %s19, 1
      %s304 = smul.addr %s303, 2
      %s305 = smul.addr %s304, 4
      %s306 = scalar_lea.vmem %s2, %s305
      %p307 = pneg %p92
      %p308 = pneg %p89
      %p309 = pneg %p113
      %p310 = pneg %p110
      %p311 = pneg %p134
      %p312 = pneg %p131
      %p313 = pneg %p155
      %p314 = pneg %p152
      %p315 = pneg %p176
      %p316 = pneg %p173
      %p317 = pneg %p197
      %p318 = pneg %p194
      %p319 = pneg %p223
      %p320 = pneg %p220
      %p321 = scmp.lt.s32.totalorder %s19, 1
      %s322 = scalar_select %p321, %s19, 1
      %s323 = smul.addr %s322, 2
      %s324 = smul.addr %s323, 8
      %s325 = scalar_lea.vmem %s8, %s324
      %p326 = scmp.lt.s32.totalorder %s19, 1
      %s327 = scalar_select %p326, %s19, 1
      %s328 = smul.addr %s327, 5
      %s329 = smul.addr %s328, 4
      %s330 = scalar_lea.vmem %s0, %s329
      %p331 = scmp.lt.s32.totalorder %s19, 1
      %s332 = scalar_select %p331, %s19, 1
      %s333 = smul.addr %s332, 3
      %s334 = smul.addr %s333, 4
      %s335 = scalar_lea.vmem %s1, %s334
      %p336 = scmp.lt.s32.totalorder %s19, 1
      %s337 = scalar_select %p336, %s19, 1
      %s338 = smul.addr %s337, 2
      %s339 = smul.addr %s338, 4
      %s340 = scalar_lea.vmem %s2, %s339
      %p341 = scmp.lt.s32.totalorder %s19, 1
      %s342 = scalar_select %p341, %s19, 1
      %s343 = smul.addr %s342, 2
      %s344 = smul.addr %s343, 8
      %s345 = scalar_lea.vmem %s8, %s344
      %v346 = vld [vmem:[%s330] sm:$0xff]
      %v347 = vld [vmem:[%s330 + $0x8] sm:$0xff]
      %v350 = vcombine.high %v346, %v346
      %v351 = vcombine.high %v347, %v347
      %354 = vst [vmem:[#allocation2] sm:$0xf] %v346
      %355 = vst [vmem:[#allocation2 + $0x8] sm:$0xf] %v350
      %356 = vst [vmem:[#allocation2 + $0x10] sm:$0xf] %v347
      %357 = vst [vmem:[#allocation2 + $0x18] sm:$0xf] %v351
      %v358 = vld [vmem:[%s330] sm:$0xff]
      %v359 = vld [vmem:[%s330 + $0x8] sm:$0xff]
      %v360 = vld [vmem:[%s330 + $0x10] sm:$0xf]
      %v364 = vcombine.low %v358, %v358
      %v365 = vcombine.low %v359, %v359
      %v366 = vcombine.low %v360, %v360
      %367 = vrot.lane.b32.xlu0 %v364, 127
      %v368 = vpop.permute.xlu0 %367
      %369 = vrot.lane.b32.xlu0 %v358, 127
      %v370 = vpop.permute.xlu0 %369
      %371 = vrot.lane.b32.xlu0 %v365, 127
      %v372 = vpop.permute.xlu0 %371
      %373 = vrot.lane.b32.xlu0 %v359, 127
      %v374 = vpop.permute.xlu0 %373
      %375 = vrot.lane.b32.xlu0 %v366, 127
      %v376 = vpop.permute.xlu0 %375
      %vm377 = vcmask 1039360
      %v378 = vsel %vm377, %v368, %v370
      %v379 = vsel %vm377, %v370, %v372
      %v380 = vsel %vm377, %v372, %v374
      %v381 = vsel %vm377, %v374, %v376
      %386 = vst [vmem:[#allocation2] sm:$0xf0] %v378
      %387 = vst [vmem:[#allocation2 + $0x8] sm:$0xf0] %v379
      %388 = vst [vmem:[#allocation2 + $0x10] sm:$0xf0] %v380
      %389 = vst [vmem:[#allocation2 + $0x18] sm:$0xf0] %v381
      %v390 = vld [vmem:[%s330] sm:$0xff]
      %v391 = vld [vmem:[%s330 + $0x8] sm:$0xff]
      %v392 = vld [vmem:[%s330 + $0x10] sm:$0xf]
      %v396 = vcombine.high %v390, %v390
      %v397 = vcombine.high %v391, %v391
      %398 = vrot.lane.b32.xlu0 %v390, 126
      %v399 = vpop.permute.xlu0 %398
      %400 = vrot.lane.b32.xlu0 %v396, 126
      %v401 = vpop.permute.xlu0 %400
      %402 = vrot.lane.b32.xlu0 %v391, 126
      %v403 = vpop.permute.xlu0 %402
      %404 = vrot.lane.b32.xlu0 %v397, 126
      %v405 = vpop.permute.xlu0 %404
      %406 = vrot.lane.b32.xlu0 %v392, 126
      %v407 = vpop.permute.xlu0 %406
      %vm408 = vcmask 1031168
      %v409 = vsel %vm408, %v399, %v401
      %v410 = vsel %vm408, %v401, %v403
      %v411 = vsel %vm408, %v403, %v405
      %v412 = vsel %vm408, %v405, %v407
      %417 = vst [vmem:[#allocation2 + $0x20] sm:$0xf] %v409
      %418 = vst [vmem:[#allocation2 + $0x28] sm:$0xf] %v410
      %419 = vst [vmem:[#allocation2 + $0x30] sm:$0xf] %v411
      %420 = vst [vmem:[#allocation2 + $0x38] sm:$0xf] %v412
      %v421 = vld [vmem:[%s330] sm:$0xff]
      %v422 = vld [vmem:[%s330 + $0x8] sm:$0xff]
      %v423 = vld [vmem:[%s330 + $0x10] sm:$0xf]
      %v427 = vcombine.low %v421, %v421
      %v428 = vcombine.low %v422, %v422
      %v429 = vcombine.low %v423, %v423
      %430 = vrot.lane.b32.xlu0 %v427, 125
      %v431 = vpop.permute.xlu0 %430
      %432 = vrot.lane.b32.xlu0 %v421, 125
      %v433 = vpop.permute.xlu0 %432
      %434 = vrot.lane.b32.xlu0 %v428, 125
      %v435 = vpop.permute.xlu0 %434
      %436 = vrot.lane.b32.xlu0 %v422, 125
      %v437 = vpop.permute.xlu0 %436
      %438 = vrot.lane.b32.xlu0 %v429, 125
      %v439 = vpop.permute.xlu0 %438
      %vm440 = vcmask 1022976
      %v441 = vsel %vm440, %v431, %v433
      %v442 = vsel %vm440, %v433, %v435
      %v443 = vsel %vm440, %v435, %v437
      %v444 = vsel %vm440, %v437, %v439
      %449 = vst [vmem:[#allocation2 + $0x20] sm:$0xf0] %v441
      %450 = vst [vmem:[#allocation2 + $0x28] sm:$0xf0] %v442
      %451 = vst [vmem:[#allocation2 + $0x30] sm:$0xf0] %v443
      %452 = vst [vmem:[#allocation2 + $0x38] sm:$0xf0] %v444
      %v453 = vld [vmem:[%s330] sm:$0xff]
      %v454 = vld [vmem:[%s330 + $0x8] sm:$0xff]
      %v455 = vld [vmem:[%s330 + $0x10] sm:$0xf]
      %v459 = vcombine.high %v453, %v453
      %v460 = vcombine.high %v454, %v454
      %461 = vrot.lane.b32.xlu0 %v453, 124
      %v462 = vpop.permute.xlu0 %461
      %463 = vrot.lane.b32.xlu0 %v459, 124
      %v464 = vpop.permute.xlu0 %463
      %465 = vrot.lane.b32.xlu0 %v454, 124
      %v466 = vpop.permute.xlu0 %465
      %467 = vrot.lane.b32.xlu0 %v460, 124
      %v468 = vpop.permute.xlu0 %467
      %469 = vrot.lane.b32.xlu0 %v455, 124
      %v470 = vpop.permute.xlu0 %469
      %vm471 = vcmask 1014784
      %v472 = vsel %vm471, %v462, %v464
      %v473 = vsel %vm471, %v464, %v466
      %v474 = vsel %vm471, %v466, %v468
      %v475 = vsel %vm471, %v468, %v470
      %480 = vst [vmem:[#allocation2 + $0x40] sm:$0xf] %v472
      %481 = vst [vmem:[#allocation2 + $0x48] sm:$0xf] %v473
      %482 = vst [vmem:[#allocation2 + $0x50] sm:$0xf] %v474
      %483 = vst [vmem:[#allocation2 + $0x58] sm:$0xf] %v475
      %v484 = vld [vmem:[%s330] sm:$0xff]
      %v485 = vld [vmem:[%s330 + $0x8] sm:$0xff]
      %v486 = vld [vmem:[%s330 + $0x10] sm:$0xf]
      %v490 = vcombine.low %v484, %v484
      %v491 = vcombine.low %v485, %v485
      %v492 = vcombine.low %v486, %v486
      %493 = vrot.lane.b32.xlu0 %v490, 108
      %v494 = vpop.permute.xlu0 %493
      %495 = vrot.lane.b32.xlu0 %v484, 108
      %v496 = vpop.permute.xlu0 %495
      %497 = vrot.lane.b32.xlu0 %v491, 108
      %v498 = vpop.permute.xlu0 %497
      %499 = vrot.lane.b32.xlu0 %v485, 108
      %v500 = vpop.permute.xlu0 %499
      %501 = vrot.lane.b32.xlu0 %v492, 108
      %v502 = vpop.permute.xlu0 %501
      %vm503 = vcmask 883712
      %v504 = vsel %vm503, %v494, %v496
      %v505 = vsel %vm503, %v496, %v498
      %v506 = vsel %vm503, %v498, %v500
      %v507 = vsel %vm503, %v500, %v502
      %512 = vst [vmem:[#allocation2 + $0x40] sm:$0xf0] %v504
      %513 = vst [vmem:[#allocation2 + $0x48] sm:$0xf0] %v505
      %514 = vst [vmem:[#allocation2 + $0x50] sm:$0xf0] %v506
      %515 = vst [vmem:[#allocation2 + $0x58] sm:$0xf0] %v507
      %v516 = vld [vmem:[%s330] sm:$0xff]
      %v517 = vld [vmem:[%s330 + $0x8] sm:$0xff]
      %v518 = vld [vmem:[%s330 + $0x10] sm:$0xf]
      %v522 = vcombine.high %v516, %v516
      %v523 = vcombine.high %v517, %v517
      %524 = vrot.lane.b32.xlu0 %v516, 107
      %v525 = vpop.permute.xlu0 %524
      %526 = vrot.lane.b32.xlu0 %v522, 107
      %v527 = vpop.permute.xlu0 %526
      %528 = vrot.lane.b32.xlu0 %v517, 107
      %v529 = vpop.permute.xlu0 %528
      %530 = vrot.lane.b32.xlu0 %v523, 107
      %v531 = vpop.permute.xlu0 %530
      %532 = vrot.lane.b32.xlu0 %v518, 107
      %v533 = vpop.permute.xlu0 %532
      %vm534 = vcmask 875520
      %v535 = vsel %vm534, %v525, %v527
      %v536 = vsel %vm534, %v527, %v529
      %v537 = vsel %vm534, %v529, %v531
      %v538 = vsel %vm534, %v531, %v533
      %543 = vst [vmem:[#allocation2 + $0x60] sm:$0xf] %v535
      %544 = vst [vmem:[#allocation2 + $0x68] sm:$0xf] %v536
      %545 = vst [vmem:[#allocation2 + $0x70] sm:$0xf] %v537
      %546 = vst [vmem:[#allocation2 + $0x78] sm:$0xf] %v538
      %v547 = vld [vmem:[%s330] sm:$0xff]
      %v548 = vld [vmem:[%s330 + $0x8] sm:$0xff]
      %v549 = vld [vmem:[%s330 + $0x10] sm:$0xf]
      %v553 = vcombine.low %v547, %v547
      %v554 = vcombine.low %v548, %v548
      %v555 = vcombine.low %v549, %v549
      %556 = vrot.lane.b32.xlu0 %v553, 106
      %v557 = vpop.permute.xlu0 %556
      %558 = vrot.lane.b32.xlu0 %v547, 106
      %v559 = vpop.permute.xlu0 %558
      %560 = vrot.lane.b32.xlu0 %v554, 106
      %v561 = vpop.permute.xlu0 %560
      %562 = vrot.lane.b32.xlu0 %v548, 106
      %v563 = vpop.permute.xlu0 %562
      %564 = vrot.lane.b32.xlu0 %v555, 106
      %v565 = vpop.permute.xlu0 %564
      %vm566 = vcmask 867328
      %v567 = vsel %vm566, %v557, %v559
      %v568 = vsel %vm566, %v559, %v561
      %v569 = vsel %vm566, %v561, %v563
      %v570 = vsel %vm566, %v563, %v565
      %575 = vst [vmem:[#allocation2 + $0x60] sm:$0xf0] %v567
      %576 = vst [vmem:[#allocation2 + $0x68] sm:$0xf0] %v568
      %577 = vst [vmem:[#allocation2 + $0x70] sm:$0xf0] %v569
      %578 = vst [vmem:[#allocation2 + $0x78] sm:$0xf0] %v570
      %v579 = vld [vmem:[%s330] sm:$0xff]
      %v580 = vld [vmem:[%s330 + $0x8] sm:$0xff]
      %v581 = vld [vmem:[%s330 + $0x10] sm:$0xf]
      %v585 = vcombine.high %v579, %v579
      %v586 = vcombine.high %v580, %v580
      %587 = vrot.lane.b32.xlu0 %v579, 105
      %v588 = vpop.permute.xlu0 %587
      %589 = vrot.lane.b32.xlu0 %v585, 105
      %v590 = vpop.permute.xlu0 %589
      %591 = vrot.lane.b32.xlu0 %v580, 105
      %v592 = vpop.permute.xlu0 %591
      %593 = vrot.lane.b32.xlu0 %v586, 105
      %v594 = vpop.permute.xlu0 %593
      %595 = vrot.lane.b32.xlu0 %v581, 105
      %v596 = vpop.permute.xlu0 %595
      %vm597 = vcmask 859136
      %v598 = vsel %vm597, %v588, %v590
      %v599 = vsel %vm597, %v590, %v592
      %v600 = vsel %vm597, %v592, %v594
      %v601 = vsel %vm597, %v594, %v596
      %606 = vst [vmem:[#allocation2 + $0x80] sm:$0xf] %v598
      %607 = vst [vmem:[#allocation2 + $0x88] sm:$0xf] %v599
      %608 = vst [vmem:[#allocation2 + $0x90] sm:$0xf] %v600
      %609 = vst [vmem:[#allocation2 + $0x98] sm:$0xf] %v601
      %v610 = vld [vmem:[%s330] sm:$0xff]
      %v611 = vld [vmem:[%s330 + $0x8] sm:$0xff]
      %v612 = vld [vmem:[%s330 + $0x10] sm:$0xf]
      %v616 = vcombine.low %v610, %v610
      %v617 = vcombine.low %v611, %v611
      %v618 = vcombine.low %v612, %v612
      %619 = vrot.lane.b32.xlu0 %v616, 104
      %v620 = vpop.permute.xlu0 %619
      %621 = vrot.lane.b32.xlu0 %v610, 104
      %v622 = vpop.permute.xlu0 %621
      %623 = vrot.lane.b32.xlu0 %v617, 104
      %v624 = vpop.permute.xlu0 %623
      %625 = vrot.lane.b32.xlu0 %v611, 104
      %v626 = vpop.permute.xlu0 %625
      %627 = vrot.lane.b32.xlu0 %v618, 104
      %v628 = vpop.permute.xlu0 %627
      %vm629 = vcmask 850944
      %v630 = vsel %vm629, %v620, %v622
      %v631 = vsel %vm629, %v622, %v624
      %v632 = vsel %vm629, %v624, %v626
      %v633 = vsel %vm629, %v626, %v628
      %638 = vst [vmem:[#allocation2 + $0x80] sm:$0xf0] %v630
      %639 = vst [vmem:[#allocation2 + $0x88] sm:$0xf0] %v631
      %640 = vst [vmem:[#allocation2 + $0x90] sm:$0xf0] %v632
      %641 = vst [vmem:[#allocation2 + $0x98] sm:$0xf0] %v633
      %v642 = vld [vmem:[%s330] sm:$0xff]
      %v643 = vld [vmem:[%s330 + $0x8] sm:$0xff]
      %v644 = vld [vmem:[%s330 + $0x10] sm:$0xf]
      %v648 = vcombine.high %v642, %v642
      %v649 = vcombine.high %v643, %v643
      %650 = vrot.lane.b32.xlu0 %v642, 88
      %v651 = vpop.permute.xlu0 %650
      %652 = vrot.lane.b32.xlu0 %v648, 88
      %v653 = vpop.permute.xlu0 %652
      %654 = vrot.lane.b32.xlu0 %v643, 88
      %v655 = vpop.permute.xlu0 %654
      %656 = vrot.lane.b32.xlu0 %v649, 88
      %v657 = vpop.permute.xlu0 %656
      %658 = vrot.lane.b32.xlu0 %v644, 88
      %v659 = vpop.permute.xlu0 %658
      %vm660 = vcmask 719872
      %v661 = vsel %vm660, %v651, %v653
      %v662 = vsel %vm660, %v653, %v655
      %v663 = vsel %vm660, %v655, %v657
      %v664 = vsel %vm660, %v657, %v659
      %669 = vst [vmem:[#allocation2 + $0xa0] sm:$0xf] %v661
      %670 = vst [vmem:[#allocation2 + $0xa8] sm:$0xf] %v662
      %671 = vst [vmem:[#allocation2 + $0xb0] sm:$0xf] %v663
      %672 = vst [vmem:[#allocation2 + $0xb8] sm:$0xf] %v664
      %v673 = vld [vmem:[%s330] sm:$0xff]
      %v674 = vld [vmem:[%s330 + $0x8] sm:$0xff]
      %v675 = vld [vmem:[%s330 + $0x10] sm:$0xf]
      %v679 = vcombine.low %v673, %v673
      %v680 = vcombine.low %v674, %v674
      %v681 = vcombine.low %v675, %v675
      %682 = vrot.lane.b32.xlu0 %v679, 87
      %v683 = vpop.permute.xlu0 %682
      %684 = vrot.lane.b32.xlu0 %v673, 87
      %v685 = vpop.permute.xlu0 %684
      %686 = vrot.lane.b32.xlu0 %v680, 87
      %v687 = vpop.permute.xlu0 %686
      %688 = vrot.lane.b32.xlu0 %v674, 87
      %v689 = vpop.permute.xlu0 %688
      %690 = vrot.lane.b32.xlu0 %v681, 87
      %v691 = vpop.permute.xlu0 %690
      %vm692 = vcmask 711680
      %v693 = vsel %vm692, %v683, %v685
      %v694 = vsel %vm692, %v685, %v687
      %v695 = vsel %vm692, %v687, %v689
      %v696 = vsel %vm692, %v689, %v691
      %701 = vst [vmem:[#allocation2 + $0xa0] sm:$0xf0] %v693
      %702 = vst [vmem:[#allocation2 + $0xa8] sm:$0xf0] %v694
      %703 = vst [vmem:[#allocation2 + $0xb0] sm:$0xf0] %v695
      %704 = vst [vmem:[#allocation2 + $0xb8] sm:$0xf0] %v696
      %v705 = vld [vmem:[%s330] sm:$0xff]
      %v706 = vld [vmem:[%s330 + $0x8] sm:$0xff]
      %v707 = vld [vmem:[%s330 + $0x10] sm:$0xf]
      %v711 = vcombine.high %v705, %v705
      %v712 = vcombine.high %v706, %v706
      %713 = vrot.lane.b32.xlu0 %v705, 86
      %v714 = vpop.permute.xlu0 %713
      %715 = vrot.lane.b32.xlu0 %v711, 86
      %v716 = vpop.permute.xlu0 %715
      %717 = vrot.lane.b32.xlu0 %v706, 86
      %v718 = vpop.permute.xlu0 %717
      %719 = vrot.lane.b32.xlu0 %v712, 86
      %v720 = vpop.permute.xlu0 %719
      %721 = vrot.lane.b32.xlu0 %v707, 86
      %v722 = vpop.permute.xlu0 %721
      %vm723 = vcmask 703488
      %v724 = vsel %vm723, %v714, %v716
      %v725 = vsel %vm723, %v716, %v718
      %v726 = vsel %vm723, %v718, %v720
      %v727 = vsel %vm723, %v720, %v722
      %732 = vst [vmem:[#allocation2 + $0xc0] sm:$0xf] %v724
      %733 = vst [vmem:[#allocation2 + $0xc8] sm:$0xf] %v725
      %734 = vst [vmem:[#allocation2 + $0xd0] sm:$0xf] %v726
      %735 = vst [vmem:[#allocation2 + $0xd8] sm:$0xf] %v727
      %v736 = vld [vmem:[%s330] sm:$0xff]
      %v737 = vld [vmem:[%s330 + $0x8] sm:$0xff]
      %v738 = vld [vmem:[%s330 + $0x10] sm:$0xf]
      %v742 = vcombine.low %v736, %v736
      %v743 = vcombine.low %v737, %v737
      %v744 = vcombine.low %v738, %v738
      %745 = vrot.lane.b32.xlu0 %v742, 85
      %v746 = vpop.permute.xlu0 %745
      %747 = vrot.lane.b32.xlu0 %v736, 85
      %v748 = vpop.permute.xlu0 %747
      %749 = vrot.lane.b32.xlu0 %v743, 85
      %v750 = vpop.permute.xlu0 %749
      %751 = vrot.lane.b32.xlu0 %v737, 85
      %v752 = vpop.permute.xlu0 %751
      %753 = vrot.lane.b32.xlu0 %v744, 85
      %v754 = vpop.permute.xlu0 %753
      %vm755 = vcmask 695296
      %v756 = vsel %vm755, %v746, %v748
      %v757 = vsel %vm755, %v748, %v750
      %v758 = vsel %vm755, %v750, %v752
      %v759 = vsel %vm755, %v752, %v754
      %764 = vst [vmem:[#allocation2 + $0xc0] sm:$0xf0] %v756
      %765 = vst [vmem:[#allocation2 + $0xc8] sm:$0xf0] %v757
      %766 = vst [vmem:[#allocation2 + $0xd0] sm:$0xf0] %v758
      %767 = vst [vmem:[#allocation2 + $0xd8] sm:$0xf0] %v759
      %v768 = vld [vmem:[%s330] sm:$0xff]
      %v769 = vld [vmem:[%s330 + $0x8] sm:$0xff]
      %v770 = vld [vmem:[%s330 + $0x10] sm:$0xf]
      %v774 = vcombine.high %v768, %v768
      %v775 = vcombine.high %v769, %v769
      %776 = vrot.lane.b32.xlu0 %v768, 84
      %v777 = vpop.permute.xlu0 %776
      %778 = vrot.lane.b32.xlu0 %v774, 84
      %v779 = vpop.permute.xlu0 %778
      %780 = vrot.lane.b32.xlu0 %v769, 84
      %v781 = vpop.permute.xlu0 %780
      %782 = vrot.lane.b32.xlu0 %v775, 84
      %v783 = vpop.permute.xlu0 %782
      %784 = vrot.lane.b32.xlu0 %v770, 84
      %v785 = vpop.permute.xlu0 %784
      %vm786 = vcmask 687104
      %v787 = vsel %vm786, %v777, %v779
      %v788 = vsel %vm786, %v779, %v781
      %v789 = vsel %vm786, %v781, %v783
      %v790 = vsel %vm786, %v783, %v785
      %795 = vst [vmem:[#allocation2 + $0xe0] sm:$0xf] %v787
      %796 = vst [vmem:[#allocation2 + $0xe8] sm:$0xf] %v788
      %797 = vst [vmem:[#allocation2 + $0xf0] sm:$0xf] %v789
      %798 = vst [vmem:[#allocation2 + $0xf8] sm:$0xf] %v790
      %v799 = vld [vmem:[%s330] sm:$0xff]
      %v800 = vld [vmem:[%s330 + $0x8] sm:$0xff]
      %v801 = vld [vmem:[%s330 + $0x10] sm:$0xf]
      %v805 = vcombine.low %v799, %v799
      %v806 = vcombine.low %v800, %v800
      %v807 = vcombine.low %v801, %v801
      %808 = vrot.lane.b32.xlu0 %v805, 68
      %v809 = vpop.permute.xlu0 %808
      %810 = vrot.lane.b32.xlu0 %v799, 68
      %v811 = vpop.permute.xlu0 %810
      %812 = vrot.lane.b32.xlu0 %v806, 68
      %v813 = vpop.permute.xlu0 %812
      %814 = vrot.lane.b32.xlu0 %v800, 68
      %v815 = vpop.permute.xlu0 %814
      %816 = vrot.lane.b32.xlu0 %v807, 68
      %v817 = vpop.permute.xlu0 %816
      %vm818 = vcmask 556032
      %v819 = vsel %vm818, %v809, %v811
      %v820 = vsel %vm818, %v811, %v813
      %v821 = vsel %vm818, %v813, %v815
      %v822 = vsel %vm818, %v815, %v817
      %827 = vst [vmem:[#allocation2 + $0xe0] sm:$0xf0] %v819
      %828 = vst [vmem:[#allocation2 + $0xe8] sm:$0xf0] %v820
      %829 = vst [vmem:[#allocation2 + $0xf0] sm:$0xf0] %v821
      %830 = vst [vmem:[#allocation2 + $0xf8] sm:$0xf0] %v822
      %v831 = vld [vmem:[%s330] sm:$0xff]
      %v832 = vld [vmem:[%s330 + $0x8] sm:$0xff]
      %v833 = vld [vmem:[%s330 + $0x10] sm:$0xf]
      %v837 = vcombine.high %v831, %v831
      %v838 = vcombine.high %v832, %v832
      %839 = vrot.lane.b32.xlu0 %v831, 67
      %v840 = vpop.permute.xlu0 %839
      %841 = vrot.lane.b32.xlu0 %v837, 67
      %v842 = vpop.permute.xlu0 %841
      %843 = vrot.lane.b32.xlu0 %v832, 67
      %v844 = vpop.permute.xlu0 %843
      %845 = vrot.lane.b32.xlu0 %v838, 67
      %v846 = vpop.permute.xlu0 %845
      %847 = vrot.lane.b32.xlu0 %v833, 67
      %v848 = vpop.permute.xlu0 %847
      %vm849 = vcmask 547840
      %v850 = vsel %vm849, %v840, %v842
      %v851 = vsel %vm849, %v842, %v844
      %v852 = vsel %vm849, %v844, %v846
      %v853 = vsel %vm849, %v846, %v848
      %858 = vst [vmem:[#allocation2 + $0x100] sm:$0xf] %v850
      %859 = vst [vmem:[#allocation2 + $0x108] sm:$0xf] %v851
      %860 = vst [vmem:[#allocation2 + $0x110] sm:$0xf] %v852
      %861 = vst [vmem:[#allocation2 + $0x118] sm:$0xf] %v853
      %v862 = vld [vmem:[%s330] sm:$0xff]
      %v863 = vld [vmem:[%s330 + $0x8] sm:$0xff]
      %v864 = vld [vmem:[%s330 + $0x10] sm:$0xf]
      %v868 = vcombine.low %v862, %v862
      %v869 = vcombine.low %v863, %v863
      %v870 = vcombine.low %v864, %v864
      %871 = vrot.lane.b32.xlu0 %v868, 66
      %v872 = vpop.permute.xlu0 %871
      %873 = vrot.lane.b32.xlu0 %v862, 66
      %v874 = vpop.permute.xlu0 %873
      %875 = vrot.lane.b32.xlu0 %v869, 66
      %v876 = vpop.permute.xlu0 %875
      %877 = vrot.lane.b32.xlu0 %v863, 66
      %v878 = vpop.permute.xlu0 %877
      %879 = vrot.lane.b32.xlu0 %v870, 66
      %v880 = vpop.permute.xlu0 %879
      %vm881 = vcmask 539648
      %v882 = vsel %vm881, %v872, %v874
      %v883 = vsel %vm881, %v874, %v876
      %v884 = vsel %vm881, %v876, %v878
      %v885 = vsel %vm881, %v878, %v880
      %890 = vst [vmem:[#allocation2 + $0x100] sm:$0xf0] %v882
      %891 = vst [vmem:[#allocation2 + $0x108] sm:$0xf0] %v883
      %892 = vst [vmem:[#allocation2 + $0x110] sm:$0xf0] %v884
      %893 = vst [vmem:[#allocation2 + $0x118] sm:$0xf0] %v885
      %v894 = vld [vmem:[%s330] sm:$0xff]
      %v895 = vld [vmem:[%s330 + $0x8] sm:$0xff]
      %v896 = vld [vmem:[%s330 + $0x10] sm:$0xf]
      %v900 = vcombine.high %v894, %v894
      %v901 = vcombine.high %v895, %v895
      %902 = vrot.lane.b32.xlu0 %v894, 65
      %v903 = vpop.permute.xlu0 %902
      %904 = vrot.lane.b32.xlu0 %v900, 65
      %v905 = vpop.permute.xlu0 %904
      %906 = vrot.lane.b32.xlu0 %v895, 65
      %v907 = vpop.permute.xlu0 %906
      %908 = vrot.lane.b32.xlu0 %v901, 65
      %v909 = vpop.permute.xlu0 %908
      %910 = vrot.lane.b32.xlu0 %v896, 65
      %v911 = vpop.permute.xlu0 %910
      %vm912 = vcmask 531456
      %v913 = vsel %vm912, %v903, %v905
      %v914 = vsel %vm912, %v905, %v907
      %v915 = vsel %vm912, %v907, %v909
      %v916 = vsel %vm912, %v909, %v911
      %921 = vst [vmem:[#allocation2 + $0x120] sm:$0xf] %v913
      %922 = vst [vmem:[#allocation2 + $0x128] sm:$0xf] %v914
      %923 = vst [vmem:[#allocation2 + $0x130] sm:$0xf] %v915
      %924 = vst [vmem:[#allocation2 + $0x138] sm:$0xf] %v916
      %v925 = vld [vmem:[%s330] sm:$0xff]
      %v926 = vld [vmem:[%s330 + $0x8] sm:$0xff]
      %v927 = vld [vmem:[%s330 + $0x10] sm:$0xf]
      %v931 = vcombine.low %v925, %v925
      %v932 = vcombine.low %v926, %v926
      %v933 = vcombine.low %v927, %v927
      %934 = vrot.lane.b32.xlu0 %v931, 64
      %v935 = vpop.permute.xlu0 %934
      %936 = vrot.lane.b32.xlu0 %v925, 64
      %v937 = vpop.permute.xlu0 %936
      %938 = vrot.lane.b32.xlu0 %v932, 64
      %v939 = vpop.permute.xlu0 %938
      %940 = vrot.lane.b32.xlu0 %v926, 64
      %v941 = vpop.permute.xlu0 %940
      %942 = vrot.lane.b32.xlu0 %v933, 64
      %v943 = vpop.permute.xlu0 %942
      %vm944 = vcmask 523264
      %v945 = vsel %vm944, %v935, %v937
      %v946 = vsel %vm944, %v937, %v939
      %v947 = vsel %vm944, %v939, %v941
      %v948 = vsel %vm944, %v941, %v943
      %953 = vst [vmem:[#allocation2 + $0x120] sm:$0xf0] %v945
      %954 = vst [vmem:[#allocation2 + $0x128] sm:$0xf0] %v946
      %955 = vst [vmem:[#allocation2 + $0x130] sm:$0xf0] %v947
      %956 = vst [vmem:[#allocation2 + $0x138] sm:$0xf0] %v948
      %v957 = vld [vmem:[%s330] sm:$0xff]
      %v958 = vld [vmem:[%s330 + $0x8] sm:$0xff]
      %v959 = vld [vmem:[%s330 + $0x10] sm:$0xf]
      %v963 = vcombine.high %v957, %v957
      %v964 = vcombine.high %v958, %v958
      %965 = vrot.lane.b32.xlu0 %v957, 48
      %v966 = vpop.permute.xlu0 %965
      %967 = vrot.lane.b32.xlu0 %v963, 48
      %v968 = vpop.permute.xlu0 %967
      %969 = vrot.lane.b32.xlu0 %v958, 48
      %v970 = vpop.permute.xlu0 %969
      %971 = vrot.lane.b32.xlu0 %v964, 48
      %v972 = vpop.permute.xlu0 %971
      %973 = vrot.lane.b32.xlu0 %v959, 48
      %v974 = vpop.permute.xlu0 %973
      %vm975 = vcmask 392192
      %v976 = vsel %vm975, %v966, %v968
      %v977 = vsel %vm975, %v968, %v970
      %v978 = vsel %vm975, %v970, %v972
      %v979 = vsel %vm975, %v972, %v974
      %984 = vst [vmem:[#allocation2 + $0x140] sm:$0xf] %v976
      %985 = vst [vmem:[#allocation2 + $0x148] sm:$0xf] %v977
      %986 = vst [vmem:[#allocation2 + $0x150] sm:$0xf] %v978
      %987 = vst [vmem:[#allocation2 + $0x158] sm:$0xf] %v979
      %v988 = vld [vmem:[%s330] sm:$0xff]
      %v989 = vld [vmem:[%s330 + $0x8] sm:$0xff]
      %v990 = vld [vmem:[%s330 + $0x10] sm:$0xf]
      %v994 = vcombine.low %v988, %v988
      %v995 = vcombine.low %v989, %v989
      %v996 = vcombine.low %v990, %v990
      %997 = vrot.lane.b32.xlu0 %v994, 47
      %v998 = vpop.permute.xlu0 %997
      %999 = vrot.lane.b32.xlu0 %v988, 47
      %v1000 = vpop.permute.xlu0 %999
      %1001 = vrot.lane.b32.xlu0 %v995, 47
      %v1002 = vpop.permute.xlu0 %1001
      %1003 = vrot.lane.b32.xlu0 %v989, 47
      %v1004 = vpop.permute.xlu0 %1003
      %1005 = vrot.lane.b32.xlu0 %v996, 47
      %v1006 = vpop.permute.xlu0 %1005
      %vm1007 = vcmask 384000
      %v1008 = vsel %vm1007, %v998, %v1000
      %v1009 = vsel %vm1007, %v1000, %v1002
      %v1010 = vsel %vm1007, %v1002, %v1004
      %v1011 = vsel %vm1007, %v1004, %v1006
      %1016 = vst [vmem:[#allocation2 + $0x140] sm:$0xf0] %v1008
      %1017 = vst [vmem:[#allocation2 + $0x148] sm:$0xf0] %v1009
      %1018 = vst [vmem:[#allocation2 + $0x150] sm:$0xf0] %v1010
      %1019 = vst [vmem:[#allocation2 + $0x158] sm:$0xf0] %v1011
      %v1020 = vld [vmem:[%s330] sm:$0xff]
      %v1021 = vld [vmem:[%s330 + $0x8] sm:$0xff]
      %v1022 = vld [vmem:[%s330 + $0x10] sm:$0xf]
      %v1026 = vcombine.high %v1020, %v1020
      %v1027 = vcombine.high %v1021, %v1021
      %1028 = vrot.lane.b32.xlu0 %v1020, 46
      %v1029 = vpop.permute.xlu0 %1028
      %1030 = vrot.lane.b32.xlu0 %v1026, 46
      %v1031 = vpop.permute.xlu0 %1030
      %1032 = vrot.lane.b32.xlu0 %v1021, 46
      %v1033 = vpop.permute.xlu0 %1032
      %1034 = vrot.lane.b32.xlu0 %v1027, 46
      %v1035 = vpop.permute.xlu0 %1034
      %1036 = vrot.lane.b32.xlu0 %v1022, 46
      %v1037 = vpop.permute.xlu0 %1036
      %vm1038 = vcmask 375808
      %v1039 = vsel %vm1038, %v1029, %v1031
      %v1040 = vsel %vm1038, %v1031, %v1033
      %v1041 = vsel %vm1038, %v1033, %v1035
      %v1042 = vsel %vm1038, %v1035, %v1037
      %1047 = vst [vmem:[#allocation2 + $0x160] sm:$0xf] %v1039
      %1048 = vst [vmem:[#allocation2 + $0x168] sm:$0xf] %v1040
      %1049 = vst [vmem:[#allocation2 + $0x170] sm:$0xf] %v1041
      %1050 = vst [vmem:[#allocation2 + $0x178] sm:$0xf] %v1042
      %v1051 = vld [vmem:[%s330] sm:$0xff]
      %v1052 = vld [vmem:[%s330 + $0x8] sm:$0xff]
      %v1053 = vld [vmem:[%s330 + $0x10] sm:$0xf]
      %v1057 = vcombine.low %v1051, %v1051
      %v1058 = vcombine.low %v1052, %v1052
      %v1059 = vcombine.low %v1053, %v1053
      %1060 = vrot.lane.b32.xlu0 %v1057, 45
      %v1061 = vpop.permute.xlu0 %1060
      %1062 = vrot.lane.b32.xlu0 %v1051, 45
      %v1063 = vpop.permute.xlu0 %1062
      %1064 = vrot.lane.b32.xlu0 %v1058, 45
      %v1065 = vpop.permute.xlu0 %1064
      %1066 = vrot.lane.b32.xlu0 %v1052, 45
      %v1067 = vpop.permute.xlu0 %1066
      %1068 = vrot.lane.b32.xlu0 %v1059, 45
      %v1069 = vpop.permute.xlu0 %1068
      %vm1070 = vcmask 367616
      %v1071 = vsel %vm1070, %v1061, %v1063
      %v1072 = vsel %vm1070, %v1063, %v1065
      %v1073 = vsel %vm1070, %v1065, %v1067
      %v1074 = vsel %vm1070, %v1067, %v1069
      %1079 = vst [vmem:[#allocation2 + $0x160] sm:$0xf0] %v1071
      %1080 = vst [vmem:[#allocation2 + $0x168] sm:$0xf0] %v1072
      %1081 = vst [vmem:[#allocation2 + $0x170] sm:$0xf0] %v1073
      %1082 = vst [vmem:[#allocation2 + $0x178] sm:$0xf0] %v1074
      %v1083 = vld [vmem:[%s330] sm:$0xff]
      %v1084 = vld [vmem:[%s330 + $0x8] sm:$0xff]
      %v1085 = vld [vmem:[%s330 + $0x10] sm:$0xf]
      %v1089 = vcombine.high %v1083, %v1083
      %v1090 = vcombine.high %v1084, %v1084
      %1091 = vrot.lane.b32.xlu0 %v1083, 44
      %v1092 = vpop.permute.xlu0 %1091
      %1093 = vrot.lane.b32.xlu0 %v1089, 44
      %v1094 = vpop.permute.xlu0 %1093
      %1095 = vrot.lane.b32.xlu0 %v1084, 44
      %v1096 = vpop.permute.xlu0 %1095
      %1097 = vrot.lane.b32.xlu0 %v1090, 44
      %v1098 = vpop.permute.xlu0 %1097
      %1099 = vrot.lane.b32.xlu0 %v1085, 44
      %v1100 = vpop.permute.xlu0 %1099
      %vm1101 = vcmask 359424
      %v1102 = vsel %vm1101, %v1092, %v1094
      %v1103 = vsel %vm1101, %v1094, %v1096
      %v1104 = vsel %vm1101, %v1096, %v1098
      %v1105 = vsel %vm1101, %v1098, %v1100
      %1110 = vst [vmem:[#allocation2 + $0x180] sm:$0xf] %v1102
      %1111 = vst [vmem:[#allocation2 + $0x188] sm:$0xf] %v1103
      %1112 = vst [vmem:[#allocation2 + $0x190] sm:$0xf] %v1104
      %1113 = vst [vmem:[#allocation2 + $0x198] sm:$0xf] %v1105
      %v1114 = vld [vmem:[%s3] sm:$0xff]
      %v1115 = vld [vmem:[#allocation2] sm:$0xff]
      %v1116 = vld [vmem:[#allocation2 + $0x8] sm:$0xff]
      %v1117 = vld [vmem:[#allocation2 + $0x10] sm:$0xff]
      %v1118 = vld [vmem:[#allocation2 + $0x18] sm:$0xff]
      %v1119 = vld [vmem:[#allocation2 + $0x20] sm:$0xff]
      %v1120 = vld [vmem:[#allocation2 + $0x28] sm:$0xff]
      %v1121 = vld [vmem:[#allocation2 + $0x30] sm:$0xff]
      %v1122 = vld [vmem:[#allocation2 + $0x38] sm:$0xff]
      %v1123 = vld [vmem:[#allocation2 + $0x40] sm:$0xff]
      %v1124 = vld [vmem:[#allocation2 + $0x48] sm:$0xff]
      %v1125 = vld [vmem:[#allocation2 + $0x50] sm:$0xff]
      %v1126 = vld [vmem:[#allocation2 + $0x58] sm:$0xff]
      %v1127 = vld [vmem:[#allocation2 + $0x60] sm:$0xff]
      %v1128 = vld [vmem:[#allocation2 + $0x68] sm:$0xff]
      %v1129 = vld [vmem:[#allocation2 + $0x70] sm:$0xff]
      %v1130 = vld [vmem:[#allocation2 + $0x78] sm:$0xff]
      %v1131 = vld [vmem:[#allocation2 + $0x80] sm:$0xff]
      %v1132 = vld [vmem:[#allocation2 + $0x88] sm:$0xff]
      %v1133 = vld [vmem:[#allocation2 + $0x90] sm:$0xff]
      %v1134 = vld [vmem:[#allocation2 + $0x98] sm:$0xff]
      %v1135 = vld [vmem:[#allocation2 + $0xa0] sm:$0xff]
      %v1136 = vld [vmem:[#allocation2 + $0xa8] sm:$0xff]
      %v1137 = vld [vmem:[#allocation2 + $0xb0] sm:$0xff]
      %v1138 = vld [vmem:[#allocation2 + $0xb8] sm:$0xff]
      %v1139 = vld [vmem:[#allocation2 + $0xc0] sm:$0xff]
      %v1140 = vld [vmem:[#allocation2 + $0xc8] sm:$0xff]
      %v1141 = vld [vmem:[#allocation2 + $0xd0] sm:$0xff]
      %v1142 = vld [vmem:[#allocation2 + $0xd8] sm:$0xff]
      %v1143 = vld [vmem:[#allocation2 + $0xe0] sm:$0xff]
      %v1144 = vld [vmem:[#allocation2 + $0xe8] sm:$0xff]
      %v1145 = vld [vmem:[#allocation2 + $0xf0] sm:$0xff]
      %v1146 = vld [vmem:[#allocation2 + $0xf8] sm:$0xff]
      %v1147 = vld [vmem:[#allocation2 + $0x100] sm:$0xff]
      %v1148 = vld [vmem:[#allocation2 + $0x108] sm:$0xff]
      %v1149 = vld [vmem:[#allocation2 + $0x110] sm:$0xff]
      %v1150 = vld [vmem:[#allocation2 + $0x118] sm:$0xff]
      %v1151 = vld [vmem:[#allocation2 + $0x120] sm:$0xff]
      %v1152 = vld [vmem:[#allocation2 + $0x128] sm:$0xff]
      %v1153 = vld [vmem:[#allocation2 + $0x130] sm:$0xff]
      %v1154 = vld [vmem:[#allocation2 + $0x138] sm:$0xff]
      %v1155 = vld [vmem:[#allocation2 + $0x140] sm:$0xff]
      %v1156 = vld [vmem:[#allocation2 + $0x148] sm:$0xff]
      %v1157 = vld [vmem:[#allocation2 + $0x150] sm:$0xff]
      %v1158 = vld [vmem:[#allocation2 + $0x158] sm:$0xff]
      %v1159 = vld [vmem:[#allocation2 + $0x160] sm:$0xff]
      %v1160 = vld [vmem:[#allocation2 + $0x168] sm:$0xff]
      %v1161 = vld [vmem:[#allocation2 + $0x170] sm:$0xff]
      %v1162 = vld [vmem:[#allocation2 + $0x178] sm:$0xff]
      %v1163 = vld [vmem:[#allocation2 + $0x180] sm:$0xf]
      %v1164 = vld [vmem:[#allocation2 + $0x188] sm:$0xf]
      %v1165 = vld [vmem:[#allocation2 + $0x190] sm:$0xf]
      %v1166 = vld [vmem:[#allocation2 + $0x198] sm:$0xf]
      %vm1167 = vcmask 818176
      %v1169 = vsel %vm1167, %v1114, 0
      %vm1171 = vcmask 1043456
      %v1173 = vsel %vm1171, %v1163, 0
      %v1176 = vsel %vm1171, %v1164, 0
      %v1179 = vsel %vm1171, %v1165, 0
      %v1182 = vsel %vm1171, %v1166, 0
      %1184 = vmatprep.subr.mxu0 0.0
      %1185 = vmatpush1.msra.mxu0 0.0
      %1186 = vmatprep.subr.mxu0 0.0
      %1187 = vmatpush1.msra.mxu0 0.0
      %1188 = vmatprep.subr.mxu0 0.0
      %1189 = vmatpush1.msra.mxu0 0.0
      %1190 = vmatprep.subr.mxu0 %v1176
      %1191 = vmatpush1.msra.mxu0 %v1173
      %1192 = vmatprep.subr.mxu0 %v1160
      %1193 = vmatpush1.msra.mxu0 %v1159
      %1194 = vmatprep.subr.mxu0 %v1156
      %1195 = vmatpush1.msra.mxu0 %v1155
      %1196 = vmatprep.subr.mxu0 %v1152
      %1197 = vmatpush1.msra.mxu0 %v1151
      %1198 = vmatprep.subr.mxu0 %v1148
      %1199 = vmatpush1.msra.mxu0 %v1147
      %1200 = vmatprep.subr.mxu0 %v1144
      %1201 = vmatpush1.msra.mxu0 %v1143
      %1202 = vmatprep.subr.mxu0 %v1140
      %1203 = vmatpush1.msra.mxu0 %v1139
      %1204 = vmatprep.subr.mxu0 %v1136
      %1205 = vmatpush1.msra.mxu0 %v1135
      %1206 = vmatprep.subr.mxu0 %v1132
      %1207 = vmatpush1.msra.mxu0 %v1131
      %1208 = vmatprep.subr.mxu0 %v1128
      %1209 = vmatpush1.msra.mxu0 %v1127
      %1210 = vmatprep.subr.mxu0 %v1124
      %1211 = vmatpush1.msra.mxu0 %v1123
      %1212 = vmatprep.subr.mxu0 %v1120
      %1213 = vmatpush1.msra.mxu0 %v1119
      %1214 = vmatprep.subr.mxu0 %v1116
      %1215 = vmatpush1.msra.mxu0 %v1115
      %1216 = vmatprep.subr.mxu0 0.0
      %1217 = vmatpush2.msra.mxu0 0.0
      %1218 = vmatprep.subr.mxu0 0.0
      %1219 = vmatpush2.msra.mxu0 0.0
      %1220 = vmatprep.subr.mxu0 0.0
      %1221 = vmatpush2.msra.mxu0 0.0
      %1222 = vmatprep.subr.mxu0 0.0
      %1223 = vmatpush2.msra.mxu0 0.0
      %1224 = vmatprep.subr.mxu0 0.0
      %1225 = vmatpush2.msra.mxu0 0.0
      %1226 = vmatprep.subr.mxu0 0.0
      %1227 = vmatpush2.msra.mxu0 0.0
      %1228 = vmatprep.subr.mxu0 0.0
      %1229 = vmatpush2.msra.mxu0 0.0
      %1230 = vmatprep.subr.mxu0 0.0
      %1231 = vmatpush2.msra.mxu0 0.0
      %1232 = vmatprep.subr.mxu0 0.0
      %1233 = vmatpush2.msra.mxu0 0.0
      %1234 = vmatprep.subr.mxu0 0.0
      %1235 = vmatpush2.msra.mxu0 0.0
      %1236 = vmatprep.subr.mxu0 0.0
      %1237 = vmatpush2.msra.mxu0 0.0
      %1238 = vmatprep.subr.mxu0 0.0
      %1239 = vmatpush2.msra.mxu0 0.0
      %1240 = vmatprep.subr.mxu0 0.0
      %1241 = vmatpush2.msra.mxu0 0.0
      %1242 = vmatprep.subr.mxu0 0.0
      %1243 = vmatpush2.msra.mxu0 0.0
      %1244 = vmatprep.subr.mxu0 0.0
      %1245 = vmatpush2.msra.mxu0 0.0
      %1246 = vmatprep.subr.mxu0 0.0
      %1247 = vmatpush2.msra.mxu0 0.0
      %1248 = vmatprep.mubr.f32.mxu0 0.0
      %1249 = vmatmul.mubr.f32.gmra.mxu0 %v1169
      %v1250 = vpop.f32.mrf.mxu0
      %v1251 = vadd.f32 0.0, %v1250
      %v1252 = vpop.f32.mrf.mxu0
      %v1253 = vadd.f32 0.0, %v1252
      %1254 = vdwg.mxu0
      %1255 = vmatprep.subr.mxu0 0.0
      %1256 = vmatpush1.msra.mxu0 0.0
      %1257 = vmatprep.subr.mxu0 0.0
      %1258 = vmatpush1.msra.mxu0 0.0
      %1259 = vmatprep.subr.mxu0 0.0
      %1260 = vmatpush1.msra.mxu0 0.0
      %1261 = vmatprep.subr.mxu0 %v1182
      %1262 = vmatpush1.msra.mxu0 %v1179
      %1263 = vmatprep.subr.mxu0 %v1162
      %1264 = vmatpush1.msra.mxu0 %v1161
      %1265 = vmatprep.subr.mxu0 %v1158
      %1266 = vmatpush1.msra.mxu0 %v1157
      %1267 = vmatprep.subr.mxu0 %v1154
      %1268 = vmatpush1.msra.mxu0 %v1153
      %1269 = vmatprep.subr.mxu0 %v1150
      %1270 = vmatpush1.msra.mxu0 %v1149
      %1271 = vmatprep.subr.mxu0 %v1146
      %1272 = vmatpush1.msra.mxu0 %v1145
      %1273 = vmatprep.subr.mxu0 %v1142
      %1274 = vmatpush1.msra.mxu0 %v1141
      %1275 = vmatprep.subr.mxu0 %v1138
      %1276 = vmatpush1.msra.mxu0 %v1137
      %1277 = vmatprep.subr.mxu0 %v1134
      %1278 = vmatpush1.msra.mxu0 %v1133
      %1279 = vmatprep.subr.mxu0 %v1130
      %1280 = vmatpush1.msra.mxu0 %v1129
      %1281 = vmatprep.subr.mxu0 %v1126
      %1282 = vmatpush1.msra.mxu0 %v1125
      %1283 = vmatprep.subr.mxu0 %v1122
      %1284 = vmatpush1.msra.mxu0 %v1121
      %1285 = vmatprep.subr.mxu0 %v1118
      %1286 = vmatpush1.msra.mxu0 %v1117
      %1287 = vmatprep.subr.mxu0 0.0
      %1288 = vmatpush2.msra.mxu0 0.0
      %1289 = vmatprep.subr.mxu0 0.0
      %1290 = vmatpush2.msra.mxu0 0.0
      %1291 = vmatprep.subr.mxu0 0.0
      %1292 = vmatpush2.msra.mxu0 0.0
      %1293 = vmatprep.subr.mxu0 0.0
      %1294 = vmatpush2.msra.mxu0 0.0
      %1295 = vmatprep.subr.mxu0 0.0
      %1296 = vmatpush2.msra.mxu0 0.0
      %1297 = vmatprep.subr.mxu0 0.0
      %1298 = vmatpush2.msra.mxu0 0.0
      %1299 = vmatprep.subr.mxu0 0.0
      %1300 = vmatpush2.msra.mxu0 0.0
      %1301 = vmatprep.subr.mxu0 0.0
      %1302 = vmatpush2.msra.mxu0 0.0
      %1303 = vmatprep.subr.mxu0 0.0
      %1304 = vmatpush2.msra.mxu0 0.0
      %1305 = vmatprep.subr.mxu0 0.0
      %1306 = vmatpush2.msra.mxu0 0.0
      %1307 = vmatprep.subr.mxu0 0.0
      %1308 = vmatpush2.msra.mxu0 0.0
      %1309 = vmatprep.subr.mxu0 0.0
      %1310 = vmatpush2.msra.mxu0 0.0
      %1311 = vmatprep.subr.mxu0 0.0
      %1312 = vmatpush2.msra.mxu0 0.0
      %1313 = vmatprep.subr.mxu0 0.0
      %1314 = vmatpush2.msra.mxu0 0.0
      %1315 = vmatprep.subr.mxu0 0.0
      %1316 = vmatpush2.msra.mxu0 0.0
      %1317 = vmatprep.subr.mxu0 0.0
      %1318 = vmatpush2.msra.mxu0 0.0
      %1319 = vmatprep.mubr.f32.mxu0 0.0
      %1320 = vmatmul.mubr.f32.gmra.mxu0 %v1169
      %v1321 = vpop.f32.mrf.mxu0
      %v1322 = vadd.f32 0.0, %v1321
      %v1323 = vpop.f32.mrf.mxu0
      %v1324 = vadd.f32 0.0, %v1323
      %1325 = vdwg.mxu0
      %1326 = vst [vmem:[#allocation3] sm:$0xff] %v1251
      %1327 = vst [vmem:[#allocation3 + $0x8] sm:$0xff] %v1253
      %1328 = vst [vmem:[#allocation3 + $0x10] sm:$0xff] %v1322
      %1329 = vst [vmem:[#allocation3 + $0x18] sm:$0xff] %v1324
      %v1330 = vld [vmem:[#allocation3] sm:$0xff]
      %v1331 = vld [vmem:[#allocation3 + $0x8] sm:$0xff]
      %v1332 = vld [vmem:[#allocation3 + $0x10] sm:$0xff]
      %v1333 = vld [vmem:[#allocation3 + $0x18] sm:$0xff]
      %v1334 = vld [vmem:[%s4] sm:$0xff]
      %1336 = vset.pattern.permute.xlu0 0
      %1337 = vperm.xlu0 %1336, %v1334
      %v1338 = vpop.permute.xlu0 %1337
      %v1340 = vadd.f32 %v1330, %v1338
      %v1341 = vadd.f32 %v1331, %v1338
      %v1342 = vadd.f32 %v1332, %v1338
      %v1343 = vadd.f32 %v1333, %v1338
      %v1344 = vmax.f32 %v1340, 0.0
      %v1345 = vmax.f32 %v1341, 0.0
      %v1346 = vmax.f32 %v1342, 0.0
      %v1347 = vmax.f32 %v1343, 0.0
      %v1348 = vand.u32 2147483647, %v1340
      %v1349 = vand.u32 2147483647, %v1341
      %v1350 = vand.u32 2147483647, %v1342
      %v1351 = vand.u32 2147483647, %v1343
      %v1352 = vsub.f32 0.0, %v1348
      %v1353 = vsub.f32 0.0, %v1349
      %v1354 = vsub.f32 0.0, %v1350
      %v1355 = vsub.f32 0.0, %v1351
      %v1356 = vmul.f32 %v1352, 1.442695
      %v1357 = vpow.pop %v1356
      %v1358 = vmul.f32 %v1353, 1.442695
      %v1359 = vpow.pop %v1358
      %v1360 = vmul.f32 %v1354, 1.442695
      %v1361 = vpow.pop %v1360
      %v1362 = vmul.f32 %v1355, 1.442695
      %v1363 = vpow.pop %v1362
      %v1364 = vadd.f32 %v1357, 1.0
      %v1365 = vadd.f32 %v1359, 1.0
      %v1366 = vadd.f32 %v1361, 1.0
      %v1367 = vadd.f32 %v1363, 1.0
      %v1368 = vlog2.pop %v1364
      %v1369 = vmul.f32 %v1368, 0.6931472
      %v1370 = vlog2.pop %v1365
      %v1371 = vmul.f32 %v1370, 0.6931472
      %v1372 = vlog2.pop %v1366
      %v1373 = vmul.f32 %v1372, 0.6931472
      %v1374 = vlog2.pop %v1367
      %v1375 = vmul.f32 %v1374, 0.6931472
      %v1376 = vadd.f32 %v1344, %v1369
      %v1377 = vadd.f32 %v1345, %v1371
      %v1378 = vadd.f32 %v1346, %v1373
      %v1379 = vadd.f32 %v1347, %v1375
      %v1380 = vld [vmem:[%s5] sm:$0xff]
      %v1381 = vld [vmem:[%s5 + $0x8] sm:$0xff]
      %v1382 = vld [vmem:[%s5 + $0x10] sm:$0xff]
      %v1383 = vld [vmem:[%s5 + $0x18] sm:$0xff]
      %v1384 = vld [vmem:[%s5 + $0x20] sm:$0xff]
      %v1385 = vld [vmem:[%s5 + $0x28] sm:$0xff]
      %v1386 = vld [vmem:[%s5 + $0x30] sm:$0xff]
      %v1387 = vld [vmem:[%s5 + $0x38] sm:$0xff]
      %v1388 = vld [vmem:[%s5 + $0x40] sm:$0xff]
      %v1389 = vld [vmem:[%s5 + $0x48] sm:$0xff]
      %v1390 = vld [vmem:[%s5 + $0x50] sm:$0xff]
      %v1391 = vld [vmem:[%s5 + $0x58] sm:$0xff]
      %v1392 = vld [vmem:[%s5 + $0x60] sm:$0xff]
      %v1393 = vld [vmem:[%s5 + $0x68] sm:$0xff]
      %v1394 = vld [vmem:[%s5 + $0x70] sm:$0xff]
      %v1395 = vld [vmem:[%s5 + $0x78] sm:$0xff]
      %v1396 = vld [vmem:[%s5 + $0x80] sm:$0xff]
      %v1397 = vld [vmem:[%s5 + $0x88] sm:$0xff]
      %v1398 = vld [vmem:[%s5 + $0x90] sm:$0xff]
      %v1399 = vld [vmem:[%s5 + $0x98] sm:$0xff]
      %v1400 = vld [vmem:[%s5 + $0xa0] sm:$0xff]
      %v1401 = vld [vmem:[%s5 + $0xa8] sm:$0xff]
      %v1402 = vld [vmem:[%s5 + $0xb0] sm:$0xff]
      %v1403 = vld [vmem:[%s5 + $0xb8] sm:$0xff]
      %v1404 = vld [vmem:[%s5 + $0xc0] sm:$0xff]
      %v1405 = vld [vmem:[%s5 + $0xc8] sm:$0xff]
      %v1406 = vld [vmem:[%s5 + $0xd0] sm:$0xff]
      %v1407 = vld [vmem:[%s5 + $0xd8] sm:$0xff]
      %v1408 = vld [vmem:[%s5 + $0xe0] sm:$0xff]
      %v1409 = vld [vmem:[%s5 + $0xe8] sm:$0xff]
      %v1410 = vld [vmem:[%s5 + $0xf0] sm:$0xff]
      %v1411 = vld [vmem:[%s5 + $0xf8] sm:$0xff]
      %v1412 = vld [vmem:[%s5 + $0x100] sm:$0xff]
      %v1413 = vld [vmem:[%s5 + $0x108] sm:$0xff]
      %v1414 = vld [vmem:[%s5 + $0x110] sm:$0xff]
      %v1415 = vld [vmem:[%s5 + $0x118] sm:$0xff]
      %v1416 = vld [vmem:[%s5 + $0x120] sm:$0xff]
      %v1417 = vld [vmem:[%s5 + $0x128] sm:$0xff]
      %v1418 = vld [vmem:[%s5 + $0x130] sm:$0xff]
      %v1419 = vld [vmem:[%s5 + $0x138] sm:$0xff]
      %v1420 = vld [vmem:[%s5 + $0x140] sm:$0xff]
      %v1421 = vld [vmem:[%s5 + $0x148] sm:$0xff]
      %v1422 = vld [vmem:[%s5 + $0x150] sm:$0xff]
      %v1423 = vld [vmem:[%s5 + $0x158] sm:$0xff]
      %v1424 = vld [vmem:[%s5 + $0x160] sm:$0xff]
      %v1425 = vld [vmem:[%s5 + $0x168] sm:$0xff]
      %v1426 = vld [vmem:[%s5 + $0x170] sm:$0xff]
      %v1427 = vld [vmem:[%s5 + $0x178] sm:$0xff]
      %v1428 = vld [vmem:[%s5 + $0x180] sm:$0xff]
      %v1429 = vld [vmem:[%s5 + $0x188] sm:$0xff]
      %v1430 = vld [vmem:[%s5 + $0x190] sm:$0xff]
      %v1431 = vld [vmem:[%s5 + $0x198] sm:$0xff]
      %v1432 = vld [vmem:[%s5 + $0x1a0] sm:$0xff]
      %v1433 = vld [vmem:[%s5 + $0x1a8] sm:$0xff]
      %v1434 = vld [vmem:[%s5 + $0x1b0] sm:$0xff]
      %v1435 = vld [vmem:[%s5 + $0x1b8] sm:$0xff]
      %v1436 = vld [vmem:[%s5 + $0x1c0] sm:$0xff]
      %v1437 = vld [vmem:[%s5 + $0x1c8] sm:$0xff]
      %v1438 = vld [vmem:[%s5 + $0x1d0] sm:$0xff]
      %v1439 = vld [vmem:[%s5 + $0x1d8] sm:$0xff]
      %v1440 = vld [vmem:[%s5 + $0x1e0] sm:$0xff]
      %v1441 = vld [vmem:[%s5 + $0x1e8] sm:$0xff]
      %v1442 = vld [vmem:[%s5 + $0x1f0] sm:$0xff]
      %v1443 = vld [vmem:[%s5 + $0x1f8] sm:$0xff]
      %v1444 = vld [vmem:[%s5 + $0x200] sm:$0xff]
      %v1445 = vld [vmem:[%s5 + $0x208] sm:$0xff]
      %v1446 = vld [vmem:[%s5 + $0x210] sm:$0xff]
      %v1447 = vld [vmem:[%s5 + $0x218] sm:$0xff]
      %v1448 = vld [vmem:[%s5 + $0x220] sm:$0xff]
      %v1449 = vld [vmem:[%s5 + $0x228] sm:$0xff]
      %v1450 = vld [vmem:[%s5 + $0x230] sm:$0xff]
      %v1451 = vld [vmem:[%s5 + $0x238] sm:$0xff]
      %v1452 = vld [vmem:[%s5 + $0x240] sm:$0xff]
      %v1453 = vld [vmem:[%s5 + $0x248] sm:$0xff]
      %v1454 = vld [vmem:[%s5 + $0x250] sm:$0xff]
      %v1455 = vld [vmem:[%s5 + $0x258] sm:$0xff]
      %v1456 = vld [vmem:[%s5 + $0x260] sm:$0xff]
      %v1457 = vld [vmem:[%s5 + $0x268] sm:$0xff]
      %v1458 = vld [vmem:[%s5 + $0x270] sm:$0xff]
      %v1459 = vld [vmem:[%s5 + $0x278] sm:$0xff]
      %v1460 = vld [vmem:[%s5 + $0x280] sm:$0xff]
      %v1461 = vld [vmem:[%s5 + $0x288] sm:$0xff]
      %v1462 = vld [vmem:[%s5 + $0x290] sm:$0xff]
      %v1463 = vld [vmem:[%s5 + $0x298] sm:$0xff]
      %v1464 = vld [vmem:[%s5 + $0x2a0] sm:$0xff]
      %v1465 = vld [vmem:[%s5 + $0x2a8] sm:$0xff]
      %v1466 = vld [vmem:[%s5 + $0x2b0] sm:$0xff]
      %v1467 = vld [vmem:[%s5 + $0x2b8] sm:$0xff]
      %v1468 = vld [vmem:[%s5 + $0x2c0] sm:$0xff]
      %v1469 = vld [vmem:[%s5 + $0x2c8] sm:$0xff]
      %v1470 = vld [vmem:[%s5 + $0x2d0] sm:$0xff]
      %v1471 = vld [vmem:[%s5 + $0x2d8] sm:$0xff]
      %v1472 = vld [vmem:[%s5 + $0x2e0] sm:$0xff]
      %v1473 = vld [vmem:[%s5 + $0x2e8] sm:$0xff]
      %v1474 = vld [vmem:[%s5 + $0x2f0] sm:$0xff]
      %v1475 = vld [vmem:[%s5 + $0x2f8] sm:$0xff]
      %v1476 = vld [vmem:[%s5 + $0x300] sm:$0xff]
      %v1477 = vld [vmem:[%s5 + $0x308] sm:$0xff]
      %v1478 = vld [vmem:[%s5 + $0x310] sm:$0xff]
      %v1479 = vld [vmem:[%s5 + $0x318] sm:$0xff]
      %v1480 = vld [vmem:[%s5 + $0x320] sm:$0xff]
      %v1481 = vld [vmem:[%s5 + $0x328] sm:$0xff]
      %v1482 = vld [vmem:[%s5 + $0x330] sm:$0xff]
      %v1483 = vld [vmem:[%s5 + $0x338] sm:$0xff]
      %v1484 = vld [vmem:[%s5 + $0x340] sm:$0xff]
      %v1485 = vld [vmem:[%s5 + $0x348] sm:$0xff]
      %v1486 = vld [vmem:[%s5 + $0x350] sm:$0xff]
      %v1487 = vld [vmem:[%s5 + $0x358] sm:$0xff]
      %v1488 = vld [vmem:[%s5 + $0x360] sm:$0xff]
      %v1489 = vld [vmem:[%s5 + $0x368] sm:$0xff]
      %v1490 = vld [vmem:[%s5 + $0x370] sm:$0xff]
      %v1491 = vld [vmem:[%s5 + $0x378] sm:$0xff]
      %v1492 = vld [vmem:[%s5 + $0x380] sm:$0xff]
      %v1493 = vld [vmem:[%s5 + $0x388] sm:$0xff]
      %v1494 = vld [vmem:[%s5 + $0x390] sm:$0xff]
      %v1495 = vld [vmem:[%s5 + $0x398] sm:$0xff]
      %v1496 = vld [vmem:[%s5 + $0x3a0] sm:$0xff]
      %v1497 = vld [vmem:[%s5 + $0x3a8] sm:$0xff]
      %v1498 = vld [vmem:[%s5 + $0x3b0] sm:$0xff]
      %v1499 = vld [vmem:[%s5 + $0x3b8] sm:$0xff]
      %v1500 = vld [vmem:[%s5 + $0x3c0] sm:$0xff]
      %v1501 = vld [vmem:[%s5 + $0x3c8] sm:$0xff]
      %v1502 = vld [vmem:[%s5 + $0x3d0] sm:$0xff]
      %v1503 = vld [vmem:[%s5 + $0x3d8] sm:$0xff]
      %v1504 = vld [vmem:[%s5 + $0x3e0] sm:$0xff]
      %v1505 = vld [vmem:[%s5 + $0x3e8] sm:$0xff]
      %v1506 = vld [vmem:[%s5 + $0x3f0] sm:$0xff]
      %v1507 = vld [vmem:[%s5 + $0x3f8] sm:$0xff]
      %1508 = vmatprep.subr.mxu0 %v1411
      %1509 = vmatpush1.msra.mxu0 %v1410
      %1510 = vmatprep.subr.mxu0 %v1409
      %1511 = vmatpush1.msra.mxu0 %v1408
      %1512 = vmatprep.subr.mxu0 %v1407
      %1513 = vmatpush1.msra.mxu0 %v1406
      %1514 = vmatprep.subr.mxu0 %v1405
      %1515 = vmatpush1.msra.mxu0 %v1404
      %1516 = vmatprep.subr.mxu0 %v1403
      %1517 = vmatpush1.msra.mxu0 %v1402
      %1518 = vmatprep.subr.mxu0 %v1401
      %1519 = vmatpush1.msra.mxu0 %v1400
      %1520 = vmatprep.subr.mxu0 %v1399
      %1521 = vmatpush1.msra.mxu0 %v1398
      %1522 = vmatprep.subr.mxu0 %v1397
      %1523 = vmatpush1.msra.mxu0 %v1396
      %1524 = vmatprep.subr.mxu0 %v1395
      %1525 = vmatpush1.msra.mxu0 %v1394
      %1526 = vmatprep.subr.mxu0 %v1393
      %1527 = vmatpush1.msra.mxu0 %v1392
      %1528 = vmatprep.subr.mxu0 %v1391
      %1529 = vmatpush1.msra.mxu0 %v1390
      %1530 = vmatprep.subr.mxu0 %v1389
      %1531 = vmatpush1.msra.mxu0 %v1388
      %1532 = vmatprep.subr.mxu0 %v1387
      %1533 = vmatpush1.msra.mxu0 %v1386
      %1534 = vmatprep.subr.mxu0 %v1385
      %1535 = vmatpush1.msra.mxu0 %v1384
      %1536 = vmatprep.subr.mxu0 %v1383
      %1537 = vmatpush1.msra.mxu0 %v1382
      %1538 = vmatprep.subr.mxu0 %v1381
      %1539 = vmatpush1.msra.mxu0 %v1380
      %1540 = vmatprep.subr.mxu0 %v1443
      %1541 = vmatpush2.msra.mxu0 %v1442
      %1542 = vmatprep.subr.mxu0 %v1441
      %1543 = vmatpush2.msra.mxu0 %v1440
      %1544 = vmatprep.subr.mxu0 %v1439
      %1545 = vmatpush2.msra.mxu0 %v1438
      %1546 = vmatprep.subr.mxu0 %v1437
      %1547 = vmatpush2.msra.mxu0 %v1436
      %1548 = vmatprep.subr.mxu0 %v1435
      %1549 = vmatpush2.msra.mxu0 %v1434
      %1550 = vmatprep.subr.mxu0 %v1433
      %1551 = vmatpush2.msra.mxu0 %v1432
      %1552 = vmatprep.subr.mxu0 %v1431
      %1553 = vmatpush2.msra.mxu0 %v1430
      %1554 = vmatprep.subr.mxu0 %v1429
      %1555 = vmatpush2.msra.mxu0 %v1428
      %1556 = vmatprep.subr.mxu0 %v1427
      %1557 = vmatpush2.msra.mxu0 %v1426
      %1558 = vmatprep.subr.mxu0 %v1425
      %1559 = vmatpush2.msra.mxu0 %v1424
      %1560 = vmatprep.subr.mxu0 %v1423
      %1561 = vmatpush2.msra.mxu0 %v1422
      %1562 = vmatprep.subr.mxu0 %v1421
      %1563 = vmatpush2.msra.mxu0 %v1420
      %1564 = vmatprep.subr.mxu0 %v1419
      %1565 = vmatpush2.msra.mxu0 %v1418
      %1566 = vmatprep.subr.mxu0 %v1417
      %1567 = vmatpush2.msra.mxu0 %v1416
      %1568 = vmatprep.subr.mxu0 %v1415
      %1569 = vmatpush2.msra.mxu0 %v1414
      %1570 = vmatprep.subr.mxu0 %v1413
      %1571 = vmatpush2.msra.mxu0 %v1412
      %1572 = vmatprep.mubr.f32.mxu0 %v1377
      %1573 = vmatmul.mubr.f32.gmra.mxu0 %v1376
      %v1574 = vpop.f32.mrf.mxu0
      %v1575 = vadd.f32 0.0, %v1574
      %v1576 = vpop.f32.mrf.mxu0
      %v1577 = vadd.f32 0.0, %v1576
      %1578 = vdwg.mxu0
      %1579 = vmatprep.subr.mxu0 %v1475
      %1580 = vmatpush1.msra.mxu0 %v1474
      %1581 = vmatprep.subr.mxu0 %v1473
      %1582 = vmatpush1.msra.mxu0 %v1472
      %1583 = vmatprep.subr.mxu0 %v1471
      %1584 = vmatpush1.msra.mxu0 %v1470
      %1585 = vmatprep.subr.mxu0 %v1469
      %1586 = vmatpush1.msra.mxu0 %v1468
      %1587 = vmatprep.subr.mxu0 %v1467
      %1588 = vmatpush1.msra.mxu0 %v1466
      %1589 = vmatprep.subr.mxu0 %v1465
      %1590 = vmatpush1.msra.mxu0 %v1464
      %1591 = vmatprep.subr.mxu0 %v1463
      %1592 = vmatpush1.msra.mxu0 %v1462
      %1593 = vmatprep.subr.mxu0 %v1461
      %1594 = vmatpush1.msra.mxu0 %v1460
      %1595 = vmatprep.subr.mxu0 %v1459
      %1596 = vmatpush1.msra.mxu0 %v1458
      %1597 = vmatprep.subr.mxu0 %v1457
      %1598 = vmatpush1.msra.mxu0 %v1456
      %1599 = vmatprep.subr.mxu0 %v1455
      %1600 = vmatpush1.msra.mxu0 %v1454
      %1601 = vmatprep.subr.mxu0 %v1453
      %1602 = vmatpush1.msra.mxu0 %v1452
      %1603 = vmatprep.subr.mxu0 %v1451
      %1604 = vmatpush1.msra.mxu0 %v1450
      %1605 = vmatprep.subr.mxu0 %v1449
      %1606 = vmatpush1.msra.mxu0 %v1448
      %1607 = vmatprep.subr.mxu0 %v1447
      %1608 = vmatpush1.msra.mxu0 %v1446
      %1609 = vmatprep.subr.mxu0 %v1445
      %1610 = vmatpush1.msra.mxu0 %v1444
      %1611 = vmatprep.subr.mxu0 %v1507
      %1612 = vmatpush2.msra.mxu0 %v1506
      %1613 = vmatprep.subr.mxu0 %v1505
      %1614 = vmatpush2.msra.mxu0 %v1504
      %1615 = vmatprep.subr.mxu0 %v1503
      %1616 = vmatpush2.msra.mxu0 %v1502
      %1617 = vmatprep.subr.mxu0 %v1501
      %1618 = vmatpush2.msra.mxu0 %v1500
      %1619 = vmatprep.subr.mxu0 %v1499
      %1620 = vmatpush2.msra.mxu0 %v1498
      %1621 = vmatprep.subr.mxu0 %v1497
      %1622 = vmatpush2.msra.mxu0 %v1496
      %1623 = vmatprep.subr.mxu0 %v1495
      %1624 = vmatpush2.msra.mxu0 %v1494
      %1625 = vmatprep.subr.mxu0 %v1493
      %1626 = vmatpush2.msra.mxu0 %v1492
      %1627 = vmatprep.subr.mxu0 %v1491
      %1628 = vmatpush2.msra.mxu0 %v1490
      %1629 = vmatprep.subr.mxu0 %v1489
      %1630 = vmatpush2.msra.mxu0 %v1488
      %1631 = vmatprep.subr.mxu0 %v1487
      %1632 = vmatpush2.msra.mxu0 %v1486
      %1633 = vmatprep.subr.mxu0 %v1485
      %1634 = vmatpush2.msra.mxu0 %v1484
      %1635 = vmatprep.subr.mxu0 %v1483
      %1636 = vmatpush2.msra.mxu0 %v1482
      %1637 = vmatprep.subr.mxu0 %v1481
      %1638 = vmatpush2.msra.mxu0 %v1480
      %1639 = vmatprep.subr.mxu0 %v1479
      %1640 = vmatpush2.msra.mxu0 %v1478
      %1641 = vmatprep.subr.mxu0 %v1477
      %1642 = vmatpush2.msra.mxu0 %v1476
      %1643 = vmatprep.mubr.f32.mxu0 %v1379
      %1644 = vmatmul.mubr.f32.gmra.mxu0 %v1378
      %v1645 = vpop.f32.mrf.mxu0
      %v1646 = vadd.f32 %v1575, %v1645
      %v1647 = vpop.f32.mrf.mxu0
      %v1648 = vadd.f32 %v1577, %v1647
      %1649 = vdwg.mxu0
      %1650 = vst [vmem:[%s345] sm:$0xff] %v1646
      %1651 = vst [vmem:[%s345 + $0x8] sm:$0xff] %v1648
      %v1652 = vld [vmem:[%s335] sm:$0xff]
      %v1654 = vcombine.high %v1652, %v1652
      %1656 = vst [vmem:[#allocation2] sm:$0xf] %v1652
      %1657 = vst [vmem:[#allocation2 + $0x8] sm:$0xf] %v1654
      %v1658 = vld [vmem:[%s335] sm:$0xff]
      %v1659 = vld [vmem:[%s335 + $0x8] sm:$0xf]
      %v1662 = vcombine.low %v1658, %v1658
      %v1663 = vcombine.low %v1659, %v1659
      %1664 = vrot.lane.b32.xlu0 %v1662, 127
      %v1665 = vpop.permute.xlu0 %1664
      %1666 = vrot.lane.b32.xlu0 %v1658, 127
      %v1667 = vpop.permute.xlu0 %1666
      %1668 = vrot.lane.b32.xlu0 %v1663, 127
      %v1669 = vpop.permute.xlu0 %1668
      %v1670 = vsel %vm377, %v1665, %v1667
      %v1671 = vsel %vm377, %v1667, %v1669
      %1674 = vst [vmem:[#allocation2] sm:$0xf0] %v1670
      %1675 = vst [vmem:[#allocation2 + $0x8] sm:$0xf0] %v1671
      %v1676 = vld [vmem:[%s335] sm:$0xff]
      %v1677 = vld [vmem:[%s335 + $0x8] sm:$0xf]
      %v1680 = vcombine.high %v1676, %v1676
      %1681 = vrot.lane.b32.xlu0 %v1676, 126
      %v1682 = vpop.permute.xlu0 %1681
      %1683 = vrot.lane.b32.xlu0 %v1680, 126
      %v1684 = vpop.permute.xlu0 %1683
      %1685 = vrot.lane.b32.xlu0 %v1677, 126
      %v1686 = vpop.permute.xlu0 %1685
      %v1687 = vsel %vm408, %v1682, %v1684
      %v1688 = vsel %vm408, %v1684, %v1686
      %1691 = vst [vmem:[#allocation2 + $0x20] sm:$0xf] %v1687
      %1692 = vst [vmem:[#allocation2 + $0x28] sm:$0xf] %v1688
      %v1693 = vld [vmem:[%s335] sm:$0xff]
      %v1694 = vld [vmem:[%s335 + $0x8] sm:$0xf]
      %v1697 = vcombine.low %v1693, %v1693
      %v1698 = vcombine.low %v1694, %v1694
      %1699 = vrot.lane.b32.xlu0 %v1697, 125
      %v1700 = vpop.permute.xlu0 %1699
      %1701 = vrot.lane.b32.xlu0 %v1693, 125
      %v1702 = vpop.permute.xlu0 %1701
      %1703 = vrot.lane.b32.xlu0 %v1698, 125
      %v1704 = vpop.permute.xlu0 %1703
      %v1705 = vsel %vm440, %v1700, %v1702
      %v1706 = vsel %vm440, %v1702, %v1704
      %1709 = vst [vmem:[#allocation2 + $0x20] sm:$0xf0] %v1705
      %1710 = vst [vmem:[#allocation2 + $0x28] sm:$0xf0] %v1706
      %v1711 = vld [vmem:[%s335] sm:$0xff]
      %v1712 = vld [vmem:[%s335 + $0x8] sm:$0xf]
      %v1715 = vcombine.high %v1711, %v1711
      %1716 = vrot.lane.b32.xlu0 %v1711, 124
      %v1717 = vpop.permute.xlu0 %1716
      %1718 = vrot.lane.b32.xlu0 %v1715, 124
      %v1719 = vpop.permute.xlu0 %1718
      %1720 = vrot.lane.b32.xlu0 %v1712, 124
      %v1721 = vpop.permute.xlu0 %1720
      %v1722 = vsel %vm471, %v1717, %v1719
      %v1723 = vsel %vm471, %v1719, %v1721
      %1726 = vst [vmem:[#allocation2 + $0x40] sm:$0xf] %v1722
      %1727 = vst [vmem:[#allocation2 + $0x48] sm:$0xf] %v1723
      %v1728 = vld [vmem:[%s335] sm:$0xff]
      %v1729 = vld [vmem:[%s335 + $0x8] sm:$0xf]
      %v1732 = vcombine.low %v1728, %v1728
      %v1733 = vcombine.low %v1729, %v1729
      %1734 = vrot.lane.b32.xlu0 %v1732, 116
      %v1735 = vpop.permute.xlu0 %1734
      %1736 = vrot.lane.b32.xlu0 %v1728, 116
      %v1737 = vpop.permute.xlu0 %1736
      %1738 = vrot.lane.b32.xlu0 %v1733, 116
      %v1739 = vpop.permute.xlu0 %1738
      %vm1740 = vcmask 949248
      %v1741 = vsel %vm1740, %v1735, %v1737
      %v1742 = vsel %vm1740, %v1737, %v1739
      %1745 = vst [vmem:[#allocation2 + $0x40] sm:$0xf0] %v1741
      %1746 = vst [vmem:[#allocation2 + $0x48] sm:$0xf0] %v1742
      %v1747 = vld [vmem:[%s335] sm:$0xff]
      %v1748 = vld [vmem:[%s335 + $0x8] sm:$0xf]
      %v1751 = vcombine.high %v1747, %v1747
      %1752 = vrot.lane.b32.xlu0 %v1747, 115
      %v1753 = vpop.permute.xlu0 %1752
      %1754 = vrot.lane.b32.xlu0 %v1751, 115
      %v1755 = vpop.permute.xlu0 %1754
      %1756 = vrot.lane.b32.xlu0 %v1748, 115
      %v1757 = vpop.permute.xlu0 %1756
      %vm1758 = vcmask 941056
      %v1759 = vsel %vm1758, %v1753, %v1755
      %v1760 = vsel %vm1758, %v1755, %v1757
      %1763 = vst [vmem:[#allocation2 + $0x60] sm:$0xf] %v1759
      %1764 = vst [vmem:[#allocation2 + $0x68] sm:$0xf] %v1760
      %v1765 = vld [vmem:[%s335] sm:$0xff]
      %v1766 = vld [vmem:[%s335 + $0x8] sm:$0xf]
      %v1769 = vcombine.low %v1765, %v1765
      %v1770 = vcombine.low %v1766, %v1766
      %1771 = vrot.lane.b32.xlu0 %v1769, 114
      %v1772 = vpop.permute.xlu0 %1771
      %1773 = vrot.lane.b32.xlu0 %v1765, 114
      %v1774 = vpop.permute.xlu0 %1773
      %1775 = vrot.lane.b32.xlu0 %v1770, 114
      %v1776 = vpop.permute.xlu0 %1775
      %vm1777 = vcmask 932864
      %v1778 = vsel %vm1777, %v1772, %v1774
      %v1779 = vsel %vm1777, %v1774, %v1776
      %1782 = vst [vmem:[#allocation2 + $0x60] sm:$0xf0] %v1778
      %1783 = vst [vmem:[#allocation2 + $0x68] sm:$0xf0] %v1779
      %v1784 = vld [vmem:[%s335] sm:$0xff]
      %v1785 = vld [vmem:[%s335 + $0x8] sm:$0xf]
      %v1788 = vcombine.high %v1784, %v1784
      %1789 = vrot.lane.b32.xlu0 %v1784, 113
      %v1790 = vpop.permute.xlu0 %1789
      %1791 = vrot.lane.b32.xlu0 %v1788, 113
      %v1792 = vpop.permute.xlu0 %1791
      %1793 = vrot.lane.b32.xlu0 %v1785, 113
      %v1794 = vpop.permute.xlu0 %1793
      %vm1795 = vcmask 924672
      %v1796 = vsel %vm1795, %v1790, %v1792
      %v1797 = vsel %vm1795, %v1792, %v1794
      %1800 = vst [vmem:[#allocation2 + $0x80] sm:$0xf] %v1796
      %1801 = vst [vmem:[#allocation2 + $0x88] sm:$0xf] %v1797
      %v1802 = vld [vmem:[%s335] sm:$0xff]
      %v1803 = vld [vmem:[%s335 + $0x8] sm:$0xf]
      %v1806 = vcombine.low %v1802, %v1802
      %v1807 = vcombine.low %v1803, %v1803
      %1808 = vrot.lane.b32.xlu0 %v1806, 112
      %v1809 = vpop.permute.xlu0 %1808
      %1810 = vrot.lane.b32.xlu0 %v1802, 112
      %v1811 = vpop.permute.xlu0 %1810
      %1812 = vrot.lane.b32.xlu0 %v1807, 112
      %v1813 = vpop.permute.xlu0 %1812
      %vm1814 = vcmask 916480
      %v1815 = vsel %vm1814, %v1809, %v1811
      %v1816 = vsel %vm1814, %v1811, %v1813
      %1819 = vst [vmem:[#allocation2 + $0x80] sm:$0xf0] %v1815
      %1820 = vst [vmem:[#allocation2 + $0x88] sm:$0xf0] %v1816
      %v1821 = vld [vmem:[%s335] sm:$0xff]
      %v1822 = vld [vmem:[%s335 + $0x8] sm:$0xf]
      %v1825 = vcombine.high %v1821, %v1821
      %1826 = vrot.lane.b32.xlu0 %v1821, 104
      %v1827 = vpop.permute.xlu0 %1826
      %1828 = vrot.lane.b32.xlu0 %v1825, 104
      %v1829 = vpop.permute.xlu0 %1828
      %1830 = vrot.lane.b32.xlu0 %v1822, 104
      %v1831 = vpop.permute.xlu0 %1830
      %v1832 = vsel %vm629, %v1827, %v1829
      %v1833 = vsel %vm629, %v1829, %v1831
      %1836 = vst [vmem:[#allocation2 + $0xa0] sm:$0xf] %v1832
      %1837 = vst [vmem:[#allocation2 + $0xa8] sm:$0xf] %v1833
      %v1838 = vld [vmem:[%s335] sm:$0xff]
      %v1839 = vld [vmem:[%s335 + $0x8] sm:$0xf]
      %v1842 = vcombine.low %v1838, %v1838
      %v1843 = vcombine.low %v1839, %v1839
      %1844 = vrot.lane.b32.xlu0 %v1842, 103
      %v1845 = vpop.permute.xlu0 %1844
      %1846 = vrot.lane.b32.xlu0 %v1838, 103
      %v1847 = vpop.permute.xlu0 %1846
      %1848 = vrot.lane.b32.xlu0 %v1843, 103
      %v1849 = vpop.permute.xlu0 %1848
      %vm1850 = vcmask 842752
      %v1851 = vsel %vm1850, %v1845, %v1847
      %v1852 = vsel %vm1850, %v1847, %v1849
      %1855 = vst [vmem:[#allocation2 + $0xa0] sm:$0xf0] %v1851
      %1856 = vst [vmem:[#allocation2 + $0xa8] sm:$0xf0] %v1852
      %v1857 = vld [vmem:[%s335] sm:$0xff]
      %v1858 = vld [vmem:[%s335 + $0x8] sm:$0xf]
      %v1861 = vcombine.high %v1857, %v1857
      %1862 = vrot.lane.b32.xlu0 %v1857, 102
      %v1863 = vpop.permute.xlu0 %1862
      %1864 = vrot.lane.b32.xlu0 %v1861, 102
      %v1865 = vpop.permute.xlu0 %1864
      %1866 = vrot.lane.b32.xlu0 %v1858, 102
      %v1867 = vpop.permute.xlu0 %1866
      %vm1868 = vcmask 834560
      %v1869 = vsel %vm1868, %v1863, %v1865
      %v1870 = vsel %vm1868, %v1865, %v1867
      %1873 = vst [vmem:[#allocation2 + $0xc0] sm:$0xf] %v1869
      %1874 = vst [vmem:[#allocation2 + $0xc8] sm:$0xf] %v1870
      %v1875 = vld [vmem:[%s335] sm:$0xff]
      %v1876 = vld [vmem:[%s335 + $0x8] sm:$0xf]
      %v1879 = vcombine.low %v1875, %v1875
      %v1880 = vcombine.low %v1876, %v1876
      %1881 = vrot.lane.b32.xlu0 %v1879, 101
      %v1882 = vpop.permute.xlu0 %1881
      %1883 = vrot.lane.b32.xlu0 %v1875, 101
      %v1884 = vpop.permute.xlu0 %1883
      %1885 = vrot.lane.b32.xlu0 %v1880, 101
      %v1886 = vpop.permute.xlu0 %1885
      %vm1887 = vcmask 826368
      %v1888 = vsel %vm1887, %v1882, %v1884
      %v1889 = vsel %vm1887, %v1884, %v1886
      %1892 = vst [vmem:[#allocation2 + $0xc0] sm:$0xf0] %v1888
      %1893 = vst [vmem:[#allocation2 + $0xc8] sm:$0xf0] %v1889
      %v1894 = vld [vmem:[%s335] sm:$0xff]
      %v1895 = vld [vmem:[%s335 + $0x8] sm:$0xf]
      %v1898 = vcombine.high %v1894, %v1894
      %1899 = vrot.lane.b32.xlu0 %v1894, 100
      %v1900 = vpop.permute.xlu0 %1899
      %1901 = vrot.lane.b32.xlu0 %v1898, 100
      %v1902 = vpop.permute.xlu0 %1901
      %1903 = vrot.lane.b32.xlu0 %v1895, 100
      %v1904 = vpop.permute.xlu0 %1903
      %v1905 = vsel %vm1167, %v1900, %v1902
      %v1906 = vsel %vm1167, %v1902, %v1904
      %1909 = vst [vmem:[#allocation2 + $0xe0] sm:$0xf] %v1905
      %1910 = vst [vmem:[#allocation2 + $0xe8] sm:$0xf] %v1906
      %v1911 = vld [vmem:[%s335] sm:$0xff]
      %v1912 = vld [vmem:[%s335 + $0x8] sm:$0xf]
      %v1915 = vcombine.low %v1911, %v1911
      %v1916 = vcombine.low %v1912, %v1912
      %1917 = vrot.lane.b32.xlu0 %v1915, 92
      %v1918 = vpop.permute.xlu0 %1917
      %1919 = vrot.lane.b32.xlu0 %v1911, 92
      %v1920 = vpop.permute.xlu0 %1919
      %1921 = vrot.lane.b32.xlu0 %v1916, 92
      %v1922 = vpop.permute.xlu0 %1921
      %vm1923 = vcmask 752640
      %v1924 = vsel %vm1923, %v1918, %v1920
      %v1925 = vsel %vm1923, %v1920, %v1922
      %1928 = vst [vmem:[#allocation2 + $0xe0] sm:$0xf0] %v1924
      %1929 = vst [vmem:[#allocation2 + $0xe8] sm:$0xf0] %v1925
      %v1930 = vld [vmem:[%s335] sm:$0xff]
      %v1931 = vld [vmem:[%s335 + $0x8] sm:$0xf]
      %v1934 = vcombine.high %v1930, %v1930
      %1935 = vrot.lane.b32.xlu0 %v1930, 91
      %v1936 = vpop.permute.xlu0 %1935
      %1937 = vrot.lane.b32.xlu0 %v1934, 91
      %v1938 = vpop.permute.xlu0 %1937
      %1939 = vrot.lane.b32.xlu0 %v1931, 91
      %v1940 = vpop.permute.xlu0 %1939
      %vm1941 = vcmask 744448
      %v1942 = vsel %vm1941, %v1936, %v1938
      %v1943 = vsel %vm1941, %v1938, %v1940
      %1946 = vst [vmem:[#allocation2 + $0x100] sm:$0xf] %v1942
      %1947 = vst [vmem:[#allocation2 + $0x108] sm:$0xf] %v1943
      %v1948 = vld [vmem:[%s335] sm:$0xff]
      %v1949 = vld [vmem:[%s335 + $0x8] sm:$0xf]
      %v1952 = vcombine.low %v1948, %v1948
      %v1953 = vcombine.low %v1949, %v1949
      %1954 = vrot.lane.b32.xlu0 %v1952, 90
      %v1955 = vpop.permute.xlu0 %1954
      %1956 = vrot.lane.b32.xlu0 %v1948, 90
      %v1957 = vpop.permute.xlu0 %1956
      %1958 = vrot.lane.b32.xlu0 %v1953, 90
      %v1959 = vpop.permute.xlu0 %1958
      %vm1960 = vcmask 736256
      %v1961 = vsel %vm1960, %v1955, %v1957
      %v1962 = vsel %vm1960, %v1957, %v1959
      %1965 = vst [vmem:[#allocation2 + $0x100] sm:$0xf0] %v1961
      %1966 = vst [vmem:[#allocation2 + $0x108] sm:$0xf0] %v1962
      %v1967 = vld [vmem:[%s335] sm:$0xff]
      %v1968 = vld [vmem:[%s335 + $0x8] sm:$0xf]
      %v1971 = vcombine.high %v1967, %v1967
      %1972 = vrot.lane.b32.xlu0 %v1967, 89
      %v1973 = vpop.permute.xlu0 %1972
      %1974 = vrot.lane.b32.xlu0 %v1971, 89
      %v1975 = vpop.permute.xlu0 %1974
      %1976 = vrot.lane.b32.xlu0 %v1968, 89
      %v1977 = vpop.permute.xlu0 %1976
      %vm1978 = vcmask 728064
      %v1979 = vsel %vm1978, %v1973, %v1975
      %v1980 = vsel %vm1978, %v1975, %v1977
      %1983 = vst [vmem:[#allocation2 + $0x120] sm:$0xf] %v1979
      %1984 = vst [vmem:[#allocation2 + $0x128] sm:$0xf] %v1980
      %v1985 = vld [vmem:[%s335] sm:$0xff]
      %v1986 = vld [vmem:[%s335 + $0x8] sm:$0xf]
      %v1989 = vcombine.low %v1985, %v1985
      %v1990 = vcombine.low %v1986, %v1986
      %1991 = vrot.lane.b32.xlu0 %v1989, 88
      %v1992 = vpop.permute.xlu0 %1991
      %1993 = vrot.lane.b32.xlu0 %v1985, 88
      %v1994 = vpop.permute.xlu0 %1993
      %1995 = vrot.lane.b32.xlu0 %v1990, 88
      %v1996 = vpop.permute.xlu0 %1995
      %v1997 = vsel %vm660, %v1992, %v1994
      %v1998 = vsel %vm660, %v1994, %v1996
      %2001 = vst [vmem:[#allocation2 + $0x120] sm:$0xf0] %v1997
      %2002 = vst [vmem:[#allocation2 + $0x128] sm:$0xf0] %v1998
      %v2003 = vld [vmem:[%s335] sm:$0xff]
      %v2004 = vld [vmem:[%s335 + $0x8] sm:$0xf]
      %v2007 = vcombine.high %v2003, %v2003
      %2008 = vrot.lane.b32.xlu0 %v2003, 80
      %v2009 = vpop.permute.xlu0 %2008
      %2010 = vrot.lane.b32.xlu0 %v2007, 80
      %v2011 = vpop.permute.xlu0 %2010
      %2012 = vrot.lane.b32.xlu0 %v2004, 80
      %v2013 = vpop.permute.xlu0 %2012
      %vm2014 = vcmask 654336
      %v2015 = vsel %vm2014, %v2009, %v2011
      %v2016 = vsel %vm2014, %v2011, %v2013
      %2019 = vst [vmem:[#allocation2 + $0x140] sm:$0xf] %v2015
      %2020 = vst [vmem:[#allocation2 + $0x148] sm:$0xf] %v2016
      %v2021 = vld [vmem:[%s335] sm:$0xff]
      %v2022 = vld [vmem:[%s335 + $0x8] sm:$0xf]
      %v2025 = vcombine.low %v2021, %v2021
      %v2026 = vcombine.low %v2022, %v2022
      %2027 = vrot.lane.b32.xlu0 %v2025, 79
      %v2028 = vpop.permute.xlu0 %2027
      %2029 = vrot.lane.b32.xlu0 %v2021, 79
      %v2030 = vpop.permute.xlu0 %2029
      %2031 = vrot.lane.b32.xlu0 %v2026, 79
      %v2032 = vpop.permute.xlu0 %2031
      %vm2033 = vcmask 646144
      %v2034 = vsel %vm2033, %v2028, %v2030
      %v2035 = vsel %vm2033, %v2030, %v2032
      %2038 = vst [vmem:[#allocation2 + $0x140] sm:$0xf0] %v2034
      %2039 = vst [vmem:[#allocation2 + $0x148] sm:$0xf0] %v2035
      %v2040 = vld [vmem:[%s335] sm:$0xff]
      %v2041 = vld [vmem:[%s335 + $0x8] sm:$0xf]
      %v2044 = vcombine.high %v2040, %v2040
      %2045 = vrot.lane.b32.xlu0 %v2040, 78
      %v2046 = vpop.permute.xlu0 %2045
      %2047 = vrot.lane.b32.xlu0 %v2044, 78
      %v2048 = vpop.permute.xlu0 %2047
      %2049 = vrot.lane.b32.xlu0 %v2041, 78
      %v2050 = vpop.permute.xlu0 %2049
      %vm2051 = vcmask 637952
      %v2052 = vsel %vm2051, %v2046, %v2048
      %v2053 = vsel %vm2051, %v2048, %v2050
      %2056 = vst [vmem:[#allocation2 + $0x160] sm:$0xf] %v2052
      %2057 = vst [vmem:[#allocation2 + $0x168] sm:$0xf] %v2053
      %v2058 = vld [vmem:[%s335] sm:$0xff]
      %v2059 = vld [vmem:[%s335 + $0x8] sm:$0xf]
      %v2062 = vcombine.low %v2058, %v2058
      %v2063 = vcombine.low %v2059, %v2059
      %2064 = vrot.lane.b32.xlu0 %v2062, 77
      %v2065 = vpop.permute.xlu0 %2064
      %2066 = vrot.lane.b32.xlu0 %v2058, 77
      %v2067 = vpop.permute.xlu0 %2066
      %2068 = vrot.lane.b32.xlu0 %v2063, 77
      %v2069 = vpop.permute.xlu0 %2068
      %vm2070 = vcmask 629760
      %v2071 = vsel %vm2070, %v2065, %v2067
      %v2072 = vsel %vm2070, %v2067, %v2069
      %2075 = vst [vmem:[#allocation2 + $0x160] sm:$0xf0] %v2071
      %2076 = vst [vmem:[#allocation2 + $0x168] sm:$0xf0] %v2072
      %v2077 = vld [vmem:[%s335] sm:$0xff]
      %v2078 = vld [vmem:[%s335 + $0x8] sm:$0xf]
      %v2081 = vcombine.high %v2077, %v2077
      %2082 = vrot.lane.b32.xlu0 %v2077, 76
      %v2083 = vpop.permute.xlu0 %2082
      %2084 = vrot.lane.b32.xlu0 %v2081, 76
      %v2085 = vpop.permute.xlu0 %2084
      %2086 = vrot.lane.b32.xlu0 %v2078, 76
      %v2087 = vpop.permute.xlu0 %2086
      %vm2088 = vcmask 621568
      %v2089 = vsel %vm2088, %v2083, %v2085
      %v2090 = vsel %vm2088, %v2085, %v2087
      %2093 = vst [vmem:[#allocation2 + $0x180] sm:$0xf] %v2089
      %2094 = vst [vmem:[#allocation2 + $0x188] sm:$0xf] %v2090
      %s2095 = scalar_lea.vmem %s3, 8
      %v2096 = vld [vmem:[%s2095] sm:$0xff]
      %v2097 = vld [vmem:[#allocation2] sm:$0xff]
      %v2098 = vld [vmem:[#allocation2 + $0x8] sm:$0xff]
      %v2099 = vld [vmem:[#allocation2 + $0x20] sm:$0xff]
      %v2100 = vld [vmem:[#allocation2 + $0x28] sm:$0xff]
      %v2101 = vld [vmem:[#allocation2 + $0x40] sm:$0xff]
      %v2102 = vld [vmem:[#allocation2 + $0x48] sm:$0xff]
      %v2103 = vld [vmem:[#allocation2 + $0x60] sm:$0xff]
      %v2104 = vld [vmem:[#allocation2 + $0x68] sm:$0xff]
      %v2105 = vld [vmem:[#allocation2 + $0x80] sm:$0xff]
      %v2106 = vld [vmem:[#allocation2 + $0x88] sm:$0xff]
      %v2107 = vld [vmem:[#allocation2 + $0xa0] sm:$0xff]
      %v2108 = vld [vmem:[#allocation2 + $0xa8] sm:$0xff]
      %v2109 = vld [vmem:[#allocation2 + $0xc0] sm:$0xff]
      %v2110 = vld [vmem:[#allocation2 + $0xc8] sm:$0xff]
      %v2111 = vld [vmem:[#allocation2 + $0xe0] sm:$0xff]
      %v2112 = vld [vmem:[#allocation2 + $0xe8] sm:$0xff]
      %v2113 = vld [vmem:[#allocation2 + $0x100] sm:$0xff]
      %v2114 = vld [vmem:[#allocation2 + $0x108] sm:$0xff]
      %v2115 = vld [vmem:[#allocation2 + $0x120] sm:$0xff]
      %v2116 = vld [vmem:[#allocation2 + $0x128] sm:$0xff]
      %v2117 = vld [vmem:[#allocation2 + $0x140] sm:$0xff]
      %v2118 = vld [vmem:[#allocation2 + $0x148] sm:$0xff]
      %v2119 = vld [vmem:[#allocation2 + $0x160] sm:$0xff]
      %v2120 = vld [vmem:[#allocation2 + $0x168] sm:$0xff]
      %v2121 = vld [vmem:[#allocation2 + $0x180] sm:$0xf]
      %v2122 = vld [vmem:[#allocation2 + $0x188] sm:$0xf]
      %v2124 = vsel %vm1167, %v2096, 0
      %v2127 = vsel %vm1171, %v2121, 0
      %v2130 = vsel %vm1171, %v2122, 0
      %2132 = vmatprep.subr.mxu0 0.0
      %2133 = vmatpush1.msra.mxu0 0.0
      %2134 = vmatprep.subr.mxu0 0.0
      %2135 = vmatpush1.msra.mxu0 0.0
      %2136 = vmatprep.subr.mxu0 0.0
      %2137 = vmatpush1.msra.mxu0 0.0
      %2138 = vmatprep.subr.mxu0 %v2130
      %2139 = vmatpush1.msra.mxu0 %v2127
      %2140 = vmatprep.subr.mxu0 %v2120
      %2141 = vmatpush1.msra.mxu0 %v2119
      %2142 = vmatprep.subr.mxu0 %v2118
      %2143 = vmatpush1.msra.mxu0 %v2117
      %2144 = vmatprep.subr.mxu0 %v2116
      %2145 = vmatpush1.msra.mxu0 %v2115
      %2146 = vmatprep.subr.mxu0 %v2114
      %2147 = vmatpush1.msra.mxu0 %v2113
      %2148 = vmatprep.subr.mxu0 %v2112
      %2149 = vmatpush1.msra.mxu0 %v2111
      %2150 = vmatprep.subr.mxu0 %v2110
      %2151 = vmatpush1.msra.mxu0 %v2109
      %2152 = vmatprep.subr.mxu0 %v2108
      %2153 = vmatpush1.msra.mxu0 %v2107
      %2154 = vmatprep.subr.mxu0 %v2106
      %2155 = vmatpush1.msra.mxu0 %v2105
      %2156 = vmatprep.subr.mxu0 %v2104
      %2157 = vmatpush1.msra.mxu0 %v2103
      %2158 = vmatprep.subr.mxu0 %v2102
      %2159 = vmatpush1.msra.mxu0 %v2101
      %2160 = vmatprep.subr.mxu0 %v2100
      %2161 = vmatpush1.msra.mxu0 %v2099
      %2162 = vmatprep.subr.mxu0 %v2098
      %2163 = vmatpush1.msra.mxu0 %v2097
      %2164 = vmatprep.subr.mxu0 0.0
      %2165 = vmatpush2.msra.mxu0 0.0
      %2166 = vmatprep.subr.mxu0 0.0
      %2167 = vmatpush2.msra.mxu0 0.0
      %2168 = vmatprep.subr.mxu0 0.0
      %2169 = vmatpush2.msra.mxu0 0.0
      %2170 = vmatprep.subr.mxu0 0.0
      %2171 = vmatpush2.msra.mxu0 0.0
      %2172 = vmatprep.subr.mxu0 0.0
      %2173 = vmatpush2.msra.mxu0 0.0
      %2174 = vmatprep.subr.mxu0 0.0
      %2175 = vmatpush2.msra.mxu0 0.0
      %2176 = vmatprep.subr.mxu0 0.0
      %2177 = vmatpush2.msra.mxu0 0.0
      %2178 = vmatprep.subr.mxu0 0.0
      %2179 = vmatpush2.msra.mxu0 0.0
      %2180 = vmatprep.subr.mxu0 0.0
      %2181 = vmatpush2.msra.mxu0 0.0
      %2182 = vmatprep.subr.mxu0 0.0
      %2183 = vmatpush2.msra.mxu0 0.0
      %2184 = vmatprep.subr.mxu0 0.0
      %2185 = vmatpush2.msra.mxu0 0.0
      %2186 = vmatprep.subr.mxu0 0.0
      %2187 = vmatpush2.msra.mxu0 0.0
      %2188 = vmatprep.subr.mxu0 0.0
      %2189 = vmatpush2.msra.mxu0 0.0
      %2190 = vmatprep.subr.mxu0 0.0
      %2191 = vmatpush2.msra.mxu0 0.0
      %2192 = vmatprep.subr.mxu0 0.0
      %2193 = vmatpush2.msra.mxu0 0.0
      %2194 = vmatprep.subr.mxu0 0.0
      %2195 = vmatpush2.msra.mxu0 0.0
      %2196 = vmatprep.mubr.f32.mxu0 0.0
      %2197 = vmatmul.mubr.f32.gmra.mxu0 %v2124
      %v2198 = vpop.f32.mrf.mxu0
      %v2199 = vadd.f32 0.0, %v2198
      %v2200 = vpop.f32.mrf.mxu0
      %v2201 = vadd.f32 0.0, %v2200
      %2202 = vdwg.mxu0
      %2203 = vst [vmem:[#allocation3] sm:$0xff] %v2199
      %2204 = vst [vmem:[#allocation3 + $0x8] sm:$0xff] %v2201
      %v2205 = vld [vmem:[#allocation3] sm:$0xff]
      %v2206 = vld [vmem:[#allocation3 + $0x8] sm:$0xff]
      %s2207 = scalar_lea.vmem %s4, 8
      %v2208 = vld [vmem:[%s2207] sm:$0xff]
      %2210 = vset.pattern.permute.xlu0 0
      %2211 = vperm.xlu0 %2210, %v2208
      %v2212 = vpop.permute.xlu0 %2211
      %v2214 = vadd.f32 %v2205, %v2212
      %v2215 = vadd.f32 %v2206, %v2212
      %v2216 = vmax.f32 %v2214, 0.0
      %v2217 = vmax.f32 %v2215, 0.0
      %v2218 = vand.u32 2147483647, %v2214
      %v2219 = vand.u32 2147483647, %v2215
      %v2220 = vsub.f32 0.0, %v2218
      %v2221 = vsub.f32 0.0, %v2219
      %v2222 = vmul.f32 %v2220, 1.442695
      %v2223 = vpow.pop %v2222
      %v2224 = vmul.f32 %v2221, 1.442695
      %v2225 = vpow.pop %v2224
      %v2226 = vadd.f32 %v2223, 1.0
      %v2227 = vadd.f32 %v2225, 1.0
      %v2228 = vlog2.pop %v2226
      %v2229 = vmul.f32 %v2228, 0.6931472
      %v2230 = vlog2.pop %v2227
      %v2231 = vmul.f32 %v2230, 0.6931472
      %v2232 = vadd.f32 %v2216, %v2229
      %v2233 = vadd.f32 %v2217, %v2231
      %v2234 = vld [vmem:[%s6] sm:$0xff]
      %v2235 = vld [vmem:[%s6 + $0x8] sm:$0xff]
      %v2236 = vld [vmem:[%s6 + $0x10] sm:$0xff]
      %v2237 = vld [vmem:[%s6 + $0x18] sm:$0xff]
      %v2238 = vld [vmem:[%s6 + $0x20] sm:$0xff]
      %v2239 = vld [vmem:[%s6 + $0x28] sm:$0xff]
      %v2240 = vld [vmem:[%s6 + $0x30] sm:$0xff]
      %v2241 = vld [vmem:[%s6 + $0x38] sm:$0xff]
      %v2242 = vld [vmem:[%s6 + $0x40] sm:$0xff]
      %v2243 = vld [vmem:[%s6 + $0x48] sm:$0xff]
      %v2244 = vld [vmem:[%s6 + $0x50] sm:$0xff]
      %v2245 = vld [vmem:[%s6 + $0x58] sm:$0xff]
      %v2246 = vld [vmem:[%s6 + $0x60] sm:$0xff]
      %v2247 = vld [vmem:[%s6 + $0x68] sm:$0xff]
      %v2248 = vld [vmem:[%s6 + $0x70] sm:$0xff]
      %v2249 = vld [vmem:[%s6 + $0x78] sm:$0xff]
      %v2250 = vld [vmem:[%s6 + $0x80] sm:$0xff]
      %v2251 = vld [vmem:[%s6 + $0x88] sm:$0xff]
      %v2252 = vld [vmem:[%s6 + $0x90] sm:$0xff]
      %v2253 = vld [vmem:[%s6 + $0x98] sm:$0xff]
      %v2254 = vld [vmem:[%s6 + $0xa0] sm:$0xff]
      %v2255 = vld [vmem:[%s6 + $0xa8] sm:$0xff]
      %v2256 = vld [vmem:[%s6 + $0xb0] sm:$0xff]
      %v2257 = vld [vmem:[%s6 + $0xb8] sm:$0xff]
      %v2258 = vld [vmem:[%s6 + $0xc0] sm:$0xff]
      %v2259 = vld [vmem:[%s6 + $0xc8] sm:$0xff]
      %v2260 = vld [vmem:[%s6 + $0xd0] sm:$0xff]
      %v2261 = vld [vmem:[%s6 + $0xd8] sm:$0xff]
      %v2262 = vld [vmem:[%s6 + $0xe0] sm:$0xff]
      %v2263 = vld [vmem:[%s6 + $0xe8] sm:$0xff]
      %v2264 = vld [vmem:[%s6 + $0xf0] sm:$0xff]
      %v2265 = vld [vmem:[%s6 + $0xf8] sm:$0xff]
      %v2266 = vld [vmem:[%s6 + $0x100] sm:$0xff]
      %v2267 = vld [vmem:[%s6 + $0x108] sm:$0xff]
      %v2268 = vld [vmem:[%s6 + $0x110] sm:$0xff]
      %v2269 = vld [vmem:[%s6 + $0x118] sm:$0xff]
      %v2270 = vld [vmem:[%s6 + $0x120] sm:$0xff]
      %v2271 = vld [vmem:[%s6 + $0x128] sm:$0xff]
      %v2272 = vld [vmem:[%s6 + $0x130] sm:$0xff]
      %v2273 = vld [vmem:[%s6 + $0x138] sm:$0xff]
      %v2274 = vld [vmem:[%s6 + $0x140] sm:$0xff]
      %v2275 = vld [vmem:[%s6 + $0x148] sm:$0xff]
      %v2276 = vld [vmem:[%s6 + $0x150] sm:$0xff]
      %v2277 = vld [vmem:[%s6 + $0x158] sm:$0xff]
      %v2278 = vld [vmem:[%s6 + $0x160] sm:$0xff]
      %v2279 = vld [vmem:[%s6 + $0x168] sm:$0xff]
      %v2280 = vld [vmem:[%s6 + $0x170] sm:$0xff]
      %v2281 = vld [vmem:[%s6 + $0x178] sm:$0xff]
      %v2282 = vld [vmem:[%s6 + $0x180] sm:$0xff]
      %v2283 = vld [vmem:[%s6 + $0x188] sm:$0xff]
      %v2284 = vld [vmem:[%s6 + $0x190] sm:$0xff]
      %v2285 = vld [vmem:[%s6 + $0x198] sm:$0xff]
      %v2286 = vld [vmem:[%s6 + $0x1a0] sm:$0xff]
      %v2287 = vld [vmem:[%s6 + $0x1a8] sm:$0xff]
      %v2288 = vld [vmem:[%s6 + $0x1b0] sm:$0xff]
      %v2289 = vld [vmem:[%s6 + $0x1b8] sm:$0xff]
      %v2290 = vld [vmem:[%s6 + $0x1c0] sm:$0xff]
      %v2291 = vld [vmem:[%s6 + $0x1c8] sm:$0xff]
      %v2292 = vld [vmem:[%s6 + $0x1d0] sm:$0xff]
      %v2293 = vld [vmem:[%s6 + $0x1d8] sm:$0xff]
      %v2294 = vld [vmem:[%s6 + $0x1e0] sm:$0xff]
      %v2295 = vld [vmem:[%s6 + $0x1e8] sm:$0xff]
      %v2296 = vld [vmem:[%s6 + $0x1f0] sm:$0xff]
      %v2297 = vld [vmem:[%s6 + $0x1f8] sm:$0xff]
      %2298 = vmatprep.subr.mxu0 %v2265
      %2299 = vmatpush1.msra.mxu0 %v2264
      %2300 = vmatprep.subr.mxu0 %v2263
      %2301 = vmatpush1.msra.mxu0 %v2262
      %2302 = vmatprep.subr.mxu0 %v2261
      %2303 = vmatpush1.msra.mxu0 %v2260
      %2304 = vmatprep.subr.mxu0 %v2259
      %2305 = vmatpush1.msra.mxu0 %v2258
      %2306 = vmatprep.subr.mxu0 %v2257
      %2307 = vmatpush1.msra.mxu0 %v2256
      %2308 = vmatprep.subr.mxu0 %v2255
      %2309 = vmatpush1.msra.mxu0 %v2254
      %2310 = vmatprep.subr.mxu0 %v2253
      %2311 = vmatpush1.msra.mxu0 %v2252
      %2312 = vmatprep.subr.mxu0 %v2251
      %2313 = vmatpush1.msra.mxu0 %v2250
      %2314 = vmatprep.subr.mxu0 %v2249
      %2315 = vmatpush1.msra.mxu0 %v2248
      %2316 = vmatprep.subr.mxu0 %v2247
      %2317 = vmatpush1.msra.mxu0 %v2246
      %2318 = vmatprep.subr.mxu0 %v2245
      %2319 = vmatpush1.msra.mxu0 %v2244
      %2320 = vmatprep.subr.mxu0 %v2243
      %2321 = vmatpush1.msra.mxu0 %v2242
      %2322 = vmatprep.subr.mxu0 %v2241
      %2323 = vmatpush1.msra.mxu0 %v2240
      %2324 = vmatprep.subr.mxu0 %v2239
      %2325 = vmatpush1.msra.mxu0 %v2238
      %2326 = vmatprep.subr.mxu0 %v2237
      %2327 = vmatpush1.msra.mxu0 %v2236
      %2328 = vmatprep.subr.mxu0 %v2235
      %2329 = vmatpush1.msra.mxu0 %v2234
      %2330 = vmatprep.subr.mxu0 %v2297
      %2331 = vmatpush2.msra.mxu0 %v2296
      %2332 = vmatprep.subr.mxu0 %v2295
      %2333 = vmatpush2.msra.mxu0 %v2294
      %2334 = vmatprep.subr.mxu0 %v2293
      %2335 = vmatpush2.msra.mxu0 %v2292
      %2336 = vmatprep.subr.mxu0 %v2291
      %2337 = vmatpush2.msra.mxu0 %v2290
      %2338 = vmatprep.subr.mxu0 %v2289
      %2339 = vmatpush2.msra.mxu0 %v2288
      %2340 = vmatprep.subr.mxu0 %v2287
      %2341 = vmatpush2.msra.mxu0 %v2286
      %2342 = vmatprep.subr.mxu0 %v2285
      %2343 = vmatpush2.msra.mxu0 %v2284
      %2344 = vmatprep.subr.mxu0 %v2283
      %2345 = vmatpush2.msra.mxu0 %v2282
      %2346 = vmatprep.subr.mxu0 %v2281
      %2347 = vmatpush2.msra.mxu0 %v2280
      %2348 = vmatprep.subr.mxu0 %v2279
      %2349 = vmatpush2.msra.mxu0 %v2278
      %2350 = vmatprep.subr.mxu0 %v2277
      %2351 = vmatpush2.msra.mxu0 %v2276
      %2352 = vmatprep.subr.mxu0 %v2275
      %2353 = vmatpush2.msra.mxu0 %v2274
      %2354 = vmatprep.subr.mxu0 %v2273
      %2355 = vmatpush2.msra.mxu0 %v2272
      %2356 = vmatprep.subr.mxu0 %v2271
      %2357 = vmatpush2.msra.mxu0 %v2270
      %2358 = vmatprep.subr.mxu0 %v2269
      %2359 = vmatpush2.msra.mxu0 %v2268
      %2360 = vmatprep.subr.mxu0 %v2267
      %2361 = vmatpush2.msra.mxu0 %v2266
      %2362 = vmatprep.mubr.f32.mxu0 %v2233
      %2363 = vmatmul.mubr.f32.gmra.mxu0 %v2232
      %v2364 = vpop.f32.mrf.mxu0
      %v2365 = vadd.f32 0.0, %v2364
      %v2366 = vpop.f32.mrf.mxu0
      %v2367 = vadd.f32 0.0, %v2366
      %2368 = vdwg.mxu0
      %v2369 = vld [vmem:[%s345] sm:$0xff]
      %v2370 = vld [vmem:[%s345 + $0x8] sm:$0xff]
      %v2371 = vadd.f32 %v2369, %v2365
      %v2372 = vadd.f32 %v2370, %v2367
      %2373 = vst [vmem:[%s345] sm:$0xff] %v2371
      %2374 = vst [vmem:[%s345 + $0x8] sm:$0xff] %v2372
      %v2375 = vld [vmem:[%s340] sm:$0xf]
      %2376 = vst [vmem:[#allocation2] sm:$0xf] %v2375
      %v2377 = vld [vmem:[%s340] sm:$0xff]
      %v2379 = vcombine.low %v2377, %v2377
      %2380 = vrot.lane.b32.xlu0 %v2379, 127
      %v2381 = vpop.permute.xlu0 %2380
      %2382 = vrot.lane.b32.xlu0 %v2377, 127
      %v2383 = vpop.permute.xlu0 %2382
      %v2384 = vsel %vm377, %v2381, %v2383
      %2386 = vst [vmem:[#allocation2] sm:$0xf0] %v2384
      %v2387 = vld [vmem:[%s340] sm:$0xff]
      %v2389 = vcombine.high %v2387, %v2387
      %2390 = vrot.lane.b32.xlu0 %v2387, 126
      %v2391 = vpop.permute.xlu0 %2390
      %2392 = vrot.lane.b32.xlu0 %v2389, 126
      %v2393 = vpop.permute.xlu0 %2392
      %v2394 = vsel %vm408, %v2391, %v2393
      %2396 = vst [vmem:[#allocation2 + $0x20] sm:$0xf] %v2394
      %v2397 = vld [vmem:[%s340] sm:$0xff]
      %v2399 = vcombine.low %v2397, %v2397
      %2400 = vrot.lane.b32.xlu0 %v2399, 125
      %v2401 = vpop.permute.xlu0 %2400
      %2402 = vrot.lane.b32.xlu0 %v2397, 125
      %v2403 = vpop.permute.xlu0 %2402
      %v2404 = vsel %vm440, %v2401, %v2403
      %2406 = vst [vmem:[#allocation2 + $0x20] sm:$0xf0] %v2404
      %v2407 = vld [vmem:[%s340] sm:$0xff]
      %v2409 = vcombine.high %v2407, %v2407
      %2410 = vrot.lane.b32.xlu0 %v2407, 124
      %v2411 = vpop.permute.xlu0 %2410
      %2412 = vrot.lane.b32.xlu0 %v2409, 124
      %v2413 = vpop.permute.xlu0 %2412
      %v2414 = vsel %vm471, %v2411, %v2413
      %2416 = vst [vmem:[#allocation2 + $0x40] sm:$0xf] %v2414
      %v2417 = vld [vmem:[%s340] sm:$0xff]
      %v2419 = vcombine.low %v2417, %v2417
      %2420 = vrot.lane.b32.xlu0 %v2419, 120
      %v2421 = vpop.permute.xlu0 %2420
      %2422 = vrot.lane.b32.xlu0 %v2417, 120
      %v2423 = vpop.permute.xlu0 %2422
      %vm2424 = vcmask 982016
      %v2425 = vsel %vm2424, %v2421, %v2423
      %2427 = vst [vmem:[#allocation2 + $0x40] sm:$0xf0] %v2425
      %v2428 = vld [vmem:[%s340] sm:$0xff]
      %v2430 = vcombine.high %v2428, %v2428
      %2431 = vrot.lane.b32.xlu0 %v2428, 119
      %v2432 = vpop.permute.xlu0 %2431
      %2433 = vrot.lane.b32.xlu0 %v2430, 119
      %v2434 = vpop.permute.xlu0 %2433
      %vm2435 = vcmask 973824
      %v2436 = vsel %vm2435, %v2432, %v2434
      %2438 = vst [vmem:[#allocation2 + $0x60] sm:$0xf] %v2436
      %v2439 = vld [vmem:[%s340] sm:$0xff]
      %v2441 = vcombine.low %v2439, %v2439
      %2442 = vrot.lane.b32.xlu0 %v2441, 118
      %v2443 = vpop.permute.xlu0 %2442
      %2444 = vrot.lane.b32.xlu0 %v2439, 118
      %v2445 = vpop.permute.xlu0 %2444
      %vm2446 = vcmask 965632
      %v2447 = vsel %vm2446, %v2443, %v2445
      %2449 = vst [vmem:[#allocation2 + $0x60] sm:$0xf0] %v2447
      %v2450 = vld [vmem:[%s340] sm:$0xff]
      %v2452 = vcombine.high %v2450, %v2450
      %2453 = vrot.lane.b32.xlu0 %v2450, 117
      %v2454 = vpop.permute.xlu0 %2453
      %2455 = vrot.lane.b32.xlu0 %v2452, 117
      %v2456 = vpop.permute.xlu0 %2455
      %vm2457 = vcmask 957440
      %v2458 = vsel %vm2457, %v2454, %v2456
      %2460 = vst [vmem:[#allocation2 + $0x80] sm:$0xf] %v2458
      %v2461 = vld [vmem:[%s340] sm:$0xff]
      %v2463 = vcombine.low %v2461, %v2461
      %2464 = vrot.lane.b32.xlu0 %v2463, 116
      %v2465 = vpop.permute.xlu0 %2464
      %2466 = vrot.lane.b32.xlu0 %v2461, 116
      %v2467 = vpop.permute.xlu0 %2466
      %v2468 = vsel %vm1740, %v2465, %v2467
      %2470 = vst [vmem:[#allocation2 + $0x80] sm:$0xf0] %v2468
      %v2471 = vld [vmem:[%s340] sm:$0xff]
      %v2473 = vcombine.high %v2471, %v2471
      %2474 = vrot.lane.b32.xlu0 %v2471, 112
      %v2475 = vpop.permute.xlu0 %2474
      %2476 = vrot.lane.b32.xlu0 %v2473, 112
      %v2477 = vpop.permute.xlu0 %2476
      %v2478 = vsel %vm1814, %v2475, %v2477
      %2480 = vst [vmem:[#allocation2 + $0xa0] sm:$0xf] %v2478
      %v2481 = vld [vmem:[%s340] sm:$0xff]
      %v2483 = vcombine.low %v2481, %v2481
      %2484 = vrot.lane.b32.xlu0 %v2483, 111
      %v2485 = vpop.permute.xlu0 %2484
      %2486 = vrot.lane.b32.xlu0 %v2481, 111
      %v2487 = vpop.permute.xlu0 %2486
      %vm2488 = vcmask 908288
      %v2489 = vsel %vm2488, %v2485, %v2487
      %2491 = vst [vmem:[#allocation2 + $0xa0] sm:$0xf0] %v2489
      %v2492 = vld [vmem:[%s340] sm:$0xff]
      %v2494 = vcombine.high %v2492, %v2492
      %2495 = vrot.lane.b32.xlu0 %v2492, 110
      %v2496 = vpop.permute.xlu0 %2495
      %2497 = vrot.lane.b32.xlu0 %v2494, 110
      %v2498 = vpop.permute.xlu0 %2497
      %vm2499 = vcmask 900096
      %v2500 = vsel %vm2499, %v2496, %v2498
      %2502 = vst [vmem:[#allocation2 + $0xc0] sm:$0xf] %v2500
      %v2503 = vld [vmem:[%s340] sm:$0xff]
      %v2505 = vcombine.low %v2503, %v2503
      %2506 = vrot.lane.b32.xlu0 %v2505, 109
      %v2507 = vpop.permute.xlu0 %2506
      %2508 = vrot.lane.b32.xlu0 %v2503, 109
      %v2509 = vpop.permute.xlu0 %2508
      %vm2510 = vcmask 891904
      %v2511 = vsel %vm2510, %v2507, %v2509
      %2513 = vst [vmem:[#allocation2 + $0xc0] sm:$0xf0] %v2511
      %v2514 = vld [vmem:[%s340] sm:$0xff]
      %v2516 = vcombine.high %v2514, %v2514
      %2517 = vrot.lane.b32.xlu0 %v2514, 108
      %v2518 = vpop.permute.xlu0 %2517
      %2519 = vrot.lane.b32.xlu0 %v2516, 108
      %v2520 = vpop.permute.xlu0 %2519
      %v2521 = vsel %vm503, %v2518, %v2520
      %2523 = vst [vmem:[#allocation2 + $0xe0] sm:$0xf] %v2521
      %v2524 = vld [vmem:[%s340] sm:$0xff]
      %v2526 = vcombine.low %v2524, %v2524
      %2527 = vrot.lane.b32.xlu0 %v2526, 104
      %v2528 = vpop.permute.xlu0 %2527
      %2529 = vrot.lane.b32.xlu0 %v2524, 104
      %v2530 = vpop.permute.xlu0 %2529
      %v2531 = vsel %vm629, %v2528, %v2530
      %2533 = vst [vmem:[#allocation2 + $0xe0] sm:$0xf0] %v2531
      %v2534 = vld [vmem:[%s340] sm:$0xff]
      %v2536 = vcombine.high %v2534, %v2534
      %2537 = vrot.lane.b32.xlu0 %v2534, 103
      %v2538 = vpop.permute.xlu0 %2537
      %2539 = vrot.lane.b32.xlu0 %v2536, 103
      %v2540 = vpop.permute.xlu0 %2539
      %v2541 = vsel %vm1850, %v2538, %v2540
      %2543 = vst [vmem:[#allocation2 + $0x100] sm:$0xf] %v2541
      %v2544 = vld [vmem:[%s340] sm:$0xff]
      %v2546 = vcombine.low %v2544, %v2544
      %2547 = vrot.lane.b32.xlu0 %v2546, 102
      %v2548 = vpop.permute.xlu0 %2547
      %2549 = vrot.lane.b32.xlu0 %v2544, 102
      %v2550 = vpop.permute.xlu0 %2549
      %v2551 = vsel %vm1868, %v2548, %v2550
      %2553 = vst [vmem:[#allocation2 + $0x100] sm:$0xf0] %v2551
      %v2554 = vld [vmem:[%s340] sm:$0xff]
      %v2556 = vcombine.high %v2554, %v2554
      %2557 = vrot.lane.b32.xlu0 %v2554, 101
      %v2558 = vpop.permute.xlu0 %2557
      %2559 = vrot.lane.b32.xlu0 %v2556, 101
      %v2560 = vpop.permute.xlu0 %2559
      %v2561 = vsel %vm1887, %v2558, %v2560
      %2563 = vst [vmem:[#allocation2 + $0x120] sm:$0xf] %v2561
      %v2564 = vld [vmem:[%s340] sm:$0xff]
      %v2566 = vcombine.low %v2564, %v2564
      %2567 = vrot.lane.b32.xlu0 %v2566, 100
      %v2568 = vpop.permute.xlu0 %2567
      %2569 = vrot.lane.b32.xlu0 %v2564, 100
      %v2570 = vpop.permute.xlu0 %2569
      %v2571 = vsel %vm1167, %v2568, %v2570
      %2573 = vst [vmem:[#allocation2 + $0x120] sm:$0xf0] %v2571
      %v2574 = vld [vmem:[%s340] sm:$0xff]
      %v2576 = vcombine.high %v2574, %v2574
      %2577 = vrot.lane.b32.xlu0 %v2574, 96
      %v2578 = vpop.permute.xlu0 %2577
      %2579 = vrot.lane.b32.xlu0 %v2576, 96
      %v2580 = vpop.permute.xlu0 %2579
      %vm2581 = vcmask 785408
      %v2582 = vsel %vm2581, %v2578, %v2580
      %2584 = vst [vmem:[#allocation2 + $0x140] sm:$0xf] %v2582
      %v2585 = vld [vmem:[%s340] sm:$0xff]
      %v2587 = vcombine.low %v2585, %v2585
      %2588 = vrot.lane.b32.xlu0 %v2587, 95
      %v2589 = vpop.permute.xlu0 %2588
      %2590 = vrot.lane.b32.xlu0 %v2585, 95
      %v2591 = vpop.permute.xlu0 %2590
      %vm2592 = vcmask 777216
      %v2593 = vsel %vm2592, %v2589, %v2591
      %2595 = vst [vmem:[#allocation2 + $0x140] sm:$0xf0] %v2593
      %v2596 = vld [vmem:[%s340] sm:$0xff]
      %v2598 = vcombine.high %v2596, %v2596
      %2599 = vrot.lane.b32.xlu0 %v2596, 94
      %v2600 = vpop.permute.xlu0 %2599
      %2601 = vrot.lane.b32.xlu0 %v2598, 94
      %v2602 = vpop.permute.xlu0 %2601
      %vm2603 = vcmask 769024
      %v2604 = vsel %vm2603, %v2600, %v2602
      %2606 = vst [vmem:[#allocation2 + $0x160] sm:$0xf] %v2604
      %v2607 = vld [vmem:[%s340] sm:$0xff]
      %v2609 = vcombine.low %v2607, %v2607
      %2610 = vrot.lane.b32.xlu0 %v2609, 93
      %v2611 = vpop.permute.xlu0 %2610
      %2612 = vrot.lane.b32.xlu0 %v2607, 93
      %v2613 = vpop.permute.xlu0 %2612
      %vm2614 = vcmask 760832
      %v2615 = vsel %vm2614, %v2611, %v2613
      %2617 = vst [vmem:[#allocation2 + $0x160] sm:$0xf0] %v2615
      %v2618 = vld [vmem:[%s340] sm:$0xff]
      %v2620 = vcombine.high %v2618, %v2618
      %2621 = vrot.lane.b32.xlu0 %v2618, 92
      %v2622 = vpop.permute.xlu0 %2621
      %2623 = vrot.lane.b32.xlu0 %v2620, 92
      %v2624 = vpop.permute.xlu0 %2623
      %v2625 = vsel %vm1923, %v2622, %v2624
      %2627 = vst [vmem:[#allocation2 + $0x180] sm:$0xf] %v2625
      %s2628 = scalar_lea.vmem %s3, 16
      %v2629 = vld [vmem:[%s2628] sm:$0xff]
      %v2630 = vld [vmem:[#allocation2] sm:$0xff]
      %v2631 = vld [vmem:[#allocation2 + $0x20] sm:$0xff]
      %v2632 = vld [vmem:[#allocation2 + $0x40] sm:$0xff]
      %v2633 = vld [vmem:[#allocation2 + $0x60] sm:$0xff]
      %v2634 = vld [vmem:[#allocation2 + $0x80] sm:$0xff]
      %v2635 = vld [vmem:[#allocation2 + $0xa0] sm:$0xff]
      %v2636 = vld [vmem:[#allocation2 + $0xc0] sm:$0xff]
      %v2637 = vld [vmem:[#allocation2 + $0xe0] sm:$0xff]
      %v2638 = vld [vmem:[#allocation2 + $0x100] sm:$0xff]
      %v2639 = vld [vmem:[#allocation2 + $0x120] sm:$0xff]
      %v2640 = vld [vmem:[#allocation2 + $0x140] sm:$0xff]
      %v2641 = vld [vmem:[#allocation2 + $0x160] sm:$0xff]
      %v2642 = vld [vmem:[#allocation2 + $0x180] sm:$0xf]
      %v2644 = vsel %vm1167, %v2629, 0
      %v2647 = vsel %vm1171, %v2642, 0
      %2649 = vmatprep.subr.mxu0 0.0
      %2650 = vmatpush1.msra.mxu0 0.0
      %2651 = vmatprep.subr.mxu0 0.0
      %2652 = vmatpush1.msra.mxu0 0.0
      %2653 = vmatprep.subr.mxu0 0.0
      %2654 = vmatpush1.msra.mxu0 0.0
      %2655 = vmatprep.subr.mxu0 0.0
      %2656 = vmatpush1.msra.mxu0 %v2647
      %2657 = vmatprep.subr.mxu0 0.0
      %2658 = vmatpush1.msra.mxu0 %v2641
      %2659 = vmatprep.subr.mxu0 0.0
      %2660 = vmatpush1.msra.mxu0 %v2640
      %2661 = vmatprep.subr.mxu0 0.0
      %2662 = vmatpush1.msra.mxu0 %v2639
      %2663 = vmatprep.subr.mxu0 0.0
      %2664 = vmatpush1.msra.mxu0 %v2638
      %2665 = vmatprep.subr.mxu0 0.0
      %2666 = vmatpush1.msra.mxu0 %v2637
      %2667 = vmatprep.subr.mxu0 0.0
      %2668 = vmatpush1.msra.mxu0 %v2636
      %2669 = vmatprep.subr.mxu0 0.0
      %2670 = vmatpush1.msra.mxu0 %v2635
      %2671 = vmatprep.subr.mxu0 0.0
      %2672 = vmatpush1.msra.mxu0 %v2634
      %2673 = vmatprep.subr.mxu0 0.0
      %2674 = vmatpush1.msra.mxu0 %v2633
      %2675 = vmatprep.subr.mxu0 0.0
      %2676 = vmatpush1.msra.mxu0 %v2632
      %2677 = vmatprep.subr.mxu0 0.0
      %2678 = vmatpush1.msra.mxu0 %v2631
      %2679 = vmatprep.subr.mxu0 0.0
      %2680 = vmatpush1.msra.mxu0 %v2630
      %2681 = vmatprep.subr.mxu0 0.0
      %2682 = vmatpush2.msra.mxu0 0.0
      %2683 = vmatprep.subr.mxu0 0.0
      %2684 = vmatpush2.msra.mxu0 0.0
      %2685 = vmatprep.subr.mxu0 0.0
      %2686 = vmatpush2.msra.mxu0 0.0
      %2687 = vmatprep.subr.mxu0 0.0
      %2688 = vmatpush2.msra.mxu0 0.0
      %2689 = vmatprep.subr.mxu0 0.0
      %2690 = vmatpush2.msra.mxu0 0.0
      %2691 = vmatprep.subr.mxu0 0.0
      %2692 = vmatpush2.msra.mxu0 0.0
      %2693 = vmatprep.subr.mxu0 0.0
      %2694 = vmatpush2.msra.mxu0 0.0
      %2695 = vmatprep.subr.mxu0 0.0
      %2696 = vmatpush2.msra.mxu0 0.0
      %2697 = vmatprep.subr.mxu0 0.0
      %2698 = vmatpush2.msra.mxu0 0.0
      %2699 = vmatprep.subr.mxu0 0.0
      %2700 = vmatpush2.msra.mxu0 0.0
      %2701 = vmatprep.subr.mxu0 0.0
      %2702 = vmatpush2.msra.mxu0 0.0
      %2703 = vmatprep.subr.mxu0 0.0
      %2704 = vmatpush2.msra.mxu0 0.0
      %2705 = vmatprep.subr.mxu0 0.0
      %2706 = vmatpush2.msra.mxu0 0.0
      %2707 = vmatprep.subr.mxu0 0.0
      %2708 = vmatpush2.msra.mxu0 0.0
      %2709 = vmatprep.subr.mxu0 0.0
      %2710 = vmatpush2.msra.mxu0 0.0
      %2711 = vmatprep.subr.mxu0 0.0
      %2712 = vmatpush2.msra.mxu0 0.0
      %2713 = vmatprep.mubr.f32.mxu0 0.0
      %2714 = vmatmul.mubr.f32.gmra.mxu0 %v2644
      %v2715 = vpop.f32.mrf.mxu0
      %v2716 = vadd.f32 0.0, %v2715
      %v2717 = vpop.f32.mrf.mxu0
      %2718 = vdwg.mxu0
      %2719 = vst [vmem:[#allocation3] sm:$0xff] %v2716
      %v2720 = vld [vmem:[#allocation3] sm:$0xff]
      %s2721 = scalar_lea.vmem %s4, 16
      %v2722 = vld [vmem:[%s2721] sm:$0xff]
      %2724 = vset.pattern.permute.xlu0 0
      %2725 = vperm.xlu0 %2724, %v2722
      %v2726 = vpop.permute.xlu0 %2725
      %v2728 = vadd.f32 %v2720, %v2726
      %v2729 = vmax.f32 %v2728, 0.0
      %v2730 = vand.u32 2147483647, %v2728
      %v2731 = vsub.f32 0.0, %v2730
      %v2732 = vmul.f32 %v2731, 1.442695
      %v2733 = vpow.pop %v2732
      %v2734 = vadd.f32 %v2733, 1.0
      %v2735 = vlog2.pop %v2734
      %v2736 = vmul.f32 %v2735, 0.6931472
      %v2737 = vadd.f32 %v2729, %v2736
      %v2738 = vld [vmem:[%s7] sm:$0xff]
      %v2739 = vld [vmem:[%s7 + $0x8] sm:$0xff]
      %v2740 = vld [vmem:[%s7 + $0x10] sm:$0xff]
      %v2741 = vld [vmem:[%s7 + $0x18] sm:$0xff]
      %v2742 = vld [vmem:[%s7 + $0x20] sm:$0xff]
      %v2743 = vld [vmem:[%s7 + $0x28] sm:$0xff]
      %v2744 = vld [vmem:[%s7 + $0x30] sm:$0xff]
      %v2745 = vld [vmem:[%s7 + $0x38] sm:$0xff]
      %v2746 = vld [vmem:[%s7 + $0x40] sm:$0xff]
      %v2747 = vld [vmem:[%s7 + $0x48] sm:$0xff]
      %v2748 = vld [vmem:[%s7 + $0x50] sm:$0xff]
      %v2749 = vld [vmem:[%s7 + $0x58] sm:$0xff]
      %v2750 = vld [vmem:[%s7 + $0x60] sm:$0xff]
      %v2751 = vld [vmem:[%s7 + $0x68] sm:$0xff]
      %v2752 = vld [vmem:[%s7 + $0x70] sm:$0xff]
      %v2753 = vld [vmem:[%s7 + $0x78] sm:$0xff]
      %v2754 = vld [vmem:[%s7 + $0x80] sm:$0xff]
      %v2755 = vld [vmem:[%s7 + $0x88] sm:$0xff]
      %v2756 = vld [vmem:[%s7 + $0x90] sm:$0xff]
      %v2757 = vld [vmem:[%s7 + $0x98] sm:$0xff]
      %v2758 = vld [vmem:[%s7 + $0xa0] sm:$0xff]
      %v2759 = vld [vmem:[%s7 + $0xa8] sm:$0xff]
      %v2760 = vld [vmem:[%s7 + $0xb0] sm:$0xff]
      %v2761 = vld [vmem:[%s7 + $0xb8] sm:$0xff]
      %v2762 = vld [vmem:[%s7 + $0xc0] sm:$0xff]
      %v2763 = vld [vmem:[%s7 + $0xc8] sm:$0xff]
      %v2764 = vld [vmem:[%s7 + $0xd0] sm:$0xff]
      %v2765 = vld [vmem:[%s7 + $0xd8] sm:$0xff]
      %v2766 = vld [vmem:[%s7 + $0xe0] sm:$0xff]
      %v2767 = vld [vmem:[%s7 + $0xe8] sm:$0xff]
      %v2768 = vld [vmem:[%s7 + $0xf0] sm:$0xff]
      %v2769 = vld [vmem:[%s7 + $0xf8] sm:$0xff]
      %2770 = vmatprep.subr.mxu0 %v2769
      %2771 = vmatpush1.msra.mxu0 %v2768
      %2772 = vmatprep.subr.mxu0 %v2767
      %2773 = vmatpush1.msra.mxu0 %v2766
      %2774 = vmatprep.subr.mxu0 %v2765
      %2775 = vmatpush1.msra.mxu0 %v2764
      %2776 = vmatprep.subr.mxu0 %v2763
      %2777 = vmatpush1.msra.mxu0 %v2762
      %2778 = vmatprep.subr.mxu0 %v2761
      %2779 = vmatpush1.msra.mxu0 %v2760
      %2780 = vmatprep.subr.mxu0 %v2759
      %2781 = vmatpush1.msra.mxu0 %v2758
      %2782 = vmatprep.subr.mxu0 %v2757
      %2783 = vmatpush1.msra.mxu0 %v2756
      %2784 = vmatprep.subr.mxu0 %v2755
      %2785 = vmatpush1.msra.mxu0 %v2754
      %2786 = vmatprep.subr.mxu0 %v2753
      %2787 = vmatpush1.msra.mxu0 %v2752
      %2788 = vmatprep.subr.mxu0 %v2751
      %2789 = vmatpush1.msra.mxu0 %v2750
      %2790 = vmatprep.subr.mxu0 %v2749
      %2791 = vmatpush1.msra.mxu0 %v2748
      %2792 = vmatprep.subr.mxu0 %v2747
      %2793 = vmatpush1.msra.mxu0 %v2746
      %2794 = vmatprep.subr.mxu0 %v2745
      %2795 = vmatpush1.msra.mxu0 %v2744
      %2796 = vmatprep.subr.mxu0 %v2743
      %2797 = vmatpush1.msra.mxu0 %v2742
      %2798 = vmatprep.subr.mxu0 %v2741
      %2799 = vmatpush1.msra.mxu0 %v2740
      %2800 = vmatprep.subr.mxu0 %v2739
      %2801 = vmatpush1.msra.mxu0 %v2738
      %2802 = vmatprep.subr.mxu0 0.0
      %2803 = vmatpush2.msra.mxu0 0.0
      %2804 = vmatprep.subr.mxu0 0.0
      %2805 = vmatpush2.msra.mxu0 0.0
      %2806 = vmatprep.subr.mxu0 0.0
      %2807 = vmatpush2.msra.mxu0 0.0
      %2808 = vmatprep.subr.mxu0 0.0
      %2809 = vmatpush2.msra.mxu0 0.0
      %2810 = vmatprep.subr.mxu0 0.0
      %2811 = vmatpush2.msra.mxu0 0.0
      %2812 = vmatprep.subr.mxu0 0.0
      %2813 = vmatpush2.msra.mxu0 0.0
      %2814 = vmatprep.subr.mxu0 0.0
      %2815 = vmatpush2.msra.mxu0 0.0
      %2816 = vmatprep.subr.mxu0 0.0
      %2817 = vmatpush2.msra.mxu0 0.0
      %2818 = vmatprep.subr.mxu0 0.0
      %2819 = vmatpush2.msra.mxu0 0.0
      %2820 = vmatprep.subr.mxu0 0.0
      %2821 = vmatpush2.msra.mxu0 0.0
      %2822 = vmatprep.subr.mxu0 0.0
      %2823 = vmatpush2.msra.mxu0 0.0
      %2824 = vmatprep.subr.mxu0 0.0
      %2825 = vmatpush2.msra.mxu0 0.0
      %2826 = vmatprep.subr.mxu0 0.0
      %2827 = vmatpush2.msra.mxu0 0.0
      %2828 = vmatprep.subr.mxu0 0.0
      %2829 = vmatpush2.msra.mxu0 0.0
      %2830 = vmatprep.subr.mxu0 0.0
      %2831 = vmatpush2.msra.mxu0 0.0
      %2832 = vmatprep.subr.mxu0 0.0
      %2833 = vmatpush2.msra.mxu0 0.0
      %2834 = vmatprep.mubr.f32.mxu0 0.0
      %2835 = vmatmul.mubr.f32.gmra.mxu0 %v2737
      %v2836 = vpop.f32.mrf.mxu0
      %v2837 = vadd.f32 0.0, %v2836
      %v2838 = vpop.f32.mrf.mxu0
      %v2839 = vadd.f32 0.0, %v2838
      %2840 = vdwg.mxu0
      %v2841 = vld [vmem:[%s345] sm:$0xff]
      %v2842 = vld [vmem:[%s345 + $0x8] sm:$0xff]
      %v2843 = vadd.f32 %v2841, %v2837
      %v2844 = vadd.f32 %v2842, %v2839
      %2845 = vst [vmem:[%s345] sm:$0xff] %v2843
      %2846 = vst [vmem:[%s345 + $0x8] sm:$0xff] %v2844
      %p2847 = scmp.lt.s32.totalorder %s19, 1
      %s2848 = scalar_select %p2847, %s19, 1
      %s2849 = smul.addr %s2848, 2
      %s2850 = smul.addr %s2849, 8
      %s2851 = scalar_lea.vmem %s8, %s2850
      // Predicated region
      $region53: #{multiscale_convolution_forward.1} parent=51 // pred_check
        %p2852 = pneg %p220
      $region54: #{multiscale_convolution_forward.1} parent=51 // pred_check_branch
        %2854 = sbr.rel (%p2852) target = $region56
      $region55: #{multiscale_convolution_forward.1} parent=51 // pred_region
        _
      $region56: #{multiscale_convolution_forward.1} parent=51 // pred_fallthru
        _
    $region52: #{multiscale_convolution_forward.1} parent=5 // pred_fallthru
      _
    %p2855 = scmp.le.s32.totalorder 2, %s14
    // Predicated region
    $region57: #{multiscale_convolution_forward.1} parent=5 // pred_check
      %p2856 = pneg %p2855
    $region58: #{multiscale_convolution_forward.1} parent=5 // pred_check_branch
      %2858 = sbr.rel (%p2856) target = $region60
    $region59: #{multiscale_convolution_forward.1} parent=5 // pred_region
      %s2859 = ssub.s32 %s14, 2
      // Predicated region
      $region61: #{multiscale_convolution_forward.1} parent=59 // pred_check
        %p2860 = pneg %p226
      $region62: #{multiscale_convolution_forward.1} parent=59 // pred_check_branch
        %2862 = sbr.rel (%p2860) target = $region64
      $region63: #{multiscale_convolution_forward.1} parent=59 // pred_region
        %p2863 = scmp.lt.s32.totalorder %s20, 1
        %s2864 = scalar_select %p2863, %s20, 1
        %s2865 = smul.addr %s2864, 2
        %s2866 = smul.addr %s2865, 8
        %s2867 = scalar_lea.vmem %s8, %s2866
      $region64: #{multiscale_convolution_forward.1} parent=59 // pred_fallthru
        _
    $region60: #{multiscale_convolution_forward.1} parent=5 // pred_fallthru
      _
  $region6: #{multiscale_convolution_forward.1} parent=0 // loop_footer
    %s18 = sadd.s32 1, %s14
  $region7: #{multiscale_convolution_forward.1} parent=0 // loop_footer_branch
    %13 = sbr.rel target = $region3
  $region8: #{multiscale_convolution_forward.1} parent=0 // loop_exit
    _

</llo_original>
